<compile_context>
chip_gen: v7x
topology: tpu7x:2x2x1
jax: 0.10.0
libtpu: 0.0.40
codegen_flags: <defaults>
</compile_context>

<pallas_src>
import functools

import jax
import jax.numpy as jnp
from jax.experimental import pallas as pl
from jax.experimental.pallas import tpu as pltpu


def _round_up(x, m):
    return (x + m - 1) // m * m


def _choose_tile(total, max_tile, align=128):
    """Largest multiple of `align` that divides `total` and is <= max_tile
    (or `total` itself if it already fits)."""
    if total <= max_tile:
        return total
    t = (max_tile // align) * align
    while t >= align:
        if total % t == 0:
            return t
        t -= align
    return total


# -----------------------------------------------------------------------------
# Pallas kernel: K-tiled (patches @ W) accumulation -> [bias] / [InstanceNorm +
# LeakyReLU] epilogue, one (batch, Cout-tile) output block per accumulation run.
# -----------------------------------------------------------------------------
def _fused_conv_kernel(*refs, apply_norm, has_bias,
                       eps=1e-5, negative_slope=0.2):
    if has_bias:
        p_ref, w_ref, b_ref, o_ref, acc_ref = refs
    else:
        p_ref, w_ref, o_ref, acc_ref = refs
        b_ref = None

    k = pl.program_id(2)

    @pl.when(k == 0)
    def _():
        acc_ref[...] = jnp.zeros_like(acc_ref)

    # (P, tk) bf16 @ (tk, tc) bf16 -> f32 on the MXU, accumulate in f32 VMEM.
    acc_ref[...] += jnp.dot(p_ref[0], w_ref[...],
                            preferred_element_type=jnp.float32)

    @pl.when(k == pl.num_programs(2) - 1)
    def _():
        y = acc_ref[...]                                  # (P, tc) f32
        if has_bias:
            y = y + b_ref[...]                            # final layer only
        if apply_norm:
            # InstanceNorm2d over the spatial axis (axis 0), per channel.
            # Single pass over y for the stats: var = E[y^2] - mean^2 (f32).
            inv_p = jnp.float32(1.0 / y.shape[0])
            s1 = jnp.sum(y, axis=0, keepdims=True)
            s2 = jnp.sum(y * y, axis=0, keepdims=True)
            mean = s1 * inv_p
            var = jnp.maximum(s2 * inv_p - mean * mean, 0.0)
            y = (y - mean) * jax.lax.rsqrt(var + eps)
            # LeakyReLU(0.2)
            y = jnp.where(y > 0, y, negative_slope * y)
        o_ref[0] = y.astype(o_ref.dtype)


def _conv_layer_pallas(patches, w_mat, bias, apply_norm, out_dtype):
    """patches: (B, P, K) bf16; w_mat: (K, Cout_pad) bf16; bias: (Cout_pad,) or None.

    Returns (B, P, Cout_pad) in `out_dtype`. K and Cout_pad are multiples of 128.
    """
    B, P, K = patches.shape
    Cout = w_mat.shape[1]
    has_bias = bias is not None

    # Tile the contraction (K) and output-channel (Cout) axes.
    #  - keep the double-buffered bf16 patch block around <= ~4 MiB
    #  - cap tc at 256 so deep layers expose a Cout-parallel axis (v7x megacore)
    tk = _choose_tile(K, max(128, (4 * 1024 * 1024) // max(2 * P, 1)))
    tc = _choose_tile(Cout, 256)
    nk = K // tk
    nc = Cout // tc

    kernel = functools.partial(_fused_conv_kernel,
                               apply_norm=apply_norm, has_bias=has_bias)

    in_specs = [
        pl.BlockSpec((1, P, tk), lambda b, j, k: (b, 0, k)),   # patches
        pl.BlockSpec((tk, tc), lambda b, j, k: (k, j)),        # weights
    ]
    args = [patches, w_mat]
    if has_bias:
        in_specs.append(pl.BlockSpec((1, tc), lambda b, j, k: (0, j)))
        args.append(bias.reshape(1, Cout).astype(jnp.float32))

    return pl.pallas_call(
        kernel,
        out_shape=jax.ShapeDtypeStruct((B, P, Cout), out_dtype),
        grid=(B, nc, nk),
        in_specs=in_specs,
        out_specs=pl.BlockSpec((1, P, tc), lambda b, j, k: (b, 0, j)),
        scratch_shapes=[pltpu.VMEM((P, tc), jnp.float32)],
        compiler_params=pltpu.CompilerParams(
            dimension_semantics=("parallel", "parallel", "arbitrary"),
            vmem_limit_bytes=32 * 1024 * 1024,
        ),
    )(*args)


# -----------------------------------------------------------------------------
# Glue: im2col patch extraction (pure JAX data movement, no compute), in bf16.
# -----------------------------------------------------------------------------
def _im2col(x_nhwc, k, stride, pad):
    B, H, W, C = x_nhwc.shape
    xp = jnp.pad(x_nhwc, ((0, 0), (pad, pad), (pad, pad), (0, 0)))
    OH = (H + 2 * pad - k) // stride + 1
    OW = (W + 2 * pad - k) // stride + 1
    cols = []
    for ki in range(k):
        for kj in range(k):
            cols.append(xp[:, ki:ki + stride * OH:stride,
                            kj:kj + stride * OW:stride, :])   # (B, OH, OW, C)
    patches = jnp.stack(cols, axis=-2)                        # (B, OH, OW, k*k, C)
    return patches.reshape(B, OH * OW, k * k * C), OH, OW


# -----------------------------------------------------------------------------
# Model construction + forward
# -----------------------------------------------------------------------------
def init_patch_discriminator(key, in_channels=2, hidden_channels=64,
                             num_layers=3, init_gain=0.02):
    """Returns list of (w_oihw, bias, stride, apply_norm) matching the PyTorch module."""
    layers = []
    cfg = [(in_channels, hidden_channels, 2, True)]
    in_f, out_f = 1, 2
    for _ in range(1, num_layers):
        cfg.append((hidden_channels * in_f, hidden_channels * out_f, 2, True))
        in_f = out_f
        out_f *= 2
    out_f = min(2 ** num_layers, 8)
    cfg.append((hidden_channels * in_f, hidden_channels * out_f, 1, True))
    cfg.append((hidden_channels * out_f, 1, 1, False))

    for (cin, cout, stride, apply_norm) in cfg:
        key, wk = jax.random.split(key)
        # init_type='normal': N(0, init_gain); bias = 0
        w = jax.random.normal(wk, (cout, cin, 4, 4), jnp.float32) * init_gain
        b = jnp.zeros((cout,), jnp.float32)
        layers.append((w, b, stride, apply_norm))
    return layers


def patch_discriminator_forward(x_nchw, params):
    """x_nchw: (B, C, H, W) float32 -> (B, 1, H_out, W_out) float32."""
    x = jnp.transpose(x_nchw, (0, 2, 3, 1)).astype(jnp.bfloat16)   # NCHW -> NHWC bf16
    B = x.shape[0]
    for (w_oihw, b, stride, apply_norm) in params:
        cout, cin, kh, kw = w_oihw.shape

        # Pad input channels to a multiple of 8 so K = kh*kw*cin is a multiple of 128.
        cin_p = _round_up(cin, 8)
        if cin_p != cin:
            x = jnp.pad(x, ((0, 0), (0, 0), (0, 0), (0, cin_p - cin)))
            w_oihw = jnp.pad(w_oihw, ((0, 0), (0, cin_p - cin), (0, 0), (0, 0)))
        # Pad output channels to a multiple of 128 (lane-dense matmul + stores).
        cout_p = _round_up(cout, 128)
        if cout_p != cout:
            w_oihw = jnp.pad(w_oihw, ((0, cout_p - cout), (0, 0), (0, 0), (0, 0)))

        patches, OH, OW = _im2col(x, kh, stride, pad=1)            # (B, P, K) bf16
        # (O, I, kh, kw) -> (kh, kw, I, O) -> (kh*kw*I, O), matching patch layout.
        w_mat = jnp.transpose(w_oihw, (2, 3, 1, 0)).reshape(
            kh * kw * cin_p, cout_p).astype(jnp.bfloat16)

        if apply_norm:
            # Conv bias is exactly cancelled by InstanceNorm's mean subtraction.
            y = _conv_layer_pallas(patches, w_mat, None, True, jnp.bfloat16)
        else:
            b_p = jnp.pad(b, (0, cout_p - cout)) if cout_p != cout else b
            y = _conv_layer_pallas(patches, w_mat, b_p, False, jnp.float32)

        # Drop padded channels before the next layer (keeps the next K small).
        x = y.reshape(B, OH, OW, cout_p)[..., :cout]
    return jnp.transpose(x, (0, 3, 1, 2)).astype(jnp.float32)      # NHWC -> NCHW


# -----------------------------------------------------------------------------
# Pure-JAX f32 reference (for correctness check)
# -----------------------------------------------------------------------------
def _reference_forward(x_nchw, params):
    y = x_nchw.astype(jnp.float32)
    for (w_oihw, b, stride, apply_norm) in params:
        y = jax.lax.conv_general_dilated(
            y, w_oihw, (stride, stride), [(1, 1), (1, 1)],
            dimension_numbers=("NCHW", "OIHW", "NCHW")) + b[None, :, None, None]
        if apply_norm:
            mean = y.mean(axis=(2, 3), keepdims=True)
            var = ((y - mean) ** 2).mean(axis=(2, 3), keepdims=True)
            y = (y - mean) / jnp.sqrt(var + 1e-5)
            y = jnp.where(y > 0, y, 0.2 * y)
    return y


if __name__ == "__main__":
    key = jax.random.PRNGKey(0)
    pkey, xkey = jax.random.split(key)

    # small config: batch=2, in_channels=2, spatial=32, hidden_channels=16
    params = init_patch_discriminator(pkey, in_channels=2,
                                      hidden_channels=16, num_layers=3)
    x = jax.random.normal(xkey, (2, 2, 32, 32), jnp.float32)

    fwd = jax.jit(lambda xx: patch_discriminator_forward(xx, params))
    out = jax.block_until_ready(fwd(x))

    ref = jax.block_until_ready(_reference_forward(x, params))
    assert out.shape == ref.shape == (2, 1, 2, 2), (out.shape, ref.shape)
    # bf16 activations/weights through 5 layers -> loosened tolerance vs f32 reference.
    err = float(jnp.max(jnp.abs(out - ref)))
    scale = float(jnp.max(jnp.abs(ref)))
    assert err <= 0.1 * max(scale, 1.0), (err, scale)

    print("KERNEL_OK")
</pallas_src>

<mosaic_0001>
module attributes {stable_mosaic.version = 11 : i64} {
  func.func @_fused_conv_kernel(%arg0: i32, %arg1: i32, %arg2: i32, %arg3: memref<1x256x128xbf16, #tpu.memory_space<vmem>>, %arg4: memref<128x128xbf16, #tpu.memory_space<vmem>>, %arg5: memref<1x256x128xbf16, #tpu.memory_space<vmem>>, %arg6: memref<256x128xf32, #tpu.memory_space<vmem>>) attributes {dimension_semantics = [#tpu.dimension_semantics<parallel>, #tpu.dimension_semantics<parallel>, #tpu.dimension_semantics<arbitrary>], iteration_bounds = array<i64: 2, 1, 1>, scalar_prefetch = 0 : i64, scratch_operands = 1 : i64, tpu.core_type = #tpu.core_type<tc>, window_params = [{transform_indices = @transform_0, window_bounds = array<i64: 1, 256, 128>}, {transform_indices = @transform_1, window_bounds = array<i64: 128, 128>}, {transform_indices = @transform_2, window_bounds = array<i64: 1, 256, 128>}]} {
    %c0_i32 = arith.constant 0 : i32
    %0 = arith.cmpi eq, %arg2, %c0_i32 : i32
    %1 = arith.extui %0 : i1 to i32
    %c0_i32_0 = arith.constant 0 : i32
    %2 = arith.cmpi ne, %1, %c0_i32_0 : i32
    scf.if %2 {
      %cst_11 = arith.constant 0.000000e+00 : f32
      %13 = vector.broadcast %cst_11 : f32 to vector<256x128xf32>
      %c0_12 = arith.constant 0 : index
      %c0_13 = arith.constant 0 : index
      %14 = vector.load %arg6[%c0_12, %c0_13] : memref<256x128xf32, #tpu.memory_space<vmem>>, vector<256x128xf32>
      tpu.vector_store %arg6[%c0_12, %c0_13], %13 {strides = array<i32>} : memref<256x128xf32, #tpu.memory_space<vmem>>, vector<256x128xf32>,
    } else {
    }
    %c0 = arith.constant 0 : index
    %c0_1 = arith.constant 0 : index
    %3 = vector.load %arg6[%c0, %c0_1] : memref<256x128xf32, #tpu.memory_space<vmem>>, vector<256x128xf32>
    %c0_2 = arith.constant 0 : index
    %c0_3 = arith.constant 0 : index
    %c0_4 = arith.constant 0 : index
    %4 = vector.load %arg3[%c0_2, %c0_3, %c0_4] : memref<1x256x128xbf16, #tpu.memory_space<vmem>>, vector<1x256x128xbf16>
    %5 = vector.shape_cast %4 : vector<1x256x128xbf16> to vector<256x128xbf16>
    %c0_5 = arith.constant 0 : index
    %c0_6 = arith.constant 0 : index
    %6 = vector.load %arg4[%c0_5, %c0_6] : memref<128x128xbf16, #tpu.memory_space<vmem>>, vector<128x128xbf16>
    %cst = arith.constant dense<0.000000e+00> : vector<256x128xf32>
    %7 = tpu.matmul %5, %6, %cst {dimension_numbers = #tpu.dot_dimension_numbers<[1], [0], [0], [1], [0, 0, 1, 1], [], []>} : vector<256x128xbf16>, vector<128x128xbf16>, vector<256x128xf32> -> vector<256x128xf32>
    %8 = arith.addf %3, %7 : vector<256x128xf32>
    %c0_7 = arith.constant 0 : index
    %c0_8 = arith.constant 0 : index
    %9 = vector.load %arg6[%c0_7, %c0_8] : memref<256x128xf32, #tpu.memory_space<vmem>>, vector<256x128xf32>
    tpu.vector_store %arg6[%c0_7, %c0_8], %8 {strides = array<i32>} : memref<256x128xf32, #tpu.memory_space<vmem>>, vector<256x128xf32>,
    %c0_i32_9 = arith.constant 0 : i32
    %10 = arith.cmpi eq, %arg2, %c0_i32_9 : i32
    %11 = arith.extui %10 : i1 to i32
    %c0_i32_10 = arith.constant 0 : i32
    %12 = arith.cmpi ne, %11, %c0_i32_10 : i32
    scf.if %12 {
      %c0_11 = arith.constant 0 : index
      %c0_12 = arith.constant 0 : index
      %13 = vector.load %arg6[%c0_11, %c0_12] : memref<256x128xf32, #tpu.memory_space<vmem>>, vector<256x128xf32>
      %cst_13 = arith.constant dense<0.000000e+00> : vector<128xf32>
      %14 = vector.multi_reduction <add>, %13, %cst_13 [0] : vector<256x128xf32> to vector<128xf32>
      %15 = vector.shape_cast %14 : vector<128xf32> to vector<1x128xf32>
      %16 = arith.mulf %13, %13 : vector<256x128xf32>
      %cst_14 = arith.constant dense<0.000000e+00> : vector<128xf32>
      %17 = vector.multi_reduction <add>, %16, %cst_14 [0] : vector<256x128xf32> to vector<128xf32>
      %18 = vector.shape_cast %17 : vector<128xf32> to vector<1x128xf32>
      %cst_15 = arith.constant 3.906250e-03 : f32
      %19 = vector.broadcast %cst_15 : f32 to vector<1x128xf32>
      %20 = arith.mulf %15, %19 : vector<1x128xf32>
      %cst_16 = arith.constant 3.906250e-03 : f32
      %21 = vector.broadcast %cst_16 : f32 to vector<1x128xf32>
      %22 = arith.mulf %18, %21 : vector<1x128xf32>
      %23 = arith.mulf %20, %20 : vector<1x128xf32>
      %24 = arith.subf %22, %23 : vector<1x128xf32>
      %cst_17 = arith.constant 0.000000e+00 : f32
      %25 = vector.broadcast %cst_17 : f32 to vector<1x128xf32>
      %26 = arith.maximumf %24, %25 : vector<1x128xf32>
      %27 = vector.broadcast %20 : vector<1x128xf32> to vector<256x128xf32>
      %28 = arith.subf %13, %27 : vector<256x128xf32>
      %cst_18 = arith.constant 9.99999974E-6 : f32
      %29 = vector.broadcast %cst_18 : f32 to vector<1x128xf32>
      %30 = arith.addf %26, %29 : vector<1x128xf32>
      %31 = math.rsqrt %30 : vector<1x128xf32>
      %32 = vector.broadcast %31 : vector<1x128xf32> to vector<256x128xf32>
      %33 = arith.mulf %28, %32 : vector<256x128xf32>
      %cst_19 = arith.constant 0.000000e+00 : f32
      %34 = vector.broadcast %cst_19 : f32 to vector<256x128xf32>
      %35 = arith.cmpf ogt, %33, %34 : vector<256x128xf32>
      %cst_20 = arith.constant 2.000000e-01 : f32
      %36 = vector.broadcast %cst_20 : f32 to vector<256x128xf32>
      %37 = arith.mulf %36, %33 : vector<256x128xf32>
      %38 = arith.select %35, %33, %37 : vector<256x128xi1>, vector<256x128xf32>
      %39 = arith.truncf %38 : vector<256x128xf32> to vector<256x128xbf16>
      %c0_21 = arith.constant 0 : index
      %c0_22 = arith.constant 0 : index
      %c0_23 = arith.constant 0 : index
      %40 = vector.load %arg5[%c0_21, %c0_22, %c0_23] : memref<1x256x128xbf16, #tpu.memory_space<vmem>>, vector<1x256x128xbf16>
      %41 = vector.shape_cast %40 : vector<1x256x128xbf16> to vector<256x128xbf16>
      %42 = vector.shape_cast %39 : vector<256x128xbf16> to vector<1x256x128xbf16>
      tpu.vector_store %arg5[%c0_21, %c0_22, %c0_23], %42 {strides = array<i32>} : memref<1x256x128xbf16, #tpu.memory_space<vmem>>, vector<1x256x128xbf16>,
    } else {
    }
    return
  }
  func.func @transform_0(%arg0: i32, %arg1: i32, %arg2: i32) -> (i32, i32, i32) {
    %c0_i32 = arith.constant 0 : i32
    %c0_i32_0 = arith.constant 0 : i32
    return %arg0, %c0_i32, %arg2 : i32, i32, i32
  }
  func.func @transform_1(%arg0: i32, %arg1: i32, %arg2: i32) -> (i32, i32) {
    %c0_i32 = arith.constant 0 : i32
    return %arg2, %arg1 : i32, i32
  }
  func.func @transform_2(%arg0: i32, %arg1: i32, %arg2: i32) -> (i32, i32, i32) {
    %c0_i32 = arith.constant 0 : i32
    %c0_i32_0 = arith.constant 0 : i32
    return %arg0, %c0_i32, %arg1 : i32, i32, i32
  }
}

module attributes {stable_mosaic.version = 11 : i64} {
  func.func @_fused_conv_kernel(%arg0: i32, %arg1: i32, %arg2: i32, %arg3: memref<1x64x256xbf16, #tpu.memory_space<vmem>>, %arg4: memref<256x128xbf16, #tpu.memory_space<vmem>>, %arg5: memref<1x64x128xbf16, #tpu.memory_space<vmem>>, %arg6: memref<64x128xf32, #tpu.memory_space<vmem>>) attributes {dimension_semantics = [#tpu.dimension_semantics<parallel>, #tpu.dimension_semantics<parallel>, #tpu.dimension_semantics<arbitrary>], iteration_bounds = array<i64: 2, 1, 1>, scalar_prefetch = 0 : i64, scratch_operands = 1 : i64, tpu.core_type = #tpu.core_type<tc>, window_params = [{transform_indices = @transform_0, window_bounds = array<i64: 1, 64, 256>}, {transform_indices = @transform_1, window_bounds = array<i64: 256, 128>}, {transform_indices = @transform_2, window_bounds = array<i64: 1, 64, 128>}]} {
    %c0_i32 = arith.constant 0 : i32
    %0 = arith.cmpi eq, %arg2, %c0_i32 : i32
    %1 = arith.extui %0 : i1 to i32
    %c0_i32_0 = arith.constant 0 : i32
    %2 = arith.cmpi ne, %1, %c0_i32_0 : i32
    scf.if %2 {
      %cst_11 = arith.constant 0.000000e+00 : f32
      %13 = vector.broadcast %cst_11 : f32 to vector<64x128xf32>
      %c0_12 = arith.constant 0 : index
      %c0_13 = arith.constant 0 : index
      %14 = vector.load %arg6[%c0_12, %c0_13] : memref<64x128xf32, #tpu.memory_space<vmem>>, vector<64x128xf32>
      tpu.vector_store %arg6[%c0_12, %c0_13], %13 {strides = array<i32>} : memref<64x128xf32, #tpu.memory_space<vmem>>, vector<64x128xf32>,
    } else {
    }
    %c0 = arith.constant 0 : index
    %c0_1 = arith.constant 0 : index
    %3 = vector.load %arg6[%c0, %c0_1] : memref<64x128xf32, #tpu.memory_space<vmem>>, vector<64x128xf32>
    %c0_2 = arith.constant 0 : index
    %c0_3 = arith.constant 0 : index
    %c0_4 = arith.constant 0 : index
    %4 = vector.load %arg3[%c0_2, %c0_3, %c0_4] : memref<1x64x256xbf16, #tpu.memory_space<vmem>>, vector<1x64x256xbf16>
    %5 = vector.shape_cast %4 : vector<1x64x256xbf16> to vector<64x256xbf16>
    %c0_5 = arith.constant 0 : index
    %c0_6 = arith.constant 0 : index
    %6 = vector.load %arg4[%c0_5, %c0_6] : memref<256x128xbf16, #tpu.memory_space<vmem>>, vector<256x128xbf16>
    %cst = arith.constant dense<0.000000e+00> : vector<64x128xf32>
    %7 = tpu.matmul %5, %6, %cst {dimension_numbers = #tpu.dot_dimension_numbers<[1], [0], [0], [1], [0, 0, 1, 1], [], []>} : vector<64x256xbf16>, vector<256x128xbf16>, vector<64x128xf32> -> vector<64x128xf32>
    %8 = arith.addf %3, %7 : vector<64x128xf32>
    %c0_7 = arith.constant 0 : index
    %c0_8 = arith.constant 0 : index
    %9 = vector.load %arg6[%c0_7, %c0_8] : memref<64x128xf32, #tpu.memory_space<vmem>>, vector<64x128xf32>
    tpu.vector_store %arg6[%c0_7, %c0_8], %8 {strides = array<i32>} : memref<64x128xf32, #tpu.memory_space<vmem>>, vector<64x128xf32>,
    %c0_i32_9 = arith.constant 0 : i32
    %10 = arith.cmpi eq, %arg2, %c0_i32_9 : i32
    %11 = arith.extui %10 : i1 to i32
    %c0_i32_10 = arith.constant 0 : i32
    %12 = arith.cmpi ne, %11, %c0_i32_10 : i32
    scf.if %12 {
      %c0_11 = arith.constant 0 : index
      %c0_12 = arith.constant 0 : index
      %13 = vector.load %arg6[%c0_11, %c0_12] : memref<64x128xf32, #tpu.memory_space<vmem>>, vector<64x128xf32>
      %cst_13 = arith.constant dense<0.000000e+00> : vector<128xf32>
      %14 = vector.multi_reduction <add>, %13, %cst_13 [0] : vector<64x128xf32> to vector<128xf32>
      %15 = vector.shape_cast %14 : vector<128xf32> to vector<1x128xf32>
      %16 = arith.mulf %13, %13 : vector<64x128xf32>
      %cst_14 = arith.constant dense<0.000000e+00> : vector<128xf32>
      %17 = vector.multi_reduction <add>, %16, %cst_14 [0] : vector<64x128xf32> to vector<128xf32>
      %18 = vector.shape_cast %17 : vector<128xf32> to vector<1x128xf32>
      %cst_15 = arith.constant 1.562500e-02 : f32
      %19 = vector.broadcast %cst_15 : f32 to vector<1x128xf32>
      %20 = arith.mulf %15, %19 : vector<1x128xf32>
      %cst_16 = arith.constant 1.562500e-02 : f32
      %21 = vector.broadcast %cst_16 : f32 to vector<1x128xf32>
      %22 = arith.mulf %18, %21 : vector<1x128xf32>
      %23 = arith.mulf %20, %20 : vector<1x128xf32>
      %24 = arith.subf %22, %23 : vector<1x128xf32>
      %cst_17 = arith.constant 0.000000e+00 : f32
      %25 = vector.broadcast %cst_17 : f32 to vector<1x128xf32>
      %26 = arith.maximumf %24, %25 : vector<1x128xf32>
      %27 = vector.broadcast %20 : vector<1x128xf32> to vector<64x128xf32>
      %28 = arith.subf %13, %27 : vector<64x128xf32>
      %cst_18 = arith.constant 9.99999974E-6 : f32
      %29 = vector.broadcast %cst_18 : f32 to vector<1x128xf32>
      %30 = arith.addf %26, %29 : vector<1x128xf32>
      %31 = math.rsqrt %30 : vector<1x128xf32>
      %32 = vector.broadcast %31 : vector<1x128xf32> to vector<64x128xf32>
      %33 = arith.mulf %28, %32 : vector<64x128xf32>
      %cst_19 = arith.constant 0.000000e+00 : f32
      %34 = vector.broadcast %cst_19 : f32 to vector<64x128xf32>
      %35 = arith.cmpf ogt, %33, %34 : vector<64x128xf32>
      %cst_20 = arith.constant 2.000000e-01 : f32
      %36 = vector.broadcast %cst_20 : f32 to vector<64x128xf32>
      %37 = arith.mulf %36, %33 : vector<64x128xf32>
      %38 = arith.select %35, %33, %37 : vector<64x128xi1>, vector<64x128xf32>
      %39 = arith.truncf %38 : vector<64x128xf32> to vector<64x128xbf16>
      %c0_21 = arith.constant 0 : index
      %c0_22 = arith.constant 0 : index
      %c0_23 = arith.constant 0 : index
      %40 = vector.load %arg5[%c0_21, %c0_22, %c0_23] : memref<1x64x128xbf16, #tpu.memory_space<vmem>>, vector<1x64x128xbf16>
      %41 = vector.shape_cast %40 : vector<1x64x128xbf16> to vector<64x128xbf16>
      %42 = vector.shape_cast %39 : vector<64x128xbf16> to vector<1x64x128xbf16>
      tpu.vector_store %arg5[%c0_21, %c0_22, %c0_23], %42 {strides = array<i32>} : memref<1x64x128xbf16, #tpu.memory_space<vmem>>, vector<1x64x128xbf16>,
    } else {
    }
    return
  }
  func.func @transform_0(%arg0: i32, %arg1: i32, %arg2: i32) -> (i32, i32, i32) {
    %c0_i32 = arith.constant 0 : i32
    %c0_i32_0 = arith.constant 0 : i32
    return %arg0, %c0_i32, %arg2 : i32, i32, i32
  }
  func.func @transform_1(%arg0: i32, %arg1: i32, %arg2: i32) -> (i32, i32) {
    %c0_i32 = arith.constant 0 : i32
    return %arg2, %arg1 : i32, i32
  }
  func.func @transform_2(%arg0: i32, %arg1: i32, %arg2: i32) -> (i32, i32, i32) {
    %c0_i32 = arith.constant 0 : i32
    %c0_i32_0 = arith.constant 0 : i32
    return %arg0, %c0_i32, %arg1 : i32, i32, i32
  }
}

module attributes {stable_mosaic.version = 11 : i64} {
  func.func @_fused_conv_kernel(%arg0: i32, %arg1: i32, %arg2: i32, %arg3: memref<1x16x512xbf16, #tpu.memory_space<vmem>>, %arg4: memref<512x128xbf16, #tpu.memory_space<vmem>>, %arg5: memref<1x16x128xbf16, #tpu.memory_space<vmem>>, %arg6: memref<16x128xf32, #tpu.memory_space<vmem>>) attributes {dimension_semantics = [#tpu.dimension_semantics<parallel>, #tpu.dimension_semantics<parallel>, #tpu.dimension_semantics<arbitrary>], iteration_bounds = array<i64: 2, 1, 1>, scalar_prefetch = 0 : i64, scratch_operands = 1 : i64, tpu.core_type = #tpu.core_type<tc>, window_params = [{transform_indices = @transform_0, window_bounds = array<i64: 1, 16, 512>}, {transform_indices = @transform_1, window_bounds = array<i64: 512, 128>}, {transform_indices = @transform_2, window_bounds = array<i64: 1, 16, 128>}]} {
    %c0_i32 = arith.constant 0 : i32
    %0 = arith.cmpi eq, %arg2, %c0_i32 : i32
    %1 = arith.extui %0 : i1 to i32
    %c0_i32_0 = arith.constant 0 : i32
    %2 = arith.cmpi ne, %1, %c0_i32_0 : i32
    scf.if %2 {
      %cst_11 = arith.constant 0.000000e+00 : f32
      %13 = vector.broadcast %cst_11 : f32 to vector<16x128xf32>
      %c0_12 = arith.constant 0 : index
      %c0_13 = arith.constant 0 : index
      %14 = vector.load %arg6[%c0_12, %c0_13] : memref<16x128xf32, #tpu.memory_space<vmem>>, vector<16x128xf32>
      tpu.vector_store %arg6[%c0_12, %c0_13], %13 {strides = array<i32>} : memref<16x128xf32, #tpu.memory_space<vmem>>, vector<16x128xf32>,
    } else {
    }
    %c0 = arith.constant 0 : index
    %c0_1 = arith.constant 0 : index
    %3 = vector.load %arg6[%c0, %c0_1] : memref<16x128xf32, #tpu.memory_space<vmem>>, vector<16x128xf32>
    %c0_2 = arith.constant 0 : index
    %c0_3 = arith.constant 0 : index
    %c0_4 = arith.constant 0 : index
    %4 = vector.load %arg3[%c0_2, %c0_3, %c0_4] : memref<1x16x512xbf16, #tpu.memory_space<vmem>>, vector<1x16x512xbf16>
    %5 = vector.shape_cast %4 : vector<1x16x512xbf16> to vector<16x512xbf16>
    %c0_5 = arith.constant 0 : index
    %c0_6 = arith.constant 0 : index
    %6 = vector.load %arg4[%c0_5, %c0_6] : memref<512x128xbf16, #tpu.memory_space<vmem>>, vector<512x128xbf16>
    %cst = arith.constant dense<0.000000e+00> : vector<16x128xf32>
    %7 = tpu.matmul %5, %6, %cst {dimension_numbers = #tpu.dot_dimension_numbers<[1], [0], [0], [1], [0, 0, 1, 1], [], []>} : vector<16x512xbf16>, vector<512x128xbf16>, vector<16x128xf32> -> vector<16x128xf32>
    %8 = arith.addf %3, %7 : vector<16x128xf32>
    %c0_7 = arith.constant 0 : index
    %c0_8 = arith.constant 0 : index
    %9 = vector.load %arg6[%c0_7, %c0_8] : memref<16x128xf32, #tpu.memory_space<vmem>>, vector<16x128xf32>
    tpu.vector_store %arg6[%c0_7, %c0_8], %8 {strides = array<i32>} : memref<16x128xf32, #tpu.memory_space<vmem>>, vector<16x128xf32>,
    %c0_i32_9 = arith.constant 0 : i32
    %10 = arith.cmpi eq, %arg2, %c0_i32_9 : i32
    %11 = arith.extui %10 : i1 to i32
    %c0_i32_10 = arith.constant 0 : i32
    %12 = arith.cmpi ne, %11, %c0_i32_10 : i32
    scf.if %12 {
      %c0_11 = arith.constant 0 : index
      %c0_12 = arith.constant 0 : index
      %13 = vector.load %arg6[%c0_11, %c0_12] : memref<16x128xf32, #tpu.memory_space<vmem>>, vector<16x128xf32>
      %cst_13 = arith.constant dense<0.000000e+00> : vector<128xf32>
      %14 = vector.multi_reduction <add>, %13, %cst_13 [0] : vector<16x128xf32> to vector<128xf32>
      %15 = vector.shape_cast %14 : vector<128xf32> to vector<1x128xf32>
      %16 = arith.mulf %13, %13 : vector<16x128xf32>
      %cst_14 = arith.constant dense<0.000000e+00> : vector<128xf32>
      %17 = vector.multi_reduction <add>, %16, %cst_14 [0] : vector<16x128xf32> to vector<128xf32>
      %18 = vector.shape_cast %17 : vector<128xf32> to vector<1x128xf32>
      %cst_15 = arith.constant 6.250000e-02 : f32
      %19 = vector.broadcast %cst_15 : f32 to vector<1x128xf32>
      %20 = arith.mulf %15, %19 : vector<1x128xf32>
      %cst_16 = arith.constant 6.250000e-02 : f32
      %21 = vector.broadcast %cst_16 : f32 to vector<1x128xf32>
      %22 = arith.mulf %18, %21 : vector<1x128xf32>
      %23 = arith.mulf %20, %20 : vector<1x128xf32>
      %24 = arith.subf %22, %23 : vector<1x128xf32>
      %cst_17 = arith.constant 0.000000e+00 : f32
      %25 = vector.broadcast %cst_17 : f32 to vector<1x128xf32>
      %26 = arith.maximumf %24, %25 : vector<1x128xf32>
      %27 = vector.broadcast %20 : vector<1x128xf32> to vector<16x128xf32>
      %28 = arith.subf %13, %27 : vector<16x128xf32>
      %cst_18 = arith.constant 9.99999974E-6 : f32
      %29 = vector.broadcast %cst_18 : f32 to vector<1x128xf32>
      %30 = arith.addf %26, %29 : vector<1x128xf32>
      %31 = math.rsqrt %30 : vector<1x128xf32>
      %32 = vector.broadcast %31 : vector<1x128xf32> to vector<16x128xf32>
      %33 = arith.mulf %28, %32 : vector<16x128xf32>
      %cst_19 = arith.constant 0.000000e+00 : f32
      %34 = vector.broadcast %cst_19 : f32 to vector<16x128xf32>
      %35 = arith.cmpf ogt, %33, %34 : vector<16x128xf32>
      %cst_20 = arith.constant 2.000000e-01 : f32
      %36 = vector.broadcast %cst_20 : f32 to vector<16x128xf32>
      %37 = arith.mulf %36, %33 : vector<16x128xf32>
      %38 = arith.select %35, %33, %37 : vector<16x128xi1>, vector<16x128xf32>
      %39 = arith.truncf %38 : vector<16x128xf32> to vector<16x128xbf16>
      %c0_21 = arith.constant 0 : index
      %c0_22 = arith.constant 0 : index
      %c0_23 = arith.constant 0 : index
      %40 = vector.load %arg5[%c0_21, %c0_22, %c0_23] : memref<1x16x128xbf16, #tpu.memory_space<vmem>>, vector<1x16x128xbf16>
      %41 = vector.shape_cast %40 : vector<1x16x128xbf16> to vector<16x128xbf16>
      %42 = vector.shape_cast %39 : vector<16x128xbf16> to vector<1x16x128xbf16>
      tpu.vector_store %arg5[%c0_21, %c0_22, %c0_23], %42 {strides = array<i32>} : memref<1x16x128xbf16, #tpu.memory_space<vmem>>, vector<1x16x128xbf16>,
    } else {
    }
    return
  }
  func.func @transform_0(%arg0: i32, %arg1: i32, %arg2: i32) -> (i32, i32, i32) {
    %c0_i32 = arith.constant 0 : i32
    %c0_i32_0 = arith.constant 0 : i32
    return %arg0, %c0_i32, %arg2 : i32, i32, i32
  }
  func.func @transform_1(%arg0: i32, %arg1: i32, %arg2: i32) -> (i32, i32) {
    %c0_i32 = arith.constant 0 : i32
    return %arg2, %arg1 : i32, i32
  }
  func.func @transform_2(%arg0: i32, %arg1: i32, %arg2: i32) -> (i32, i32, i32) {
    %c0_i32 = arith.constant 0 : i32
    %c0_i32_0 = arith.constant 0 : i32
    return %arg0, %c0_i32, %arg1 : i32, i32, i32
  }
}

module attributes {stable_mosaic.version = 11 : i64} {
  func.func @_fused_conv_kernel(%arg0: i32, %arg1: i32, %arg2: i32, %arg3: memref<1x9x1024xbf16, #tpu.memory_space<vmem>>, %arg4: memref<1024x128xbf16, #tpu.memory_space<vmem>>, %arg5: memref<1x9x128xbf16, #tpu.memory_space<vmem>>, %arg6: memref<9x128xf32, #tpu.memory_space<vmem>>) attributes {dimension_semantics = [#tpu.dimension_semantics<parallel>, #tpu.dimension_semantics<parallel>, #tpu.dimension_semantics<arbitrary>], iteration_bounds = array<i64: 2, 1, 1>, scalar_prefetch = 0 : i64, scratch_operands = 1 : i64, tpu.core_type = #tpu.core_type<tc>, window_params = [{transform_indices = @transform_0, window_bounds = array<i64: 1, 9, 1024>}, {transform_indices = @transform_1, window_bounds = array<i64: 1024, 128>}, {transform_indices = @transform_2, window_bounds = array<i64: 1, 9, 128>}]} {
    %c0_i32 = arith.constant 0 : i32
    %0 = arith.cmpi eq, %arg2, %c0_i32 : i32
    %1 = arith.extui %0 : i1 to i32
    %c0_i32_0 = arith.constant 0 : i32
    %2 = arith.cmpi ne, %1, %c0_i32_0 : i32
    scf.if %2 {
      %cst_11 = arith.constant 0.000000e+00 : f32
      %13 = vector.broadcast %cst_11 : f32 to vector<9x128xf32>
      %c0_12 = arith.constant 0 : index
      %c0_13 = arith.constant 0 : index
      %14 = vector.load %arg6[%c0_12, %c0_13] : memref<9x128xf32, #tpu.memory_space<vmem>>, vector<9x128xf32>
      tpu.vector_store %arg6[%c0_12, %c0_13], %13 {strides = array<i32>} : memref<9x128xf32, #tpu.memory_space<vmem>>, vector<9x128xf32>,
    } else {
    }
    %c0 = arith.constant 0 : index
    %c0_1 = arith.constant 0 : index
    %3 = vector.load %arg6[%c0, %c0_1] : memref<9x128xf32, #tpu.memory_space<vmem>>, vector<9x128xf32>
    %c0_2 = arith.constant 0 : index
    %c0_3 = arith.constant 0 : index
    %c0_4 = arith.constant 0 : index
    %4 = vector.load %arg3[%c0_2, %c0_3, %c0_4] : memref<1x9x1024xbf16, #tpu.memory_space<vmem>>, vector<1x9x1024xbf16>
    %5 = vector.shape_cast %4 : vector<1x9x1024xbf16> to vector<9x1024xbf16>
    %c0_5 = arith.constant 0 : index
    %c0_6 = arith.constant 0 : index
    %6 = vector.load %arg4[%c0_5, %c0_6] : memref<1024x128xbf16, #tpu.memory_space<vmem>>, vector<1024x128xbf16>
    %cst = arith.constant dense<0.000000e+00> : vector<9x128xf32>
    %7 = tpu.matmul %5, %6, %cst {dimension_numbers = #tpu.dot_dimension_numbers<[1], [0], [0], [1], [0, 0, 1, 1], [], []>} : vector<9x1024xbf16>, vector<1024x128xbf16>, vector<9x128xf32> -> vector<9x128xf32>
    %8 = arith.addf %3, %7 : vector<9x128xf32>
    %c0_7 = arith.constant 0 : index
    %c0_8 = arith.constant 0 : index
    %9 = vector.load %arg6[%c0_7, %c0_8] : memref<9x128xf32, #tpu.memory_space<vmem>>, vector<9x128xf32>
    tpu.vector_store %arg6[%c0_7, %c0_8], %8 {strides = array<i32>} : memref<9x128xf32, #tpu.memory_space<vmem>>, vector<9x128xf32>,
    %c0_i32_9 = arith.constant 0 : i32
    %10 = arith.cmpi eq, %arg2, %c0_i32_9 : i32
    %11 = arith.extui %10 : i1 to i32
    %c0_i32_10 = arith.constant 0 : i32
    %12 = arith.cmpi ne, %11, %c0_i32_10 : i32
    scf.if %12 {
      %c0_11 = arith.constant 0 : index
      %c0_12 = arith.constant 0 : index
      %13 = vector.load %arg6[%c0_11, %c0_12] : memref<9x128xf32, #tpu.memory_space<vmem>>, vector<9x128xf32>
      %cst_13 = arith.constant dense<0.000000e+00> : vector<128xf32>
      %14 = vector.multi_reduction <add>, %13, %cst_13 [0] : vector<9x128xf32> to vector<128xf32>
      %15 = vector.shape_cast %14 : vector<128xf32> to vector<1x128xf32>
      %16 = arith.mulf %13, %13 : vector<9x128xf32>
      %cst_14 = arith.constant dense<0.000000e+00> : vector<128xf32>
      %17 = vector.multi_reduction <add>, %16, %cst_14 [0] : vector<9x128xf32> to vector<128xf32>
      %18 = vector.shape_cast %17 : vector<128xf32> to vector<1x128xf32>
      %cst_15 = arith.constant 0.111111112 : f32
      %19 = vector.broadcast %cst_15 : f32 to vector<1x128xf32>
      %20 = arith.mulf %15, %19 : vector<1x128xf32>
      %cst_16 = arith.constant 0.111111112 : f32
      %21 = vector.broadcast %cst_16 : f32 to vector<1x128xf32>
      %22 = arith.mulf %18, %21 : vector<1x128xf32>
      %23 = arith.mulf %20, %20 : vector<1x128xf32>
      %24 = arith.subf %22, %23 : vector<1x128xf32>
      %cst_17 = arith.constant 0.000000e+00 : f32
      %25 = vector.broadcast %cst_17 : f32 to vector<1x128xf32>
      %26 = arith.maximumf %24, %25 : vector<1x128xf32>
      %27 = vector.broadcast %20 : vector<1x128xf32> to vector<9x128xf32>
      %28 = arith.subf %13, %27 : vector<9x128xf32>
      %cst_18 = arith.constant 9.99999974E-6 : f32
      %29 = vector.broadcast %cst_18 : f32 to vector<1x128xf32>
      %30 = arith.addf %26, %29 : vector<1x128xf32>
      %31 = math.rsqrt %30 : vector<1x128xf32>
      %32 = vector.broadcast %31 : vector<1x128xf32> to vector<9x128xf32>
      %33 = arith.mulf %28, %32 : vector<9x128xf32>
      %cst_19 = arith.constant 0.000000e+00 : f32
      %34 = vector.broadcast %cst_19 : f32 to vector<9x128xf32>
      %35 = arith.cmpf ogt, %33, %34 : vector<9x128xf32>
      %cst_20 = arith.constant 2.000000e-01 : f32
      %36 = vector.broadcast %cst_20 : f32 to vector<9x128xf32>
      %37 = arith.mulf %36, %33 : vector<9x128xf32>
      %38 = arith.select %35, %33, %37 : vector<9x128xi1>, vector<9x128xf32>
      %39 = arith.truncf %38 : vector<9x128xf32> to vector<9x128xbf16>
      %c0_21 = arith.constant 0 : index
      %c0_22 = arith.constant 0 : index
      %c0_23 = arith.constant 0 : index
      %40 = vector.load %arg5[%c0_21, %c0_22, %c0_23] : memref<1x9x128xbf16, #tpu.memory_space<vmem>>, vector<1x9x128xbf16>
      %41 = vector.shape_cast %40 : vector<1x9x128xbf16> to vector<9x128xbf16>
      %42 = vector.shape_cast %39 : vector<9x128xbf16> to vector<1x9x128xbf16>
      tpu.vector_store %arg5[%c0_21, %c0_22, %c0_23], %42 {strides = array<i32>} : memref<1x9x128xbf16, #tpu.memory_space<vmem>>, vector<1x9x128xbf16>,
    } else {
    }
    return
  }
  func.func @transform_0(%arg0: i32, %arg1: i32, %arg2: i32) -> (i32, i32, i32) {
    %c0_i32 = arith.constant 0 : i32
    %c0_i32_0 = arith.constant 0 : i32
    return %arg0, %c0_i32, %arg2 : i32, i32, i32
  }
  func.func @transform_1(%arg0: i32, %arg1: i32, %arg2: i32) -> (i32, i32) {
    %c0_i32 = arith.constant 0 : i32
    return %arg2, %arg1 : i32, i32
  }
  func.func @transform_2(%arg0: i32, %arg1: i32, %arg2: i32) -> (i32, i32, i32) {
    %c0_i32 = arith.constant 0 : i32
    %c0_i32_0 = arith.constant 0 : i32
    return %arg0, %c0_i32, %arg1 : i32, i32, i32
  }
}

module attributes {stable_mosaic.version = 11 : i64} {
  func.func @_fused_conv_kernel(%arg0: i32, %arg1: i32, %arg2: i32, %arg3: memref<1x4x2048xbf16, #tpu.memory_space<vmem>>, %arg4: memref<2048x128xbf16, #tpu.memory_space<vmem>>, %arg5: memref<1x128xf32, #tpu.memory_space<vmem>>, %arg6: memref<1x4x128xf32, #tpu.memory_space<vmem>>, %arg7: memref<4x128xf32, #tpu.memory_space<vmem>>) attributes {dimension_semantics = [#tpu.dimension_semantics<parallel>, #tpu.dimension_semantics<parallel>, #tpu.dimension_semantics<arbitrary>], iteration_bounds = array<i64: 2, 1, 1>, scalar_prefetch = 0 : i64, scratch_operands = 1 : i64, tpu.core_type = #tpu.core_type<tc>, window_params = [{transform_indices = @transform_0, window_bounds = array<i64: 1, 4, 2048>}, {transform_indices = @transform_1, window_bounds = array<i64: 2048, 128>}, {transform_indices = @transform_2, window_bounds = array<i64: 1, 128>}, {transform_indices = @transform_3, window_bounds = array<i64: 1, 4, 128>}]} {
    %c0_i32 = arith.constant 0 : i32
    %0 = arith.cmpi eq, %arg2, %c0_i32 : i32
    %1 = arith.extui %0 : i1 to i32
    %c0_i32_0 = arith.constant 0 : i32
    %2 = arith.cmpi ne, %1, %c0_i32_0 : i32
    scf.if %2 {
      %cst_11 = arith.constant 0.000000e+00 : f32
      %13 = vector.broadcast %cst_11 : f32 to vector<4x128xf32>
      %c0_12 = arith.constant 0 : index
      %c0_13 = arith.constant 0 : index
      %14 = vector.load %arg7[%c0_12, %c0_13] : memref<4x128xf32, #tpu.memory_space<vmem>>, vector<4x128xf32>
      tpu.vector_store %arg7[%c0_12, %c0_13], %13 {strides = array<i32>} : memref<4x128xf32, #tpu.memory_space<vmem>>, vector<4x128xf32>,
    } else {
    }
    %c0 = arith.constant 0 : index
    %c0_1 = arith.constant 0 : index
    %3 = vector.load %arg7[%c0, %c0_1] : memref<4x128xf32, #tpu.memory_space<vmem>>, vector<4x128xf32>
    %c0_2 = arith.constant 0 : index
    %c0_3 = arith.constant 0 : index
    %c0_4 = arith.constant 0 : index
    %4 = vector.load %arg3[%c0_2, %c0_3, %c0_4] : memref<1x4x2048xbf16, #tpu.memory_space<vmem>>, vector<1x4x2048xbf16>
    %5 = vector.shape_cast %4 : vector<1x4x2048xbf16> to vector<4x2048xbf16>
    %c0_5 = arith.constant 0 : index
    %c0_6 = arith.constant 0 : index
    %6 = vector.load %arg4[%c0_5, %c0_6] : memref<2048x128xbf16, #tpu.memory_space<vmem>>, vector<2048x128xbf16>
    %cst = arith.constant dense<0.000000e+00> : vector<4x128xf32>
    %7 = tpu.matmul %5, %6, %cst {dimension_numbers = #tpu.dot_dimension_numbers<[1], [0], [0], [1], [0, 0, 1, 1], [], []>} : vector<4x2048xbf16>, vector<2048x128xbf16>, vector<4x128xf32> -> vector<4x128xf32>
    %8 = arith.addf %3, %7 : vector<4x128xf32>
    %c0_7 = arith.constant 0 : index
    %c0_8 = arith.constant 0 : index
    %9 = vector.load %arg7[%c0_7, %c0_8] : memref<4x128xf32, #tpu.memory_space<vmem>>, vector<4x128xf32>
    tpu.vector_store %arg7[%c0_7, %c0_8], %8 {strides = array<i32>} : memref<4x128xf32, #tpu.memory_space<vmem>>, vector<4x128xf32>,
    %c0_i32_9 = arith.constant 0 : i32
    %10 = arith.cmpi eq, %arg2, %c0_i32_9 : i32
    %11 = arith.extui %10 : i1 to i32
    %c0_i32_10 = arith.constant 0 : i32
    %12 = arith.cmpi ne, %11, %c0_i32_10 : i32
    scf.if %12 {
      %c0_11 = arith.constant 0 : index
      %c0_12 = arith.constant 0 : index
      %13 = vector.load %arg7[%c0_11, %c0_12] : memref<4x128xf32, #tpu.memory_space<vmem>>, vector<4x128xf32>
      %c0_13 = arith.constant 0 : index
      %c0_14 = arith.constant 0 : index
      %14 = vector.load %arg5[%c0_13, %c0_14] : memref<1x128xf32, #tpu.memory_space<vmem>>, vector<1x128xf32>
      %15 = vector.broadcast %14 : vector<1x128xf32> to vector<4x128xf32>
      %16 = arith.addf %13, %15 : vector<4x128xf32>
      %c0_15 = arith.constant 0 : index
      %c0_16 = arith.constant 0 : index
      %c0_17 = arith.constant 0 : index
      %17 = vector.load %arg6[%c0_15, %c0_16, %c0_17] : memref<1x4x128xf32, #tpu.memory_space<vmem>>, vector<1x4x128xf32>
      %18 = vector.shape_cast %17 : vector<1x4x128xf32> to vector<4x128xf32>
      %19 = vector.shape_cast %16 : vector<4x128xf32> to vector<1x4x128xf32>
      tpu.vector_store %arg6[%c0_15, %c0_16, %c0_17], %19 {strides = array<i32>} : memref<1x4x128xf32, #tpu.memory_space<vmem>>, vector<1x4x128xf32>,
    } else {
    }
    return
  }
  func.func @transform_0(%arg0: i32, %arg1: i32, %arg2: i32) -> (i32, i32, i32) {
    %c0_i32 = arith.constant 0 : i32
    %c0_i32_0 = arith.constant 0 : i32
    return %arg0, %c0_i32, %arg2 : i32, i32, i32
  }
  func.func @transform_1(%arg0: i32, %arg1: i32, %arg2: i32) -> (i32, i32) {
    %c0_i32 = arith.constant 0 : i32
    return %arg2, %arg1 : i32, i32
  }
  func.func @transform_2(%arg0: i32, %arg1: i32, %arg2: i32) -> (i32, i32) {
    %c0_i32 = arith.constant 0 : i32
    %c0_i32_0 = arith.constant 0 : i32
    return %c0_i32, %arg1 : i32, i32
  }
  func.func @transform_3(%arg0: i32, %arg1: i32, %arg2: i32) -> (i32, i32, i32) {
    %c0_i32 = arith.constant 0 : i32
    %c0_i32_0 = arith.constant 0 : i32
    return %arg0, %c0_i32, %arg1 : i32, i32, i32
  }
}

</mosaic_0001>

<llo_original>
// kernel: _lambda_.5
$region0: #{_lambda_.5}
  #allocation0 [shape = 'u32[]', space=smem, size = 0x4, offset = 0x4, fixed_abs, tag = 'smem constant byte address 0x4 - core index']
  #allocation1 [shape = 'u32[144,128]{1,0:T(1,128)}', space=vmem, size = 0x12000, scoped, tag = 'internal scratch']
  #allocation2 [shape = 'f32[256,128]{1,0:T(8,128)}', space=vmem, size = 0x20000, scoped, tag = 'scratch operand']
  %s0 = inlined_call_operand.vmem [shape: bf16[2,256,128], index: 0, kind: input, shape index: {}]
  %s1 = inlined_call_operand.vmem [shape: bf16[128,128], index: 1, kind: input, shape index: {}]
  %s2 = inlined_call_operand.vmem [shape: bf16[2,256,128], index: 2, kind: output, shape index: {}]
  %s3 = sld [smem:[#allocation0]]
  $region49: #{_lambda_.5} parent=0
    _
  %s5 = ssub.s32 1, %s3
  %s6 = scalar_select 0, %s5, %s3
  loop: start=0, step=1, limit=4
  $region2: #{_lambda_.5} parent=0 // loop_pre_header
    _
  $region3: #{_lambda_.5} parent=0 // loop_header
    %s8 = sphi 0, %s12
    %p9 = scmp.ge.s32.totalorder %s8, 4
    %s15 = sphi 0, %s34
    %s16 = sphi 0, %s30
    %s17 = sphi 0, %s26
    %s18 = sphi 0, %s15
    %s19 = sphi 0, %s16
    %s20 = sphi 0, %s17
    %s21 = sphi 0, %s18
    %s22 = sphi 0, %s19
    %s23 = sphi 0, %s20
    %s39 = sphi 0, %s41
    %s42 = sphi 0, %s39
    %s43 = sphi 0, %s42
    %s59 = sphi 0, %s43
    %s67 = sphi 0, %s69
    %s70 = sphi 0, %s67
    %s71 = sphi 0, %s70
    %s87 = sphi 0, %s71
    %s95 = sphi 0, %s97
    %s98 = sphi 0, %s95
    %s99 = sphi 0, %s98
    %s115 = sphi 0, %s99
  $region4: #{_lambda_.5} parent=0 // loop_header_branch
    %11 = sbr.rel (%p9) target = $region8
  $region5: #{_lambda_.5} parent=0 // loop_body
    %s13 = ssub.s32 %s8, 1
    %s14 = ssub.s32 %s8, 2
    %s24 = sadd.s32 1, %s17
    %p25 = scmp.ge.s32.totalorder %s24, 1
    %s26 = scalar_select %p25, 0, %s24
    %s27 = sadd.s32 1, %s16
    %s28 = scalar_select %p25, %s27, %s16
    %p29 = scmp.ge.s32.totalorder %s28, 1
    %s30 = scalar_select %p29, 0, %s28
    %s31 = sadd.s32 1, %s15
    %s32 = scalar_select %p29, %s31, %s15
    %p33 = scmp.ge.s32.totalorder %s32, 2
    %s34 = scalar_select %p33, 0, %s32
    %s35 = ssub.s32 %s15, %s34
    %s36 = ssub.s32 %s17, %s26
    %s37 = sor.u32 %s35, %s36
    %p38 = scmp.eq.s32.totalorder %s37, 0
    %s40 = sadd.s32 %s39, 1
    %s41 = scalar_select %p38, %s39, %s40
    %p44 = pneg %p38
    %p45 = scmp.eq.s32.totalorder %s8, 1
    %p46 = por %p44, %p45
    %p47 = scmp.ne.s32.totalorder %s39, %s42
    %p48 = scmp.eq.s32.totalorder %s8, 0
    %p49 = por %p47, %p48
    %p50 = scmp.ne.s32.totalorder %s39, %s42
    %p51 = scmp.eq.s32.totalorder %s13, 1
    %p52 = por %p50, %p51
    %p53 = scmp.ne.s32.totalorder %s42, %s43
    %p54 = scmp.eq.s32.totalorder %s13, 0
    %p55 = por %p53, %p54
    %p56 = scmp.ne.s32.totalorder %s42, %s43
    %p57 = scmp.eq.s32.totalorder %s14, 1
    %p58 = por %p56, %p57
    %p60 = scmp.ne.s32.totalorder %s43, %s59
    %p61 = scmp.eq.s32.totalorder %s14, 0
    %p62 = por %p60, %p61
    %s63 = ssub.s32 %s17, %s26
    %s64 = ssub.s32 %s16, %s30
    %s65 = sor.u32 %s63, %s64
    %p66 = scmp.eq.s32.totalorder %s65, 0
    %s68 = sadd.s32 %s67, 1
    %s69 = scalar_select %p66, %s67, %s68
    %p72 = pneg %p66
    %p73 = scmp.eq.s32.totalorder %s8, 1
    %p74 = por %p72, %p73
    %p75 = scmp.ne.s32.totalorder %s67, %s70
    %p76 = scmp.eq.s32.totalorder %s8, 0
    %p77 = por %p75, %p76
    %p78 = scmp.ne.s32.totalorder %s67, %s70
    %p79 = scmp.eq.s32.totalorder %s13, 1
    %p80 = por %p78, %p79
    %p81 = scmp.ne.s32.totalorder %s70, %s71
    %p82 = scmp.eq.s32.totalorder %s13, 0
    %p83 = por %p81, %p82
    %p84 = scmp.ne.s32.totalorder %s70, %s71
    %p85 = scmp.eq.s32.totalorder %s14, 1
    %p86 = por %p84, %p85
    %p88 = scmp.ne.s32.totalorder %s71, %s87
    %p89 = scmp.eq.s32.totalorder %s14, 0
    %p90 = por %p88, %p89
    %s91 = ssub.s32 %s15, %s34
    %s92 = ssub.s32 %s16, %s30
    %s93 = sor.u32 %s91, %s92
    %p94 = scmp.eq.s32.totalorder %s93, 0
    %s96 = sadd.s32 %s95, 1
    %s97 = scalar_select %p94, %s95, %s96
    %p100 = pneg %p94
    %p101 = scmp.eq.s32.totalorder %s8, 1
    %p102 = por %p100, %p101
    %p103 = scmp.ne.s32.totalorder %s95, %s98
    %p104 = scmp.eq.s32.totalorder %s8, 0
    %p105 = por %p103, %p104
    %p106 = scmp.ne.s32.totalorder %s95, %s98
    %p107 = scmp.eq.s32.totalorder %s13, 1
    %p108 = por %p106, %p107
    %p109 = scmp.ne.s32.totalorder %s98, %s99
    %p110 = scmp.eq.s32.totalorder %s13, 0
    %p111 = por %p109, %p110
    %p112 = scmp.ne.s32.totalorder %s98, %s99
    %p113 = scmp.eq.s32.totalorder %s14, 1
    %p114 = por %p112, %p113
    %p116 = scmp.ne.s32.totalorder %s99, %s115
    %p117 = scmp.eq.s32.totalorder %s14, 0
    %p118 = por %p116, %p117
    %p119 = scmp.le.s32.totalorder 1, %s8
    %p120 = scmp.lt.s32.totalorder %s8, 3
    %p121 = pnand %p119, %p120
    %p122 = pneg %p121
    // Predicated region
    $region9: #{_lambda_.5} parent=5 // pred_check
      _
    $region10: #{_lambda_.5} parent=5 // pred_check_branch
      %124 = sbr.rel (%p121) target = $region12
    $region11: #{_lambda_.5} parent=5 // pred_region
      %s125 = ssub.s32 %s8, 1
      // Predicated region
      $region13: #{_lambda_.5} parent=11 // pred_check
        %p126 = pneg %p83
      $region14: #{_lambda_.5} parent=11 // pred_check_branch
        %128 = sbr.rel (%p126) target = $region16
      $region15: #{_lambda_.5} parent=11 // pred_region
        %s129 = smul.u32 16, %s20
        %p130 = scmp.lt.s32.totalorder %s129, 15
        %s131 = scalar_select %p130, %s129, 15
        %p132 = scmp.lt.s32.totalorder %s19, 0
        %s133 = scalar_select %p132, %s19, 0
        %s134 = sadd.s32 %s133, %s131
        %s135 = smul.addr %s134, 4
        %s136 = scalar_lea.vmem %s1, %s135
        %s137 = smul.u32 16, %s20
      $region16: #{_lambda_.5} parent=11 // pred_fallthru
        _
    $region12: #{_lambda_.5} parent=5 // pred_fallthru
      _
    %p138 = scmp.lt.s32.totalorder %s8, 2
    // Predicated region
    $region17: #{_lambda_.5} parent=5 // pred_check
      %p139 = pneg %p138
    $region18: #{_lambda_.5} parent=5 // pred_check_branch
      %141 = sbr.rel (%p139) target = $region20
    $region19: #{_lambda_.5} parent=5 // pred_region
      // Predicated region
      $region21: #{_lambda_.5} parent=19 // pred_check
        %p142 = pneg %p49
      $region22: #{_lambda_.5} parent=19 // pred_check_branch
        %144 = sbr.rel (%p142) target = $region24
      $region23: #{_lambda_.5} parent=19 // pred_region
        %p145 = scmp.lt.s32.totalorder %s15, 1
        %s146 = scalar_select %p145, %s15, 1
        %p147 = scmp.lt.s32.totalorder %s17, 0
        %s148 = scalar_select %p147, %s17, 0
        %s149 = smul.addr %s146, 32
        %s150 = sadd.s32 %s148, %s149
        %s151 = smul.addr %s150, 4
        %s152 = scalar_lea.vmem %s0, %s151
      $region24: #{_lambda_.5} parent=19 // pred_fallthru
        _
    $region20: #{_lambda_.5} parent=5 // pred_fallthru
      _
    %p153 = scmp.le.s32.totalorder 1, %s8
    %p154 = scmp.lt.s32.totalorder %s8, 3
    %p155 = pnand %p153, %p154
    %p156 = pneg %p155
    // Predicated region
    $region25: #{_lambda_.5} parent=5 // pred_check
      _
    $region26: #{_lambda_.5} parent=5 // pred_check_branch
      %158 = sbr.rel (%p155) target = $region28
    $region27: #{_lambda_.5} parent=5 // pred_region
      %s159 = ssub.s32 %s8, 1
      %p160 = scmp.lt.s32.totalorder %s18, 1
      %s161 = scalar_select %p160, %s18, 1
      %p162 = scmp.lt.s32.totalorder %s20, 0
      %s163 = scalar_select %p162, %s20, 0
      %s164 = smul.addr %s161, 32
      %s165 = sadd.s32 %s163, %s164
      %s166 = smul.addr %s165, 4
      %s167 = scalar_lea.vmem %s0, %s166
      %p168 = pneg %p55
      %p169 = pneg %p52
      %s170 = smul.u32 16, %s20
      %p171 = scmp.lt.s32.totalorder %s170, 15
      %s172 = scalar_select %p171, %s170, 15
      %p173 = scmp.lt.s32.totalorder %s19, 0
      %s174 = scalar_select %p173, %s19, 0
      %s175 = sadd.s32 %s174, %s172
      %s176 = smul.addr %s175, 4
      %s177 = scalar_lea.vmem %s1, %s176
      %p178 = pneg %p83
      %p179 = pneg %p80
      %p180 = pneg %p111
      %p181 = pneg %p108
      %p182 = scmp.lt.s32.totalorder %s18, 1
      %s183 = scalar_select %p182, %s18, 1
      %p184 = scmp.lt.s32.totalorder %s19, 0
      %s185 = scalar_select %p184, %s19, 0
      %s186 = smul.addr %s183, 32
      %s187 = sadd.s32 %s185, %s186
      %s188 = smul.addr %s187, 4
      %s189 = scalar_lea.vmem %s2, %s188
      %p190 = scmp.lt.s32.totalorder %s18, 1
      %s191 = scalar_select %p190, %s18, 1
      %p192 = scmp.lt.s32.totalorder %s20, 0
      %s193 = scalar_select %p192, %s20, 0
      %s194 = smul.addr %s191, 32
      %s195 = sadd.s32 %s193, %s194
      %s196 = smul.addr %s195, 4
      %s197 = scalar_lea.vmem %s0, %s196
      %s198 = smul.u32 16, %s20
      %p199 = scmp.lt.s32.totalorder %s198, 15
      %s200 = scalar_select %p199, %s198, 15
      %p201 = scmp.lt.s32.totalorder %s19, 0
      %s202 = scalar_select %p201, %s19, 0
      %s203 = sadd.s32 %s202, %s200
      %s204 = smul.addr %s203, 4
      %s205 = scalar_lea.vmem %s1, %s204
      %s206 = smul.u32 16, %s20
      %p207 = scmp.lt.s32.totalorder %s18, 1
      %s208 = scalar_select %p207, %s18, 1
      %p209 = scmp.lt.s32.totalorder %s19, 0
      %s210 = scalar_select %p209, %s19, 0
      %s211 = smul.addr %s208, 32
      %s212 = sadd.s32 %s210, %s211
      %s213 = smul.addr %s212, 4
      %s214 = scalar_lea.vmem %s2, %s213
      %p216 = scmp.eq.s32.totalorder %s20, 0
      // Predicated region
      $region29: #{_lambda_.5} parent=27 // pred_check
        %p217 = pneg %p216
      $region30: #{_lambda_.5} parent=27 // pred_check_branch
        %219 = sbr.rel (%p217) target = $region32
      $region31: #{_lambda_.5} parent=27 // pred_region
        %220 = vst [vmem:[#allocation2] sm:$0xff] 0.0
        %221 = vst [vmem:[#allocation2 + $0x8] sm:$0xff] 0.0
        %222 = vst [vmem:[#allocation2 + $0x10] sm:$0xff] 0.0
        %223 = vst [vmem:[#allocation2 + $0x18] sm:$0xff] 0.0
        %224 = vst [vmem:[#allocation2 + $0x20] sm:$0xff] 0.0
        %225 = vst [vmem:[#allocation2 + $0x28] sm:$0xff] 0.0
        %226 = vst [vmem:[#allocation2 + $0x30] sm:$0xff] 0.0
        %227 = vst [vmem:[#allocation2 + $0x38] sm:$0xff] 0.0
        %228 = vst [vmem:[#allocation2 + $0x40] sm:$0xff] 0.0
        %229 = vst [vmem:[#allocation2 + $0x48] sm:$0xff] 0.0
        %230 = vst [vmem:[#allocation2 + $0x50] sm:$0xff] 0.0
        %231 = vst [vmem:[#allocation2 + $0x58] sm:$0xff] 0.0
        %232 = vst [vmem:[#allocation2 + $0x60] sm:$0xff] 0.0
        %233 = vst [vmem:[#allocation2 + $0x68] sm:$0xff] 0.0
        %234 = vst [vmem:[#allocation2 + $0x70] sm:$0xff] 0.0
        %235 = vst [vmem:[#allocation2 + $0x78] sm:$0xff] 0.0
        %236 = vst [vmem:[#allocation2 + $0x80] sm:$0xff] 0.0
        %237 = vst [vmem:[#allocation2 + $0x88] sm:$0xff] 0.0
        %238 = vst [vmem:[#allocation2 + $0x90] sm:$0xff] 0.0
        %239 = vst [vmem:[#allocation2 + $0x98] sm:$0xff] 0.0
        %240 = vst [vmem:[#allocation2 + $0xa0] sm:$0xff] 0.0
        %241 = vst [vmem:[#allocation2 + $0xa8] sm:$0xff] 0.0
        %242 = vst [vmem:[#allocation2 + $0xb0] sm:$0xff] 0.0
        %243 = vst [vmem:[#allocation2 + $0xb8] sm:$0xff] 0.0
        %244 = vst [vmem:[#allocation2 + $0xc0] sm:$0xff] 0.0
        %245 = vst [vmem:[#allocation2 + $0xc8] sm:$0xff] 0.0
        %246 = vst [vmem:[#allocation2 + $0xd0] sm:$0xff] 0.0
        %247 = vst [vmem:[#allocation2 + $0xd8] sm:$0xff] 0.0
        %248 = vst [vmem:[#allocation2 + $0xe0] sm:$0xff] 0.0
        %249 = vst [vmem:[#allocation2 + $0xe8] sm:$0xff] 0.0
        %250 = vst [vmem:[#allocation2 + $0xf0] sm:$0xff] 0.0
        %251 = vst [vmem:[#allocation2 + $0xf8] sm:$0xff] 0.0
      $region32: #{_lambda_.5} parent=27 // pred_fallthru
        _
      %v252 = vld [vmem:[#allocation2] sm:$0xff]
      %v253 = vld [vmem:[#allocation2 + $0x8] sm:$0xff]
      %v254 = vld [vmem:[#allocation2 + $0x10] sm:$0xff]
      %v255 = vld [vmem:[#allocation2 + $0x18] sm:$0xff]
      %v256 = vld [vmem:[#allocation2 + $0x20] sm:$0xff]
      %v257 = vld [vmem:[#allocation2 + $0x28] sm:$0xff]
      %v258 = vld [vmem:[#allocation2 + $0x30] sm:$0xff]
      %v259 = vld [vmem:[#allocation2 + $0x38] sm:$0xff]
      %v260 = vld [vmem:[#allocation2 + $0x40] sm:$0xff]
      %v261 = vld [vmem:[#allocation2 + $0x48] sm:$0xff]
      %v262 = vld [vmem:[#allocation2 + $0x50] sm:$0xff]
      %v263 = vld [vmem:[#allocation2 + $0x58] sm:$0xff]
      %v264 = vld [vmem:[#allocation2 + $0x60] sm:$0xff]
      %v265 = vld [vmem:[#allocation2 + $0x68] sm:$0xff]
      %v266 = vld [vmem:[#allocation2 + $0x70] sm:$0xff]
      %v267 = vld [vmem:[#allocation2 + $0x78] sm:$0xff]
      %v268 = vld [vmem:[#allocation2 + $0x80] sm:$0xff]
      %v269 = vld [vmem:[#allocation2 + $0x88] sm:$0xff]
      %v270 = vld [vmem:[#allocation2 + $0x90] sm:$0xff]
      %v271 = vld [vmem:[#allocation2 + $0x98] sm:$0xff]
      %v272 = vld [vmem:[#allocation2 + $0xa0] sm:$0xff]
      %v273 = vld [vmem:[#allocation2 + $0xa8] sm:$0xff]
      %v274 = vld [vmem:[#allocation2 + $0xb0] sm:$0xff]
      %v275 = vld [vmem:[#allocation2 + $0xb8] sm:$0xff]
      %v276 = vld [vmem:[#allocation2 + $0xc0] sm:$0xff]
      %v277 = vld [vmem:[#allocation2 + $0xc8] sm:$0xff]
      %v278 = vld [vmem:[#allocation2 + $0xd0] sm:$0xff]
      %v279 = vld [vmem:[#allocation2 + $0xd8] sm:$0xff]
      %v280 = vld [vmem:[#allocation2 + $0xe0] sm:$0xff]
      %v281 = vld [vmem:[#allocation2 + $0xe8] sm:$0xff]
      %v282 = vld [vmem:[#allocation2 + $0xf0] sm:$0xff]
      %v283 = vld [vmem:[#allocation2 + $0xf8] sm:$0xff]
      %v284 = vld [vmem:[%s197] sm:$0xf]
      %v285 = vld [vmem:[%s197 + $0x4] sm:$0xf]
      %v286 = vld [vmem:[%s197 + $0x8] sm:$0xf]
      %v287 = vld [vmem:[%s197 + $0xc] sm:$0xf]
      %v288 = vld [vmem:[%s197 + $0x10] sm:$0xf]
      %v289 = vld [vmem:[%s197 + $0x14] sm:$0xf]
      %v290 = vld [vmem:[%s197 + $0x18] sm:$0xf]
      %v291 = vld [vmem:[%s197 + $0x1c] sm:$0xf]
      %v292 = vld [vmem:[%s197 + $0x20] sm:$0xf]
      %v293 = vld [vmem:[%s197 + $0x24] sm:$0xf]
      %v294 = vld [vmem:[%s197 + $0x28] sm:$0xf]
      %v295 = vld [vmem:[%s197 + $0x2c] sm:$0xf]
      %v296 = vld [vmem:[%s197 + $0x30] sm:$0xf]
      %v297 = vld [vmem:[%s197 + $0x34] sm:$0xf]
      %v298 = vld [vmem:[%s197 + $0x38] sm:$0xf]
      %v299 = vld [vmem:[%s197 + $0x3c] sm:$0xf]
      %v300 = vld [vmem:[%s197 + $0x40] sm:$0xf]
      %v301 = vld [vmem:[%s197 + $0x44] sm:$0xf]
      %v302 = vld [vmem:[%s197 + $0x48] sm:$0xf]
      %v303 = vld [vmem:[%s197 + $0x4c] sm:$0xf]
      %v304 = vld [vmem:[%s197 + $0x50] sm:$0xf]
      %v305 = vld [vmem:[%s197 + $0x54] sm:$0xf]
      %v306 = vld [vmem:[%s197 + $0x58] sm:$0xf]
      %v307 = vld [vmem:[%s197 + $0x5c] sm:$0xf]
      %v308 = vld [vmem:[%s197 + $0x60] sm:$0xf]
      %v309 = vld [vmem:[%s197 + $0x64] sm:$0xf]
      %v310 = vld [vmem:[%s197 + $0x68] sm:$0xf]
      %v311 = vld [vmem:[%s197 + $0x6c] sm:$0xf]
      %v312 = vld [vmem:[%s197 + $0x70] sm:$0xf]
      %v313 = vld [vmem:[%s197 + $0x74] sm:$0xf]
      %v314 = vld [vmem:[%s197 + $0x78] sm:$0xf]
      %v315 = vld [vmem:[%s197 + $0x7c] sm:$0xf]
      %v316 = vld [vmem:[%s205] sm:$0xf]
      %v317 = vld [vmem:[%s205 + $0x4] sm:$0xf]
      %v318 = vld [vmem:[%s205 + $0x8] sm:$0xf]
      %v319 = vld [vmem:[%s205 + $0xc] sm:$0xf]
      %v320 = vld [vmem:[%s205 + $0x10] sm:$0xf]
      %v321 = vld [vmem:[%s205 + $0x14] sm:$0xf]
      %v322 = vld [vmem:[%s205 + $0x18] sm:$0xf]
      %v323 = vld [vmem:[%s205 + $0x1c] sm:$0xf]
      %v324 = vld [vmem:[%s205 + $0x20] sm:$0xf]
      %v325 = vld [vmem:[%s205 + $0x24] sm:$0xf]
      %v326 = vld [vmem:[%s205 + $0x28] sm:$0xf]
      %v327 = vld [vmem:[%s205 + $0x2c] sm:$0xf]
      %v328 = vld [vmem:[%s205 + $0x30] sm:$0xf]
      %v329 = vld [vmem:[%s205 + $0x34] sm:$0xf]
      %v330 = vld [vmem:[%s205 + $0x38] sm:$0xf]
      %v331 = vld [vmem:[%s205 + $0x3c] sm:$0xf]
      %v364 = vunpack.c.l.b16 %v284
      %v365 = vunpack.c.l.b16 %v285
      %v366 = vunpack.c.l.b16 %v286
      %v367 = vunpack.c.l.b16 %v287
      %v368 = vunpack.c.l.b16 %v288
      %v369 = vunpack.c.l.b16 %v289
      %v370 = vunpack.c.l.b16 %v290
      %v371 = vunpack.c.l.b16 %v291
      %v372 = vunpack.c.l.b16 %v292
      %v373 = vunpack.c.l.b16 %v293
      %v374 = vunpack.c.l.b16 %v294
      %v375 = vunpack.c.l.b16 %v295
      %v376 = vunpack.c.l.b16 %v296
      %v377 = vunpack.c.l.b16 %v297
      %v378 = vunpack.c.l.b16 %v298
      %v379 = vunpack.c.l.b16 %v299
      %v380 = vunpack.c.l.b16 %v300
      %v381 = vunpack.c.l.b16 %v301
      %v382 = vunpack.c.l.b16 %v302
      %v383 = vunpack.c.l.b16 %v303
      %v384 = vunpack.c.l.b16 %v304
      %v385 = vunpack.c.l.b16 %v305
      %v386 = vunpack.c.l.b16 %v306
      %v387 = vunpack.c.l.b16 %v307
      %v388 = vunpack.c.l.b16 %v308
      %v389 = vunpack.c.l.b16 %v309
      %v390 = vunpack.c.l.b16 %v310
      %v391 = vunpack.c.l.b16 %v311
      %v392 = vunpack.c.l.b16 %v312
      %v393 = vunpack.c.l.b16 %v313
      %v394 = vunpack.c.l.b16 %v314
      %v395 = vunpack.c.l.b16 %v315
      %v396 = vpack.c.b16 %v365, %v364
      %v397 = vpack.c.b16 %v367, %v366
      %v398 = vpack.c.b16 %v369, %v368
      %v399 = vpack.c.b16 %v371, %v370
      %v400 = vpack.c.b16 %v373, %v372
      %v401 = vpack.c.b16 %v375, %v374
      %v402 = vpack.c.b16 %v377, %v376
      %v403 = vpack.c.b16 %v379, %v378
      %v404 = vpack.c.b16 %v381, %v380
      %v405 = vpack.c.b16 %v383, %v382
      %v406 = vpack.c.b16 %v385, %v384
      %v407 = vpack.c.b16 %v387, %v386
      %v408 = vpack.c.b16 %v389, %v388
      %v409 = vpack.c.b16 %v391, %v390
      %v410 = vpack.c.b16 %v393, %v392
      %v411 = vpack.c.b16 %v395, %v394
      %v444 = vunpack.c.l.b16 %v316
      %v445 = vunpack.c.l.b16 %v317
      %v446 = vunpack.c.l.b16 %v318
      %v447 = vunpack.c.l.b16 %v319
      %v448 = vunpack.c.l.b16 %v320
      %v449 = vunpack.c.l.b16 %v321
      %v450 = vunpack.c.l.b16 %v322
      %v451 = vunpack.c.l.b16 %v323
      %v452 = vunpack.c.l.b16 %v324
      %v453 = vunpack.c.l.b16 %v325
      %v454 = vunpack.c.l.b16 %v326
      %v455 = vunpack.c.l.b16 %v327
      %v456 = vunpack.c.l.b16 %v328
      %v457 = vunpack.c.l.b16 %v329
      %v458 = vunpack.c.l.b16 %v330
      %v459 = vunpack.c.l.b16 %v331
      %v460 = vpack.c.b16 %v445, %v444
      %v461 = vpack.c.b16 %v447, %v446
      %v462 = vpack.c.b16 %v449, %v448
      %v463 = vpack.c.b16 %v451, %v450
      %v464 = vpack.c.b16 %v453, %v452
      %v465 = vpack.c.b16 %v455, %v454
      %v466 = vpack.c.b16 %v457, %v456
      %v467 = vpack.c.b16 %v459, %v458
      %476 = vmatprep.subr.bf16.mxu0 0
      %477 = vmatpush1.bf16.msra.mxu0 %v460
      %478 = vmatprep.subr.bf16.mxu0 0
      %479 = vmatpush1.bf16.msra.mxu0 %v461
      %480 = vmatprep.subr.bf16.mxu0 0
      %481 = vmatpush1.bf16.msra.mxu0 %v462
      %482 = vmatprep.subr.bf16.mxu0 0
      %483 = vmatpush1.bf16.msra.mxu0 %v463
      %484 = vmatprep.subr.bf16.mxu0 0
      %485 = vmatpush1.bf16.msra.mxu0 %v464
      %486 = vmatprep.subr.bf16.mxu0 0
      %487 = vmatpush1.bf16.msra.mxu0 %v465
      %488 = vmatprep.subr.bf16.mxu0 0
      %489 = vmatpush1.bf16.msra.mxu0 %v466
      %490 = vmatprep.subr.bf16.mxu0 0
      %491 = vmatpush1.bf16.msra.mxu0 %v467
      %492 = vmatprep.subr.bf16.mxu0 0
      %493 = vmatpush1.bf16.msra.mxu0 0
      %494 = vmatprep.subr.bf16.mxu0 0
      %495 = vmatpush1.bf16.msra.mxu0 0
      %496 = vmatprep.subr.bf16.mxu0 0
      %497 = vmatpush1.bf16.msra.mxu0 0
      %498 = vmatprep.subr.bf16.mxu0 0
      %499 = vmatpush1.bf16.msra.mxu0 0
      %500 = vmatprep.subr.bf16.mxu0 0
      %501 = vmatpush1.bf16.msra.mxu0 0
      %502 = vmatprep.subr.bf16.mxu0 0
      %503 = vmatpush1.bf16.msra.mxu0 0
      %504 = vmatprep.subr.bf16.mxu0 0
      %505 = vmatpush1.bf16.msra.mxu0 0
      %506 = vmatprep.subr.bf16.mxu0 0
      %507 = vmatpush1.bf16.msra.mxu0 0
      %508 = vmatprep.mubr.bf16.mxu0 0
      %509 = vmatmul.mubr.bf16.gmra.mrb[0].mxu0 %v396
      %v510 = vpop.f32.mrb[0].mxu0
      %v511 = vadd.f32 0.0, %v510
      %v512 = vpop.f32.mrb[0].mxu0
      %v513 = vpop.f32.mrb[0].mxu0
      %v514 = vadd.f32 0.0, %v513
      %v515 = vpop.f32.mrb[0].mxu0
      %516 = vmatprep.mubr.bf16.mxu0 0
      %517 = vmatmul.mubr.bf16.gmra.mrb[0].mxu0 %v397
      %v518 = vpop.f32.mrb[0].mxu0
      %v519 = vadd.f32 0.0, %v518
      %v520 = vpop.f32.mrb[0].mxu0
      %v521 = vpop.f32.mrb[0].mxu0
      %v522 = vadd.f32 0.0, %v521
      %v523 = vpop.f32.mrb[0].mxu0
      %524 = vmatprep.mubr.bf16.mxu0 0
      %525 = vmatmul.mubr.bf16.gmra.mrb[0].mxu0 %v398
      %v526 = vpop.f32.mrb[0].mxu0
      %v527 = vadd.f32 0.0, %v526
      %v528 = vpop.f32.mrb[0].mxu0
      %v529 = vpop.f32.mrb[0].mxu0
      %v530 = vadd.f32 0.0, %v529
      %v531 = vpop.f32.mrb[0].mxu0
      %532 = vmatprep.mubr.bf16.mxu0 0
      %533 = vmatmul.mubr.bf16.gmra.mrb[0].mxu0 %v399
      %v534 = vpop.f32.mrb[0].mxu0
      %v535 = vadd.f32 0.0, %v534
      %v536 = vpop.f32.mrb[0].mxu0
      %v537 = vpop.f32.mrb[0].mxu0
      %v538 = vadd.f32 0.0, %v537
      %v539 = vpop.f32.mrb[0].mxu0
      %540 = vmatprep.mubr.bf16.mxu0 0
      %541 = vmatmul.mubr.bf16.gmra.mrb[0].mxu0 %v400
      %v542 = vpop.f32.mrb[0].mxu0
      %v543 = vadd.f32 0.0, %v542
      %v544 = vpop.f32.mrb[0].mxu0
      %v545 = vpop.f32.mrb[0].mxu0
      %v546 = vadd.f32 0.0, %v545
      %v547 = vpop.f32.mrb[0].mxu0
      %548 = vmatprep.mubr.bf16.mxu0 0
      %549 = vmatmul.mubr.bf16.gmra.mrb[0].mxu0 %v401
      %v550 = vpop.f32.mrb[0].mxu0
      %v551 = vadd.f32 0.0, %v550
      %v552 = vpop.f32.mrb[0].mxu0
      %v553 = vpop.f32.mrb[0].mxu0
      %v554 = vadd.f32 0.0, %v553
      %v555 = vpop.f32.mrb[0].mxu0
      %556 = vmatprep.mubr.bf16.mxu0 0
      %557 = vmatmul.mubr.bf16.gmra.mrb[0].mxu0 %v402
      %v558 = vpop.f32.mrb[0].mxu0
      %v559 = vadd.f32 0.0, %v558
      %v560 = vpop.f32.mrb[0].mxu0
      %v561 = vpop.f32.mrb[0].mxu0
      %v562 = vadd.f32 0.0, %v561
      %v563 = vpop.f32.mrb[0].mxu0
      %564 = vmatprep.mubr.bf16.mxu0 0
      %565 = vmatmul.mubr.bf16.gmra.mrb[0].mxu0 %v403
      %v566 = vpop.f32.mrb[0].mxu0
      %v567 = vadd.f32 0.0, %v566
      %v568 = vpop.f32.mrb[0].mxu0
      %v569 = vpop.f32.mrb[0].mxu0
      %v570 = vadd.f32 0.0, %v569
      %v571 = vpop.f32.mrb[0].mxu0
      %572 = vmatprep.mubr.bf16.mxu0 0
      %573 = vmatmul.mubr.bf16.gmra.mrb[0].mxu0 %v404
      %v574 = vpop.f32.mrb[0].mxu0
      %v575 = vadd.f32 0.0, %v574
      %v576 = vpop.f32.mrb[0].mxu0
      %v577 = vpop.f32.mrb[0].mxu0
      %v578 = vadd.f32 0.0, %v577
      %v579 = vpop.f32.mrb[0].mxu0
      %580 = vmatprep.mubr.bf16.mxu0 0
      %581 = vmatmul.mubr.bf16.gmra.mrb[0].mxu0 %v405
      %v582 = vpop.f32.mrb[0].mxu0
      %v583 = vadd.f32 0.0, %v582
      %v584 = vpop.f32.mrb[0].mxu0
      %v585 = vpop.f32.mrb[0].mxu0
      %v586 = vadd.f32 0.0, %v585
      %v587 = vpop.f32.mrb[0].mxu0
      %588 = vmatprep.mubr.bf16.mxu0 0
      %589 = vmatmul.mubr.bf16.gmra.mrb[0].mxu0 %v406
      %v590 = vpop.f32.mrb[0].mxu0
      %v591 = vadd.f32 0.0, %v590
      %v592 = vpop.f32.mrb[0].mxu0
      %v593 = vpop.f32.mrb[0].mxu0
      %v594 = vadd.f32 0.0, %v593
      %v595 = vpop.f32.mrb[0].mxu0
      %596 = vmatprep.mubr.bf16.mxu0 0
      %597 = vmatmul.mubr.bf16.gmra.mrb[0].mxu0 %v407
      %v598 = vpop.f32.mrb[0].mxu0
      %v599 = vadd.f32 0.0, %v598
      %v600 = vpop.f32.mrb[0].mxu0
      %v601 = vpop.f32.mrb[0].mxu0
      %v602 = vadd.f32 0.0, %v601
      %v603 = vpop.f32.mrb[0].mxu0
      %604 = vmatprep.mubr.bf16.mxu0 0
      %605 = vmatmul.mubr.bf16.gmra.mrb[0].mxu0 %v408
      %v606 = vpop.f32.mrb[0].mxu0
      %v607 = vadd.f32 0.0, %v606
      %v608 = vpop.f32.mrb[0].mxu0
      %v609 = vpop.f32.mrb[0].mxu0
      %v610 = vadd.f32 0.0, %v609
      %v611 = vpop.f32.mrb[0].mxu0
      %612 = vmatprep.mubr.bf16.mxu0 0
      %613 = vmatmul.mubr.bf16.gmra.mrb[0].mxu0 %v409
      %v614 = vpop.f32.mrb[0].mxu0
      %v615 = vadd.f32 0.0, %v614
      %v616 = vpop.f32.mrb[0].mxu0
      %v617 = vpop.f32.mrb[0].mxu0
      %v618 = vadd.f32 0.0, %v617
      %v619 = vpop.f32.mrb[0].mxu0
      %620 = vmatprep.mubr.bf16.mxu0 0
      %621 = vmatmul.mubr.bf16.gmra.mrb[0].mxu0 %v410
      %v622 = vpop.f32.mrb[0].mxu0
      %v623 = vadd.f32 0.0, %v622
      %v624 = vpop.f32.mrb[0].mxu0
      %v625 = vpop.f32.mrb[0].mxu0
      %v626 = vadd.f32 0.0, %v625
      %v627 = vpop.f32.mrb[0].mxu0
      %628 = vmatprep.mubr.bf16.mxu0 0
      %629 = vmatmul.mubr.bf16.gmra.mrb[0].mxu0 %v411
      %v630 = vpop.f32.mrb[0].mxu0
      %v631 = vadd.f32 0.0, %v630
      %v632 = vpop.f32.mrb[0].mxu0
      %v633 = vpop.f32.mrb[0].mxu0
      %v634 = vadd.f32 0.0, %v633
      %v635 = vpop.f32.mrb[0].mxu0
      %636 = vdwg.mxu0
      %v637 = vadd.f32 %v252, %v511
      %v638 = vadd.f32 %v253, %v514
      %v639 = vadd.f32 %v254, %v519
      %v640 = vadd.f32 %v255, %v522
      %v641 = vadd.f32 %v256, %v527
      %v642 = vadd.f32 %v257, %v530
      %v643 = vadd.f32 %v258, %v535
      %v644 = vadd.f32 %v259, %v538
      %v645 = vadd.f32 %v260, %v543
      %v646 = vadd.f32 %v261, %v546
      %v647 = vadd.f32 %v262, %v551
      %v648 = vadd.f32 %v263, %v554
      %v649 = vadd.f32 %v264, %v559
      %v650 = vadd.f32 %v265, %v562
      %v651 = vadd.f32 %v266, %v567
      %v652 = vadd.f32 %v267, %v570
      %v653 = vadd.f32 %v268, %v575
      %v654 = vadd.f32 %v269, %v578
      %v655 = vadd.f32 %v270, %v583
      %v656 = vadd.f32 %v271, %v586
      %v657 = vadd.f32 %v272, %v591
      %v658 = vadd.f32 %v273, %v594
      %v659 = vadd.f32 %v274, %v599
      %v660 = vadd.f32 %v275, %v602
      %v661 = vadd.f32 %v276, %v607
      %v662 = vadd.f32 %v277, %v610
      %v663 = vadd.f32 %v278, %v615
      %v664 = vadd.f32 %v279, %v618
      %v665 = vadd.f32 %v280, %v623
      %v666 = vadd.f32 %v281, %v626
      %v667 = vadd.f32 %v282, %v631
      %v668 = vadd.f32 %v283, %v634
      %669 = vst [vmem:[#allocation2] sm:$0xff] %v637
      %670 = vst [vmem:[#allocation2 + $0x8] sm:$0xff] %v638
      %671 = vst [vmem:[#allocation2 + $0x10] sm:$0xff] %v639
      %672 = vst [vmem:[#allocation2 + $0x18] sm:$0xff] %v640
      %673 = vst [vmem:[#allocation2 + $0x20] sm:$0xff] %v641
      %674 = vst [vmem:[#allocation2 + $0x28] sm:$0xff] %v642
      %675 = vst [vmem:[#allocation2 + $0x30] sm:$0xff] %v643
      %676 = vst [vmem:[#allocation2 + $0x38] sm:$0xff] %v644
      %677 = vst [vmem:[#allocation2 + $0x40] sm:$0xff] %v645
      %678 = vst [vmem:[#allocation2 + $0x48] sm:$0xff] %v646
      %679 = vst [vmem:[#allocation2 + $0x50] sm:$0xff] %v647
      %680 = vst [vmem:[#allocation2 + $0x58] sm:$0xff] %v648
      %681 = vst [vmem:[#allocation2 + $0x60] sm:$0xff] %v649
      %682 = vst [vmem:[#allocation2 + $0x68] sm:$0xff] %v650
      %683 = vst [vmem:[#allocation2 + $0x70] sm:$0xff] %v651
      %684 = vst [vmem:[#allocation2 + $0x78] sm:$0xff] %v652
      %685 = vst [vmem:[#allocation2 + $0x80] sm:$0xff] %v653
      %686 = vst [vmem:[#allocation2 + $0x88] sm:$0xff] %v654
      %687 = vst [vmem:[#allocation2 + $0x90] sm:$0xff] %v655
      %688 = vst [vmem:[#allocation2 + $0x98] sm:$0xff] %v656
      %689 = vst [vmem:[#allocation2 + $0xa0] sm:$0xff] %v657
      %690 = vst [vmem:[#allocation2 + $0xa8] sm:$0xff] %v658
      %691 = vst [vmem:[#allocation2 + $0xb0] sm:$0xff] %v659
      %692 = vst [vmem:[#allocation2 + $0xb8] sm:$0xff] %v660
      %693 = vst [vmem:[#allocation2 + $0xc0] sm:$0xff] %v661
      %694 = vst [vmem:[#allocation2 + $0xc8] sm:$0xff] %v662
      %695 = vst [vmem:[#allocation2 + $0xd0] sm:$0xff] %v663
      %696 = vst [vmem:[#allocation2 + $0xd8] sm:$0xff] %v664
      %697 = vst [vmem:[#allocation2 + $0xe0] sm:$0xff] %v665
      %698 = vst [vmem:[#allocation2 + $0xe8] sm:$0xff] %v666
      %699 = vst [vmem:[#allocation2 + $0xf0] sm:$0xff] %v667
      %700 = vst [vmem:[#allocation2 + $0xf8] sm:$0xff] %v668
      // Predicated region
      $region33: #{_lambda_.5} parent=27 // pred_check
        %p701 = pneg %p216
      $region34: #{_lambda_.5} parent=27 // pred_check_branch
        %703 = sbr.rel (%p701) target = $region36
      $region35: #{_lambda_.5} parent=27 // pred_region
        %v704 = vld [vmem:[#allocation2] sm:$0xff]
        %v705 = vld [vmem:[#allocation2 + $0x8] sm:$0xff]
        %v706 = vld [vmem:[#allocation2 + $0x10] sm:$0xff]
        %v707 = vld [vmem:[#allocation2 + $0x18] sm:$0xff]
        %v708 = vld [vmem:[#allocation2 + $0x20] sm:$0xff]
        %v709 = vld [vmem:[#allocation2 + $0x28] sm:$0xff]
        %v710 = vld [vmem:[#allocation2 + $0x30] sm:$0xff]
        %v711 = vld [vmem:[#allocation2 + $0x38] sm:$0xff]
        %v712 = vld [vmem:[#allocation2 + $0x40] sm:$0xff]
        %v713 = vld [vmem:[#allocation2 + $0x48] sm:$0xff]
        %v714 = vld [vmem:[#allocation2 + $0x50] sm:$0xff]
        %v715 = vld [vmem:[#allocation2 + $0x58] sm:$0xff]
        %v716 = vld [vmem:[#allocation2 + $0x60] sm:$0xff]
        %v717 = vld [vmem:[#allocation2 + $0x68] sm:$0xff]
        %v718 = vld [vmem:[#allocation2 + $0x70] sm:$0xff]
        %v719 = vld [vmem:[#allocation2 + $0x78] sm:$0xff]
        %v720 = vld [vmem:[#allocation2 + $0x80] sm:$0xff]
        %v721 = vld [vmem:[#allocation2 + $0x88] sm:$0xff]
        %v722 = vld [vmem:[#allocation2 + $0x90] sm:$0xff]
        %v723 = vld [vmem:[#allocation2 + $0x98] sm:$0xff]
        %v724 = vld [vmem:[#allocation2 + $0xa0] sm:$0xff]
        %v725 = vld [vmem:[#allocation2 + $0xa8] sm:$0xff]
        %v726 = vld [vmem:[#allocation2 + $0xb0] sm:$0xff]
        %v727 = vld [vmem:[#allocation2 + $0xb8] sm:$0xff]
        %v728 = vld [vmem:[#allocation2 + $0xc0] sm:$0xff]
        %v729 = vld [vmem:[#allocation2 + $0xc8] sm:$0xff]
        %v730 = vld [vmem:[#allocation2 + $0xd0] sm:$0xff]
        %v731 = vld [vmem:[#allocation2 + $0xd8] sm:$0xff]
        %v732 = vld [vmem:[#allocation2 + $0xe0] sm:$0xff]
        %v733 = vld [vmem:[#allocation2 + $0xe8] sm:$0xff]
        %v734 = vld [vmem:[#allocation2 + $0xf0] sm:$0xff]
        %v735 = vld [vmem:[#allocation2 + $0xf8] sm:$0xff]
        %v736 = vadd.f32 %v704, %v705
        %v737 = vadd.f32 %v736, %v706
        %v738 = vadd.f32 %v737, %v707
        %v739 = vadd.f32 %v738, %v708
        %v740 = vadd.f32 %v739, %v709
        %v741 = vadd.f32 %v740, %v710
        %v742 = vadd.f32 %v741, %v711
        %v743 = vadd.f32 %v742, %v712
        %v744 = vadd.f32 %v743, %v713
        %v745 = vadd.f32 %v744, %v714
        %v746 = vadd.f32 %v745, %v715
        %v747 = vadd.f32 %v746, %v716
        %v748 = vadd.f32 %v747, %v717
        %v749 = vadd.f32 %v748, %v718
        %v750 = vadd.f32 %v749, %v719
        %v751 = vadd.f32 %v750, %v720
        %v752 = vadd.f32 %v751, %v721
        %v753 = vadd.f32 %v752, %v722
        %v754 = vadd.f32 %v753, %v723
        %v755 = vadd.f32 %v754, %v724
        %v756 = vadd.f32 %v755, %v725
        %v757 = vadd.f32 %v756, %v726
        %v758 = vadd.f32 %v757, %v727
        %v759 = vadd.f32 %v758, %v728
        %v760 = vadd.f32 %v759, %v729
        %v761 = vadd.f32 %v760, %v730
        %v762 = vadd.f32 %v761, %v731
        %v763 = vadd.f32 %v762, %v732
        %v764 = vadd.f32 %v763, %v733
        %v765 = vadd.f32 %v764, %v734
        %v766 = vadd.f32 %v765, %v735
        %v767 = vrot.slane %v766, 4
        %v768 = vadd.f32 %v766, %v767
        %v769 = vrot.slane %v768, 2
        %v770 = vadd.f32 %v768, %v769
        %v771 = vrot.slane %v770, 1
        %v772 = vadd.f32 %v770, %v771
        %v773 = vmul.f32 %v704, %v704
        %v774 = vmul.f32 %v705, %v705
        %v775 = vmul.f32 %v706, %v706
        %v776 = vmul.f32 %v707, %v707
        %v777 = vmul.f32 %v708, %v708
        %v778 = vmul.f32 %v709, %v709
        %v779 = vmul.f32 %v710, %v710
        %v780 = vmul.f32 %v711, %v711
        %v781 = vmul.f32 %v712, %v712
        %v782 = vmul.f32 %v713, %v713
        %v783 = vmul.f32 %v714, %v714
        %v784 = vmul.f32 %v715, %v715
        %v785 = vmul.f32 %v716, %v716
        %v786 = vmul.f32 %v717, %v717
        %v787 = vmul.f32 %v718, %v718
        %v788 = vmul.f32 %v719, %v719
        %v789 = vmul.f32 %v720, %v720
        %v790 = vmul.f32 %v721, %v721
        %v791 = vmul.f32 %v722, %v722
        %v792 = vmul.f32 %v723, %v723
        %v793 = vmul.f32 %v724, %v724
        %v794 = vmul.f32 %v725, %v725
        %v795 = vmul.f32 %v726, %v726
        %v796 = vmul.f32 %v727, %v727
        %v797 = vmul.f32 %v728, %v728
        %v798 = vmul.f32 %v729, %v729
        %v799 = vmul.f32 %v730, %v730
        %v800 = vmul.f32 %v731, %v731
        %v801 = vmul.f32 %v732, %v732
        %v802 = vmul.f32 %v733, %v733
        %v803 = vmul.f32 %v734, %v734
        %v804 = vmul.f32 %v735, %v735
        %v805 = vadd.f32 %v773, %v774
        %v806 = vadd.f32 %v805, %v775
        %v807 = vadd.f32 %v806, %v776
        %v808 = vadd.f32 %v807, %v777
        %v809 = vadd.f32 %v808, %v778
        %v810 = vadd.f32 %v809, %v779
        %v811 = vadd.f32 %v810, %v780
        %v812 = vadd.f32 %v811, %v781
        %v813 = vadd.f32 %v812, %v782
        %v814 = vadd.f32 %v813, %v783
        %v815 = vadd.f32 %v814, %v784
        %v816 = vadd.f32 %v815, %v785
        %v817 = vadd.f32 %v816, %v786
        %v818 = vadd.f32 %v817, %v787
        %v819 = vadd.f32 %v818, %v788
        %v820 = vadd.f32 %v819, %v789
        %v821 = vadd.f32 %v820, %v790
        %v822 = vadd.f32 %v821, %v791
        %v823 = vadd.f32 %v822, %v792
        %v824 = vadd.f32 %v823, %v793
        %v825 = vadd.f32 %v824, %v794
        %v826 = vadd.f32 %v825, %v795
        %v827 = vadd.f32 %v826, %v796
        %v828 = vadd.f32 %v827, %v797
        %v829 = vadd.f32 %v828, %v798
        %v830 = vadd.f32 %v829, %v799
        %v831 = vadd.f32 %v830, %v800
        %v832 = vadd.f32 %v831, %v801
        %v833 = vadd.f32 %v832, %v802
        %v834 = vadd.f32 %v833, %v803
        %v835 = vadd.f32 %v834, %v804
        %v836 = vrot.slane %v835, 4
        %v837 = vadd.f32 %v835, %v836
        %v838 = vrot.slane %v837, 2
        %v839 = vadd.f32 %v837, %v838
        %v840 = vrot.slane %v839, 1
        %v841 = vadd.f32 %v839, %v840
        %v842 = vmul.f32 %v772, 0.00390625
        %v843 = vmul.f32 %v841, 0.00390625
        %v844 = vmul.f32 %v842, %v842
        %v845 = vsub.f32 %v843, %v844
        %v846 = vmax.f32 %v845, 0.0
        %v847 = vsub.f32 %v704, %v842
        %v848 = vsub.f32 %v705, %v842
        %v849 = vsub.f32 %v706, %v842
        %v850 = vsub.f32 %v707, %v842
        %v851 = vsub.f32 %v708, %v842
        %v852 = vsub.f32 %v709, %v842
        %v853 = vsub.f32 %v710, %v842
        %v854 = vsub.f32 %v711, %v842
        %v855 = vsub.f32 %v712, %v842
        %v856 = vsub.f32 %v713, %v842
        %v857 = vsub.f32 %v714, %v842
        %v858 = vsub.f32 %v715, %v842
        %v859 = vsub.f32 %v716, %v842
        %v860 = vsub.f32 %v717, %v842
        %v861 = vsub.f32 %v718, %v842
        %v862 = vsub.f32 %v719, %v842
        %v863 = vsub.f32 %v720, %v842
        %v864 = vsub.f32 %v721, %v842
        %v865 = vsub.f32 %v722, %v842
        %v866 = vsub.f32 %v723, %v842
        %v867 = vsub.f32 %v724, %v842
        %v868 = vsub.f32 %v725, %v842
        %v869 = vsub.f32 %v726, %v842
        %v870 = vsub.f32 %v727, %v842
        %v871 = vsub.f32 %v728, %v842
        %v872 = vsub.f32 %v729, %v842
        %v873 = vsub.f32 %v730, %v842
        %v874 = vsub.f32 %v731, %v842
        %v875 = vsub.f32 %v732, %v842
        %v876 = vsub.f32 %v733, %v842
        %v877 = vsub.f32 %v734, %v842
        %v878 = vsub.f32 %v735, %v842
        %v879 = vadd.f32 %v846, 1e-05
        %v880 = vrsqrt.pop %v879
        %v881 = vmul.f32 %v847, %v880
        %v882 = vmul.f32 %v848, %v880
        %v883 = vmul.f32 %v849, %v880
        %v884 = vmul.f32 %v850, %v880
        %v885 = vmul.f32 %v851, %v880
        %v886 = vmul.f32 %v852, %v880
        %v887 = vmul.f32 %v853, %v880
        %v888 = vmul.f32 %v854, %v880
        %v889 = vmul.f32 %v855, %v880
        %v890 = vmul.f32 %v856, %v880
        %v891 = vmul.f32 %v857, %v880
        %v892 = vmul.f32 %v858, %v880
        %v893 = vmul.f32 %v859, %v880
        %v894 = vmul.f32 %v860, %v880
        %v895 = vmul.f32 %v861, %v880
        %v896 = vmul.f32 %v862, %v880
        %v897 = vmul.f32 %v863, %v880
        %v898 = vmul.f32 %v864, %v880
        %v899 = vmul.f32 %v865, %v880
        %v900 = vmul.f32 %v866, %v880
        %v901 = vmul.f32 %v867, %v880
        %v902 = vmul.f32 %v868, %v880
        %v903 = vmul.f32 %v869, %v880
        %v904 = vmul.f32 %v870, %v880
        %v905 = vmul.f32 %v871, %v880
        %v906 = vmul.f32 %v872, %v880
        %v907 = vmul.f32 %v873, %v880
        %v908 = vmul.f32 %v874, %v880
        %v909 = vmul.f32 %v875, %v880
        %v910 = vmul.f32 %v876, %v880
        %v911 = vmul.f32 %v877, %v880
        %v912 = vmul.f32 %v878, %v880
        %vm913 = vcmp.gt.f32.partialorder %v881, 0.0
        %vm914 = vcmp.gt.f32.partialorder %v882, 0.0
        %vm915 = vcmp.gt.f32.partialorder %v883, 0.0
        %vm916 = vcmp.gt.f32.partialorder %v884, 0.0
        %vm917 = vcmp.gt.f32.partialorder %v885, 0.0
        %vm918 = vcmp.gt.f32.partialorder %v886, 0.0
        %vm919 = vcmp.gt.f32.partialorder %v887, 0.0
        %vm920 = vcmp.gt.f32.partialorder %v888, 0.0
        %vm921 = vcmp.gt.f32.partialorder %v889, 0.0
        %vm922 = vcmp.gt.f32.partialorder %v890, 0.0
        %vm923 = vcmp.gt.f32.partialorder %v891, 0.0
        %vm924 = vcmp.gt.f32.partialorder %v892, 0.0
        %vm925 = vcmp.gt.f32.partialorder %v893, 0.0
        %vm926 = vcmp.gt.f32.partialorder %v894, 0.0
        %vm927 = vcmp.gt.f32.partialorder %v895, 0.0
        %vm928 = vcmp.gt.f32.partialorder %v896, 0.0
        %vm929 = vcmp.gt.f32.partialorder %v897, 0.0
        %vm930 = vcmp.gt.f32.partialorder %v898, 0.0
        %vm931 = vcmp.gt.f32.partialorder %v899, 0.0
        %vm932 = vcmp.gt.f32.partialorder %v900, 0.0
        %vm933 = vcmp.gt.f32.partialorder %v901, 0.0
        %vm934 = vcmp.gt.f32.partialorder %v902, 0.0
        %vm935 = vcmp.gt.f32.partialorder %v903, 0.0
        %vm936 = vcmp.gt.f32.partialorder %v904, 0.0
        %vm937 = vcmp.gt.f32.partialorder %v905, 0.0
        %vm938 = vcmp.gt.f32.partialorder %v906, 0.0
        %vm939 = vcmp.gt.f32.partialorder %v907, 0.0
        %vm940 = vcmp.gt.f32.partialorder %v908, 0.0
        %vm941 = vcmp.gt.f32.partialorder %v909, 0.0
        %vm942 = vcmp.gt.f32.partialorder %v910, 0.0
        %vm943 = vcmp.gt.f32.partialorder %v911, 0.0
        %vm944 = vcmp.gt.f32.partialorder %v912, 0.0
        %v945 = vmul.f32 %v881, 0.2
        %v946 = vmul.f32 %v882, 0.2
        %v947 = vmul.f32 %v883, 0.2
        %v948 = vmul.f32 %v884, 0.2
        %v949 = vmul.f32 %v885, 0.2
        %v950 = vmul.f32 %v886, 0.2
        %v951 = vmul.f32 %v887, 0.2
        %v952 = vmul.f32 %v888, 0.2
        %v953 = vmul.f32 %v889, 0.2
        %v954 = vmul.f32 %v890, 0.2
        %v955 = vmul.f32 %v891, 0.2
        %v956 = vmul.f32 %v892, 0.2
        %v957 = vmul.f32 %v893, 0.2
        %v958 = vmul.f32 %v894, 0.2
        %v959 = vmul.f32 %v895, 0.2
        %v960 = vmul.f32 %v896, 0.2
        %v961 = vmul.f32 %v897, 0.2
        %v962 = vmul.f32 %v898, 0.2
        %v963 = vmul.f32 %v899, 0.2
        %v964 = vmul.f32 %v900, 0.2
        %v965 = vmul.f32 %v901, 0.2
        %v966 = vmul.f32 %v902, 0.2
        %v967 = vmul.f32 %v903, 0.2
        %v968 = vmul.f32 %v904, 0.2
        %v969 = vmul.f32 %v905, 0.2
        %v970 = vmul.f32 %v906, 0.2
        %v971 = vmul.f32 %v907, 0.2
        %v972 = vmul.f32 %v908, 0.2
        %v973 = vmul.f32 %v909, 0.2
        %v974 = vmul.f32 %v910, 0.2
        %v975 = vmul.f32 %v911, 0.2
        %v976 = vmul.f32 %v912, 0.2
        %v977 = vsel %vm913, %v881, %v945
        %v978 = vsel %vm914, %v882, %v946
        %v979 = vsel %vm915, %v883, %v947
        %v980 = vsel %vm916, %v884, %v948
        %v981 = vsel %vm917, %v885, %v949
        %v982 = vsel %vm918, %v886, %v950
        %v983 = vsel %vm919, %v887, %v951
        %v984 = vsel %vm920, %v888, %v952
        %v985 = vsel %vm921, %v889, %v953
        %v986 = vsel %vm922, %v890, %v954
        %v987 = vsel %vm923, %v891, %v955
        %v988 = vsel %vm924, %v892, %v956
        %v989 = vsel %vm925, %v893, %v957
        %v990 = vsel %vm926, %v894, %v958
        %v991 = vsel %vm927, %v895, %v959
        %v992 = vsel %vm928, %v896, %v960
        %v993 = vsel %vm929, %v897, %v961
        %v994 = vsel %vm930, %v898, %v962
        %v995 = vsel %vm931, %v899, %v963
        %v996 = vsel %vm932, %v900, %v964
        %v997 = vsel %vm933, %v901, %v965
        %v998 = vsel %vm934, %v902, %v966
        %v999 = vsel %vm935, %v903, %v967
        %v1000 = vsel %vm936, %v904, %v968
        %v1001 = vsel %vm937, %v905, %v969
        %v1002 = vsel %vm938, %v906, %v970
        %v1003 = vsel %vm939, %v907, %v971
        %v1004 = vsel %vm940, %v908, %v972
        %v1005 = vsel %vm941, %v909, %v973
        %v1006 = vsel %vm942, %v910, %v974
        %v1007 = vsel %vm943, %v911, %v975
        %v1008 = vsel %vm944, %v912, %v976
        %v1009 = vpack.c.bf16 %v978, %v977
        %v1010 = vpack.c.bf16 %v980, %v979
        %v1011 = vpack.c.bf16 %v982, %v981
        %v1012 = vpack.c.bf16 %v984, %v983
        %v1013 = vpack.c.bf16 %v986, %v985
        %v1014 = vpack.c.bf16 %v988, %v987
        %v1015 = vpack.c.bf16 %v990, %v989
        %v1016 = vpack.c.bf16 %v992, %v991
        %v1017 = vpack.c.bf16 %v994, %v993
        %v1018 = vpack.c.bf16 %v996, %v995
        %v1019 = vpack.c.bf16 %v998, %v997
        %v1020 = vpack.c.bf16 %v1000, %v999
        %v1021 = vpack.c.bf16 %v1002, %v1001
        %v1022 = vpack.c.bf16 %v1004, %v1003
        %v1023 = vpack.c.bf16 %v1006, %v1005
        %v1024 = vpack.c.bf16 %v1008, %v1007
        %v1041 = vunpack.c.l.b16 %v1009
        %v1042 = vunpack.c.h.b16 %v1009
        %v1043 = vunpack.c.l.b16 %v1010
        %v1044 = vunpack.c.h.b16 %v1010
        %v1045 = vunpack.c.l.b16 %v1011
        %v1046 = vunpack.c.h.b16 %v1011
        %v1047 = vunpack.c.l.b16 %v1012
        %v1048 = vunpack.c.h.b16 %v1012
        %v1049 = vunpack.c.l.b16 %v1013
        %v1050 = vunpack.c.h.b16 %v1013
        %v1051 = vunpack.c.l.b16 %v1014
        %v1052 = vunpack.c.h.b16 %v1014
        %v1053 = vunpack.c.l.b16 %v1015
        %v1054 = vunpack.c.h.b16 %v1015
        %v1055 = vunpack.c.l.b16 %v1016
        %v1056 = vunpack.c.h.b16 %v1016
        %v1057 = vunpack.c.l.b16 %v1017
        %v1058 = vunpack.c.h.b16 %v1017
        %v1059 = vunpack.c.l.b16 %v1018
        %v1060 = vunpack.c.h.b16 %v1018
        %v1061 = vunpack.c.l.b16 %v1019
        %v1062 = vunpack.c.h.b16 %v1019
        %v1063 = vunpack.c.l.b16 %v1020
        %v1064 = vunpack.c.h.b16 %v1020
        %v1065 = vunpack.c.l.b16 %v1021
        %v1066 = vunpack.c.h.b16 %v1021
        %v1067 = vunpack.c.l.b16 %v1022
        %v1068 = vunpack.c.h.b16 %v1022
        %v1069 = vunpack.c.l.b16 %v1023
        %v1070 = vunpack.c.h.b16 %v1023
        %v1071 = vunpack.c.l.b16 %v1024
        %v1072 = vunpack.c.h.b16 %v1024
        %v1073 = vpack.c.b16 %v1041, %v1041
        %v1074 = vpack.c.b16 %v1042, %v1042
        %v1075 = vpack.c.b16 %v1043, %v1043
        %v1076 = vpack.c.b16 %v1044, %v1044
        %v1077 = vpack.c.b16 %v1045, %v1045
        %v1078 = vpack.c.b16 %v1046, %v1046
        %v1079 = vpack.c.b16 %v1047, %v1047
        %v1080 = vpack.c.b16 %v1048, %v1048
        %v1081 = vpack.c.b16 %v1049, %v1049
        %v1082 = vpack.c.b16 %v1050, %v1050
        %v1083 = vpack.c.b16 %v1051, %v1051
        %v1084 = vpack.c.b16 %v1052, %v1052
        %v1085 = vpack.c.b16 %v1053, %v1053
        %v1086 = vpack.c.b16 %v1054, %v1054
        %v1087 = vpack.c.b16 %v1055, %v1055
        %v1088 = vpack.c.b16 %v1056, %v1056
        %v1089 = vpack.c.b16 %v1057, %v1057
        %v1090 = vpack.c.b16 %v1058, %v1058
        %v1091 = vpack.c.b16 %v1059, %v1059
        %v1092 = vpack.c.b16 %v1060, %v1060
        %v1093 = vpack.c.b16 %v1061, %v1061
        %v1094 = vpack.c.b16 %v1062, %v1062
        %v1095 = vpack.c.b16 %v1063, %v1063
        %v1096 = vpack.c.b16 %v1064, %v1064
        %v1097 = vpack.c.b16 %v1065, %v1065
        %v1098 = vpack.c.b16 %v1066, %v1066
        %v1099 = vpack.c.b16 %v1067, %v1067
        %v1100 = vpack.c.b16 %v1068, %v1068
        %v1101 = vpack.c.b16 %v1069, %v1069
        %v1102 = vpack.c.b16 %v1070, %v1070
        %v1103 = vpack.c.b16 %v1071, %v1071
        %v1104 = vpack.c.b16 %v1072, %v1072
        %1137 = vst [vmem:[%s214] sm:$0xf] %v1073
        %1138 = vst [vmem:[%s214 + $0x4] sm:$0xf] %v1074
        %1139 = vst [vmem:[%s214 + $0x8] sm:$0xf] %v1075
        %1140 = vst [vmem:[%s214 + $0xc] sm:$0xf] %v1076
        %1141 = vst [vmem:[%s214 + $0x10] sm:$0xf] %v1077
        %1142 = vst [vmem:[%s214 + $0x14] sm:$0xf] %v1078
        %1143 = vst [vmem:[%s214 + $0x18] sm:$0xf] %v1079
        %1144 = vst [vmem:[%s214 + $0x1c] sm:$0xf] %v1080
        %1145 = vst [vmem:[%s214 + $0x20] sm:$0xf] %v1081
        %1146 = vst [vmem:[%s214 + $0x24] sm:$0xf] %v1082
        %1147 = vst [vmem:[%s214 + $0x28] sm:$0xf] %v1083
        %1148 = vst [vmem:[%s214 + $0x2c] sm:$0xf] %v1084
        %1149 = vst [vmem:[%s214 + $0x30] sm:$0xf] %v1085
        %1150 = vst [vmem:[%s214 + $0x34] sm:$0xf] %v1086
        %1151 = vst [vmem:[%s214 + $0x38] sm:$0xf] %v1087
        %1152 = vst [vmem:[%s214 + $0x3c] sm:$0xf] %v1088
        %1153 = vst [vmem:[%s214 + $0x40] sm:$0xf] %v1089
        %1154 = vst [vmem:[%s214 + $0x44] sm:$0xf] %v1090
        %1155 = vst [vmem:[%s214 + $0x48] sm:$0xf] %v1091
        %1156 = vst [vmem:[%s214 + $0x4c] sm:$0xf] %v1092
        %1157 = vst [vmem:[%s214 + $0x50] sm:$0xf] %v1093
        %1158 = vst [vmem:[%s214 + $0x54] sm:$0xf] %v1094
        %1159 = vst [vmem:[%s214 + $0x58] sm:$0xf] %v1095
        %1160 = vst [vmem:[%s214 + $0x5c] sm:$0xf] %v1096
        %1161 = vst [vmem:[%s214 + $0x60] sm:$0xf] %v1097
        %1162 = vst [vmem:[%s214 + $0x64] sm:$0xf] %v1098
        %1163 = vst [vmem:[%s214 + $0x68] sm:$0xf] %v1099
        %1164 = vst [vmem:[%s214 + $0x6c] sm:$0xf] %v1100
        %1165 = vst [vmem:[%s214 + $0x70] sm:$0xf] %v1101
        %1166 = vst [vmem:[%s214 + $0x74] sm:$0xf] %v1102
        %1167 = vst [vmem:[%s214 + $0x78] sm:$0xf] %v1103
        %1168 = vst [vmem:[%s214 + $0x7c] sm:$0xf] %v1104
      $region36: #{_lambda_.5} parent=27 // pred_fallthru
        _
      %p1169 = scmp.lt.s32.totalorder %s18, 1
      %s1170 = scalar_select %p1169, %s18, 1
      %p1171 = scmp.lt.s32.totalorder %s19, 0
      %s1172 = scalar_select %p1171, %s19, 0
      %s1173 = smul.addr %s1170, 32
      %s1174 = sadd.s32 %s1172, %s1173
      %s1175 = smul.addr %s1174, 4
      %s1176 = scalar_lea.vmem %s2, %s1175
      // Predicated region
      $region37: #{_lambda_.5} parent=27 // pred_check
        %p1177 = pneg %p108
      $region38: #{_lambda_.5} parent=27 // pred_check_branch
        %1179 = sbr.rel (%p1177) target = $region40
      $region39: #{_lambda_.5} parent=27 // pred_region
        _
      $region40: #{_lambda_.5} parent=27 // pred_fallthru
        _
    $region28: #{_lambda_.5} parent=5 // pred_fallthru
      _
    %p1180 = scmp.le.s32.totalorder 2, %s8
    // Predicated region
    $region41: #{_lambda_.5} parent=5 // pred_check
      %p1181 = pneg %p1180
    $region42: #{_lambda_.5} parent=5 // pred_check_branch
      %1183 = sbr.rel (%p1181) target = $region44
    $region43: #{_lambda_.5} parent=5 // pred_region
      %s1184 = ssub.s32 %s8, 2
      // Predicated region
      $region45: #{_lambda_.5} parent=43 // pred_check
        %p1185 = pneg %p114
      $region46: #{_lambda_.5} parent=43 // pred_check_branch
        %1187 = sbr.rel (%p1185) target = $region48
      $region47: #{_lambda_.5} parent=43 // pred_region
        %p1188 = scmp.lt.s32.totalorder %s21, 1
        %s1189 = scalar_select %p1188, %s21, 1
        %p1190 = scmp.lt.s32.totalorder %s22, 0
        %s1191 = scalar_select %p1190, %s22, 0
        %s1192 = smul.addr %s1189, 32
        %s1193 = sadd.s32 %s1191, %s1192
        %s1194 = smul.addr %s1193, 4
        %s1195 = scalar_lea.vmem %s2, %s1194
      $region48: #{_lambda_.5} parent=43 // pred_fallthru
        _
    $region44: #{_lambda_.5} parent=5 // pred_fallthru
      _
  $region6: #{_lambda_.5} parent=0 // loop_footer
    %s12 = sadd.s32 1, %s8
  $region7: #{_lambda_.5} parent=0 // loop_footer_branch
    %7 = sbr.rel target = $region3
  $region8: #{_lambda_.5} parent=0 // loop_exit
    _

// kernel: _lambda_.6
$region0: #{_lambda_.6}
  #allocation0 [shape = 'u32[]', space=smem, size = 0x4, offset = 0x4, fixed_abs, tag = 'smem constant byte address 0x4 - core index']
  #allocation1 [shape = 'u32[144,128]{1,0:T(1,128)}', space=vmem, size = 0x12000, scoped, tag = 'internal scratch']
  #allocation2 [shape = 'f32[64,128]{1,0:T(8,128)}', space=vmem, size = 0x8000, scoped, tag = 'scratch operand']
  %s0 = inlined_call_operand.vmem [shape: bf16[2,64,256], index: 0, kind: input, shape index: {}]
  %s1 = inlined_call_operand.vmem [shape: bf16[256,128], index: 1, kind: input, shape index: {}]
  %s2 = inlined_call_operand.vmem [shape: bf16[2,64,128], index: 2, kind: output, shape index: {}]
  %s3 = sld [smem:[#allocation0]]
  $region49: #{_lambda_.6} parent=0
    _
  %s5 = ssub.s32 1, %s3
  %s6 = scalar_select 0, %s5, %s3
  loop: start=0, step=1, limit=4
  $region2: #{_lambda_.6} parent=0 // loop_pre_header
    _
  $region3: #{_lambda_.6} parent=0 // loop_header
    %s8 = sphi 0, %s12
    %p9 = scmp.ge.s32.totalorder %s8, 4
    %s15 = sphi 0, %s34
    %s16 = sphi 0, %s30
    %s17 = sphi 0, %s26
    %s18 = sphi 0, %s15
    %s19 = sphi 0, %s16
    %s20 = sphi 0, %s17
    %s21 = sphi 0, %s18
    %s22 = sphi 0, %s19
    %s23 = sphi 0, %s20
    %s39 = sphi 0, %s41
    %s42 = sphi 0, %s39
    %s43 = sphi 0, %s42
    %s59 = sphi 0, %s43
    %s67 = sphi 0, %s69
    %s70 = sphi 0, %s67
    %s71 = sphi 0, %s70
    %s87 = sphi 0, %s71
    %s95 = sphi 0, %s97
    %s98 = sphi 0, %s95
    %s99 = sphi 0, %s98
    %s115 = sphi 0, %s99
  $region4: #{_lambda_.6} parent=0 // loop_header_branch
    %11 = sbr.rel (%p9) target = $region8
  $region5: #{_lambda_.6} parent=0 // loop_body
    %s13 = ssub.s32 %s8, 1
    %s14 = ssub.s32 %s8, 2
    %s24 = sadd.s32 1, %s17
    %p25 = scmp.ge.s32.totalorder %s24, 1
    %s26 = scalar_select %p25, 0, %s24
    %s27 = sadd.s32 1, %s16
    %s28 = scalar_select %p25, %s27, %s16
    %p29 = scmp.ge.s32.totalorder %s28, 1
    %s30 = scalar_select %p29, 0, %s28
    %s31 = sadd.s32 1, %s15
    %s32 = scalar_select %p29, %s31, %s15
    %p33 = scmp.ge.s32.totalorder %s32, 2
    %s34 = scalar_select %p33, 0, %s32
    %s35 = ssub.s32 %s15, %s34
    %s36 = ssub.s32 %s17, %s26
    %s37 = sor.u32 %s35, %s36
    %p38 = scmp.eq.s32.totalorder %s37, 0
    %s40 = sadd.s32 %s39, 1
    %s41 = scalar_select %p38, %s39, %s40
    %p44 = pneg %p38
    %p45 = scmp.eq.s32.totalorder %s8, 1
    %p46 = por %p44, %p45
    %p47 = scmp.ne.s32.totalorder %s39, %s42
    %p48 = scmp.eq.s32.totalorder %s8, 0
    %p49 = por %p47, %p48
    %p50 = scmp.ne.s32.totalorder %s39, %s42
    %p51 = scmp.eq.s32.totalorder %s13, 1
    %p52 = por %p50, %p51
    %p53 = scmp.ne.s32.totalorder %s42, %s43
    %p54 = scmp.eq.s32.totalorder %s13, 0
    %p55 = por %p53, %p54
    %p56 = scmp.ne.s32.totalorder %s42, %s43
    %p57 = scmp.eq.s32.totalorder %s14, 1
    %p58 = por %p56, %p57
    %p60 = scmp.ne.s32.totalorder %s43, %s59
    %p61 = scmp.eq.s32.totalorder %s14, 0
    %p62 = por %p60, %p61
    %s63 = ssub.s32 %s17, %s26
    %s64 = ssub.s32 %s16, %s30
    %s65 = sor.u32 %s63, %s64
    %p66 = scmp.eq.s32.totalorder %s65, 0
    %s68 = sadd.s32 %s67, 1
    %s69 = scalar_select %p66, %s67, %s68
    %p72 = pneg %p66
    %p73 = scmp.eq.s32.totalorder %s8, 1
    %p74 = por %p72, %p73
    %p75 = scmp.ne.s32.totalorder %s67, %s70
    %p76 = scmp.eq.s32.totalorder %s8, 0
    %p77 = por %p75, %p76
    %p78 = scmp.ne.s32.totalorder %s67, %s70
    %p79 = scmp.eq.s32.totalorder %s13, 1
    %p80 = por %p78, %p79
    %p81 = scmp.ne.s32.totalorder %s70, %s71
    %p82 = scmp.eq.s32.totalorder %s13, 0
    %p83 = por %p81, %p82
    %p84 = scmp.ne.s32.totalorder %s70, %s71
    %p85 = scmp.eq.s32.totalorder %s14, 1
    %p86 = por %p84, %p85
    %p88 = scmp.ne.s32.totalorder %s71, %s87
    %p89 = scmp.eq.s32.totalorder %s14, 0
    %p90 = por %p88, %p89
    %s91 = ssub.s32 %s15, %s34
    %s92 = ssub.s32 %s16, %s30
    %s93 = sor.u32 %s91, %s92
    %p94 = scmp.eq.s32.totalorder %s93, 0
    %s96 = sadd.s32 %s95, 1
    %s97 = scalar_select %p94, %s95, %s96
    %p100 = pneg %p94
    %p101 = scmp.eq.s32.totalorder %s8, 1
    %p102 = por %p100, %p101
    %p103 = scmp.ne.s32.totalorder %s95, %s98
    %p104 = scmp.eq.s32.totalorder %s8, 0
    %p105 = por %p103, %p104
    %p106 = scmp.ne.s32.totalorder %s95, %s98
    %p107 = scmp.eq.s32.totalorder %s13, 1
    %p108 = por %p106, %p107
    %p109 = scmp.ne.s32.totalorder %s98, %s99
    %p110 = scmp.eq.s32.totalorder %s13, 0
    %p111 = por %p109, %p110
    %p112 = scmp.ne.s32.totalorder %s98, %s99
    %p113 = scmp.eq.s32.totalorder %s14, 1
    %p114 = por %p112, %p113
    %p116 = scmp.ne.s32.totalorder %s99, %s115
    %p117 = scmp.eq.s32.totalorder %s14, 0
    %p118 = por %p116, %p117
    %p119 = scmp.le.s32.totalorder 1, %s8
    %p120 = scmp.lt.s32.totalorder %s8, 3
    %p121 = pnand %p119, %p120
    %p122 = pneg %p121
    // Predicated region
    $region9: #{_lambda_.6} parent=5 // pred_check
      _
    $region10: #{_lambda_.6} parent=5 // pred_check_branch
      %124 = sbr.rel (%p121) target = $region12
    $region11: #{_lambda_.6} parent=5 // pred_region
      %s125 = ssub.s32 %s8, 1
      // Predicated region
      $region13: #{_lambda_.6} parent=11 // pred_check
        %p126 = pneg %p83
      $region14: #{_lambda_.6} parent=11 // pred_check_branch
        %128 = sbr.rel (%p126) target = $region16
      $region15: #{_lambda_.6} parent=11 // pred_region
        %s129 = smul.u32 32, %s20
        %p130 = scmp.lt.s32.totalorder %s129, 31
        %s131 = scalar_select %p130, %s129, 31
        %p132 = scmp.lt.s32.totalorder %s19, 0
        %s133 = scalar_select %p132, %s19, 0
        %s134 = sadd.s32 %s133, %s131
        %s135 = smul.addr %s134, 4
        %s136 = scalar_lea.vmem %s1, %s135
        %s137 = smul.u32 32, %s20
      $region16: #{_lambda_.6} parent=11 // pred_fallthru
        _
    $region12: #{_lambda_.6} parent=5 // pred_fallthru
      _
    %p138 = scmp.lt.s32.totalorder %s8, 2
    // Predicated region
    $region17: #{_lambda_.6} parent=5 // pred_check
      %p139 = pneg %p138
    $region18: #{_lambda_.6} parent=5 // pred_check_branch
      %141 = sbr.rel (%p139) target = $region20
    $region19: #{_lambda_.6} parent=5 // pred_region
      // Predicated region
      $region21: #{_lambda_.6} parent=19 // pred_check
        %p142 = pneg %p49
      $region22: #{_lambda_.6} parent=19 // pred_check_branch
        %144 = sbr.rel (%p142) target = $region24
      $region23: #{_lambda_.6} parent=19 // pred_region
        %s145 = smul.u32 2, %s17
        %p146 = scmp.lt.s32.totalorder %s15, 1
        %s147 = scalar_select %p146, %s15, 1
        %p148 = scmp.lt.s32.totalorder %s145, 1
        %s149 = scalar_select %p148, %s145, 1
        %s150 = smul.addr %s147, 16
        %s151 = sadd.s32 %s149, %s150
        %s152 = smul.addr %s151, 4
        %s153 = scalar_lea.vmem %s0, %s152
        %s154 = smul.u32 2, %s17
      $region24: #{_lambda_.6} parent=19 // pred_fallthru
        _
    $region20: #{_lambda_.6} parent=5 // pred_fallthru
      _
    %p155 = scmp.le.s32.totalorder 1, %s8
    %p156 = scmp.lt.s32.totalorder %s8, 3
    %p157 = pnand %p155, %p156
    %p158 = pneg %p157
    // Predicated region
    $region25: #{_lambda_.6} parent=5 // pred_check
      _
    $region26: #{_lambda_.6} parent=5 // pred_check_branch
      %160 = sbr.rel (%p157) target = $region28
    $region27: #{_lambda_.6} parent=5 // pred_region
      %s161 = ssub.s32 %s8, 1
      %s162 = smul.u32 2, %s20
      %p163 = scmp.lt.s32.totalorder %s18, 1
      %s164 = scalar_select %p163, %s18, 1
      %p165 = scmp.lt.s32.totalorder %s162, 1
      %s166 = scalar_select %p165, %s162, 1
      %s167 = smul.addr %s164, 16
      %s168 = sadd.s32 %s166, %s167
      %s169 = smul.addr %s168, 4
      %s170 = scalar_lea.vmem %s0, %s169
      %p171 = pneg %p55
      %p172 = pneg %p52
      %s173 = smul.u32 32, %s20
      %p174 = scmp.lt.s32.totalorder %s173, 31
      %s175 = scalar_select %p174, %s173, 31
      %p176 = scmp.lt.s32.totalorder %s19, 0
      %s177 = scalar_select %p176, %s19, 0
      %s178 = sadd.s32 %s177, %s175
      %s179 = smul.addr %s178, 4
      %s180 = scalar_lea.vmem %s1, %s179
      %p181 = pneg %p83
      %p182 = pneg %p80
      %p183 = pneg %p111
      %p184 = pneg %p108
      %p185 = scmp.lt.s32.totalorder %s18, 1
      %s186 = scalar_select %p185, %s18, 1
      %p187 = scmp.lt.s32.totalorder %s19, 0
      %s188 = scalar_select %p187, %s19, 0
      %s189 = smul.addr %s186, 8
      %s190 = sadd.s32 %s188, %s189
      %s191 = smul.addr %s190, 4
      %s192 = scalar_lea.vmem %s2, %s191
      %s193 = smul.u32 2, %s20
      %p194 = scmp.lt.s32.totalorder %s18, 1
      %s195 = scalar_select %p194, %s18, 1
      %p196 = scmp.lt.s32.totalorder %s193, 1
      %s197 = scalar_select %p196, %s193, 1
      %s198 = smul.addr %s195, 16
      %s199 = sadd.s32 %s197, %s198
      %s200 = smul.addr %s199, 4
      %s201 = scalar_lea.vmem %s0, %s200
      %s202 = smul.u32 2, %s20
      %s203 = smul.u32 32, %s20
      %p204 = scmp.lt.s32.totalorder %s203, 31
      %s205 = scalar_select %p204, %s203, 31
      %p206 = scmp.lt.s32.totalorder %s19, 0
      %s207 = scalar_select %p206, %s19, 0
      %s208 = sadd.s32 %s207, %s205
      %s209 = smul.addr %s208, 4
      %s210 = scalar_lea.vmem %s1, %s209
      %s211 = smul.u32 32, %s20
      %p212 = scmp.lt.s32.totalorder %s18, 1
      %s213 = scalar_select %p212, %s18, 1
      %p214 = scmp.lt.s32.totalorder %s19, 0
      %s215 = scalar_select %p214, %s19, 0
      %s216 = smul.addr %s213, 8
      %s217 = sadd.s32 %s215, %s216
      %s218 = smul.addr %s217, 4
      %s219 = scalar_lea.vmem %s2, %s218
      %p221 = scmp.eq.s32.totalorder %s20, 0
      // Predicated region
      $region29: #{_lambda_.6} parent=27 // pred_check
        %p222 = pneg %p221
      $region30: #{_lambda_.6} parent=27 // pred_check_branch
        %224 = sbr.rel (%p222) target = $region32
      $region31: #{_lambda_.6} parent=27 // pred_region
        %225 = vst [vmem:[#allocation2] sm:$0xff] 0.0
        %226 = vst [vmem:[#allocation2 + $0x8] sm:$0xff] 0.0
        %227 = vst [vmem:[#allocation2 + $0x10] sm:$0xff] 0.0
        %228 = vst [vmem:[#allocation2 + $0x18] sm:$0xff] 0.0
        %229 = vst [vmem:[#allocation2 + $0x20] sm:$0xff] 0.0
        %230 = vst [vmem:[#allocation2 + $0x28] sm:$0xff] 0.0
        %231 = vst [vmem:[#allocation2 + $0x30] sm:$0xff] 0.0
        %232 = vst [vmem:[#allocation2 + $0x38] sm:$0xff] 0.0
      $region32: #{_lambda_.6} parent=27 // pred_fallthru
        _
      %v233 = vld [vmem:[#allocation2] sm:$0xff]
      %v234 = vld [vmem:[#allocation2 + $0x8] sm:$0xff]
      %v235 = vld [vmem:[#allocation2 + $0x10] sm:$0xff]
      %v236 = vld [vmem:[#allocation2 + $0x18] sm:$0xff]
      %v237 = vld [vmem:[#allocation2 + $0x20] sm:$0xff]
      %v238 = vld [vmem:[#allocation2 + $0x28] sm:$0xff]
      %v239 = vld [vmem:[#allocation2 + $0x30] sm:$0xff]
      %v240 = vld [vmem:[#allocation2 + $0x38] sm:$0xff]
      %v241 = vld [vmem:[%s201] sm:$0xff]
      %v242 = vld [vmem:[%s201 + $0x8] sm:$0xff]
      %v243 = vld [vmem:[%s201 + $0x10] sm:$0xff]
      %v244 = vld [vmem:[%s201 + $0x18] sm:$0xff]
      %v245 = vld [vmem:[%s201 + $0x20] sm:$0xff]
      %v246 = vld [vmem:[%s201 + $0x28] sm:$0xff]
      %v247 = vld [vmem:[%s201 + $0x30] sm:$0xff]
      %v248 = vld [vmem:[%s201 + $0x38] sm:$0xff]
      %v249 = vld [vmem:[%s210] sm:$0xf]
      %v250 = vld [vmem:[%s210 + $0x4] sm:$0xf]
      %v251 = vld [vmem:[%s210 + $0x8] sm:$0xf]
      %v252 = vld [vmem:[%s210 + $0xc] sm:$0xf]
      %v253 = vld [vmem:[%s210 + $0x10] sm:$0xf]
      %v254 = vld [vmem:[%s210 + $0x14] sm:$0xf]
      %v255 = vld [vmem:[%s210 + $0x18] sm:$0xf]
      %v256 = vld [vmem:[%s210 + $0x1c] sm:$0xf]
      %v257 = vld [vmem:[%s210 + $0x20] sm:$0xf]
      %v258 = vld [vmem:[%s210 + $0x24] sm:$0xf]
      %v259 = vld [vmem:[%s210 + $0x28] sm:$0xf]
      %v260 = vld [vmem:[%s210 + $0x2c] sm:$0xf]
      %v261 = vld [vmem:[%s210 + $0x30] sm:$0xf]
      %v262 = vld [vmem:[%s210 + $0x34] sm:$0xf]
      %v263 = vld [vmem:[%s210 + $0x38] sm:$0xf]
      %v264 = vld [vmem:[%s210 + $0x3c] sm:$0xf]
      %v265 = vld [vmem:[%s210 + $0x40] sm:$0xf]
      %v266 = vld [vmem:[%s210 + $0x44] sm:$0xf]
      %v267 = vld [vmem:[%s210 + $0x48] sm:$0xf]
      %v268 = vld [vmem:[%s210 + $0x4c] sm:$0xf]
      %v269 = vld [vmem:[%s210 + $0x50] sm:$0xf]
      %v270 = vld [vmem:[%s210 + $0x54] sm:$0xf]
      %v271 = vld [vmem:[%s210 + $0x58] sm:$0xf]
      %v272 = vld [vmem:[%s210 + $0x5c] sm:$0xf]
      %v273 = vld [vmem:[%s210 + $0x60] sm:$0xf]
      %v274 = vld [vmem:[%s210 + $0x64] sm:$0xf]
      %v275 = vld [vmem:[%s210 + $0x68] sm:$0xf]
      %v276 = vld [vmem:[%s210 + $0x6c] sm:$0xf]
      %v277 = vld [vmem:[%s210 + $0x70] sm:$0xf]
      %v278 = vld [vmem:[%s210 + $0x74] sm:$0xf]
      %v279 = vld [vmem:[%s210 + $0x78] sm:$0xf]
      %v280 = vld [vmem:[%s210 + $0x7c] sm:$0xf]
      %v289 = vunpack.c.l.b16 %v241
      %v290 = vunpack.c.h.b16 %v241
      %v291 = vunpack.c.l.b16 %v242
      %v292 = vunpack.c.h.b16 %v242
      %v293 = vunpack.c.l.b16 %v243
      %v294 = vunpack.c.h.b16 %v243
      %v295 = vunpack.c.l.b16 %v244
      %v296 = vunpack.c.h.b16 %v244
      %v297 = vunpack.c.l.b16 %v245
      %v298 = vunpack.c.h.b16 %v245
      %v299 = vunpack.c.l.b16 %v246
      %v300 = vunpack.c.h.b16 %v246
      %v301 = vunpack.c.l.b16 %v247
      %v302 = vunpack.c.h.b16 %v247
      %v303 = vunpack.c.l.b16 %v248
      %v304 = vunpack.c.h.b16 %v248
      %v305 = vpack.c.b16 %v291, %v289
      %v306 = vpack.c.b16 %v292, %v290
      %v307 = vpack.c.b16 %v295, %v293
      %v308 = vpack.c.b16 %v296, %v294
      %v309 = vpack.c.b16 %v299, %v297
      %v310 = vpack.c.b16 %v300, %v298
      %v311 = vpack.c.b16 %v303, %v301
      %v312 = vpack.c.b16 %v304, %v302
      %v353 = vunpack.c.l.b16 %v249
      %v354 = vunpack.c.l.b16 %v250
      %v355 = vunpack.c.l.b16 %v251
      %v356 = vunpack.c.l.b16 %v252
      %v357 = vunpack.c.l.b16 %v253
      %v358 = vunpack.c.l.b16 %v254
      %v359 = vunpack.c.l.b16 %v255
      %v360 = vunpack.c.l.b16 %v256
      %v361 = vunpack.c.l.b16 %v257
      %v362 = vunpack.c.l.b16 %v258
      %v363 = vunpack.c.l.b16 %v259
      %v364 = vunpack.c.l.b16 %v260
      %v365 = vunpack.c.l.b16 %v261
      %v366 = vunpack.c.l.b16 %v262
      %v367 = vunpack.c.l.b16 %v263
      %v368 = vunpack.c.l.b16 %v264
      %v369 = vunpack.c.l.b16 %v265
      %v370 = vunpack.c.l.b16 %v266
      %v371 = vunpack.c.l.b16 %v267
      %v372 = vunpack.c.l.b16 %v268
      %v373 = vunpack.c.l.b16 %v269
      %v374 = vunpack.c.l.b16 %v270
      %v375 = vunpack.c.l.b16 %v271
      %v376 = vunpack.c.l.b16 %v272
      %v377 = vunpack.c.l.b16 %v273
      %v378 = vunpack.c.l.b16 %v274
      %v379 = vunpack.c.l.b16 %v275
      %v380 = vunpack.c.l.b16 %v276
      %v381 = vunpack.c.l.b16 %v277
      %v382 = vunpack.c.l.b16 %v278
      %v383 = vunpack.c.l.b16 %v279
      %v384 = vunpack.c.l.b16 %v280
      %v385 = vpack.c.b16 %v354, %v353
      %v386 = vpack.c.b16 %v356, %v355
      %v387 = vpack.c.b16 %v358, %v357
      %v388 = vpack.c.b16 %v360, %v359
      %v389 = vpack.c.b16 %v362, %v361
      %v390 = vpack.c.b16 %v364, %v363
      %v391 = vpack.c.b16 %v366, %v365
      %v392 = vpack.c.b16 %v368, %v367
      %v393 = vpack.c.b16 %v370, %v369
      %v394 = vpack.c.b16 %v372, %v371
      %v395 = vpack.c.b16 %v374, %v373
      %v396 = vpack.c.b16 %v376, %v375
      %v397 = vpack.c.b16 %v378, %v377
      %v398 = vpack.c.b16 %v380, %v379
      %v399 = vpack.c.b16 %v382, %v381
      %v400 = vpack.c.b16 %v384, %v383
      %417 = vmatprep.subr.bf16.mxu0 0
      %418 = vmatpush1.bf16.msra.mxu0 %v385
      %419 = vmatprep.subr.bf16.mxu0 0
      %420 = vmatpush1.bf16.msra.mxu0 %v386
      %421 = vmatprep.subr.bf16.mxu0 0
      %422 = vmatpush1.bf16.msra.mxu0 %v387
      %423 = vmatprep.subr.bf16.mxu0 0
      %424 = vmatpush1.bf16.msra.mxu0 %v388
      %425 = vmatprep.subr.bf16.mxu0 0
      %426 = vmatpush1.bf16.msra.mxu0 %v389
      %427 = vmatprep.subr.bf16.mxu0 0
      %428 = vmatpush1.bf16.msra.mxu0 %v390
      %429 = vmatprep.subr.bf16.mxu0 0
      %430 = vmatpush1.bf16.msra.mxu0 %v391
      %431 = vmatprep.subr.bf16.mxu0 0
      %432 = vmatpush1.bf16.msra.mxu0 %v392
      %433 = vmatprep.subr.bf16.mxu0 0
      %434 = vmatpush1.bf16.msra.mxu0 %v393
      %435 = vmatprep.subr.bf16.mxu0 0
      %436 = vmatpush1.bf16.msra.mxu0 %v394
      %437 = vmatprep.subr.bf16.mxu0 0
      %438 = vmatpush1.bf16.msra.mxu0 %v395
      %439 = vmatprep.subr.bf16.mxu0 0
      %440 = vmatpush1.bf16.msra.mxu0 %v396
      %441 = vmatprep.subr.bf16.mxu0 0
      %442 = vmatpush1.bf16.msra.mxu0 %v397
      %443 = vmatprep.subr.bf16.mxu0 0
      %444 = vmatpush1.bf16.msra.mxu0 %v398
      %445 = vmatprep.subr.bf16.mxu0 0
      %446 = vmatpush1.bf16.msra.mxu0 %v399
      %447 = vmatprep.subr.bf16.mxu0 0
      %448 = vmatpush1.bf16.msra.mxu0 %v400
      %449 = vmatprep.mubr.bf16.mxu0 %v306
      %450 = vmatmul.mubr.bf16.gmra.mrb[0].mxu0 %v305
      %v451 = vpop.f32.mrb[0].mxu0
      %v452 = vadd.f32 0.0, %v451
      %v453 = vpop.f32.mrb[0].mxu0
      %v454 = vpop.f32.mrb[0].mxu0
      %v455 = vadd.f32 0.0, %v454
      %v456 = vpop.f32.mrb[0].mxu0
      %457 = vmatprep.mubr.bf16.mxu0 %v308
      %458 = vmatmul.mubr.bf16.gmra.mrb[0].mxu0 %v307
      %v459 = vpop.f32.mrb[0].mxu0
      %v460 = vadd.f32 0.0, %v459
      %v461 = vpop.f32.mrb[0].mxu0
      %v462 = vpop.f32.mrb[0].mxu0
      %v463 = vadd.f32 0.0, %v462
      %v464 = vpop.f32.mrb[0].mxu0
      %465 = vmatprep.mubr.bf16.mxu0 %v310
      %466 = vmatmul.mubr.bf16.gmra.mrb[0].mxu0 %v309
      %v467 = vpop.f32.mrb[0].mxu0
      %v468 = vadd.f32 0.0, %v467
      %v469 = vpop.f32.mrb[0].mxu0
      %v470 = vpop.f32.mrb[0].mxu0
      %v471 = vadd.f32 0.0, %v470
      %v472 = vpop.f32.mrb[0].mxu0
      %473 = vmatprep.mubr.bf16.mxu0 %v312
      %474 = vmatmul.mubr.bf16.gmra.mrb[0].mxu0 %v311
      %v475 = vpop.f32.mrb[0].mxu0
      %v476 = vadd.f32 0.0, %v475
      %v477 = vpop.f32.mrb[0].mxu0
      %v478 = vpop.f32.mrb[0].mxu0
      %v479 = vadd.f32 0.0, %v478
      %v480 = vpop.f32.mrb[0].mxu0
      %481 = vdwg.mxu0
      %v482 = vadd.f32 %v233, %v452
      %v483 = vadd.f32 %v234, %v455
      %v484 = vadd.f32 %v235, %v460
      %v485 = vadd.f32 %v236, %v463
      %v486 = vadd.f32 %v237, %v468
      %v487 = vadd.f32 %v238, %v471
      %v488 = vadd.f32 %v239, %v476
      %v489 = vadd.f32 %v240, %v479
      %490 = vst [vmem:[#allocation2] sm:$0xff] %v482
      %491 = vst [vmem:[#allocation2 + $0x8] sm:$0xff] %v483
      %492 = vst [vmem:[#allocation2 + $0x10] sm:$0xff] %v484
      %493 = vst [vmem:[#allocation2 + $0x18] sm:$0xff] %v485
      %494 = vst [vmem:[#allocation2 + $0x20] sm:$0xff] %v486
      %495 = vst [vmem:[#allocation2 + $0x28] sm:$0xff] %v487
      %496 = vst [vmem:[#allocation2 + $0x30] sm:$0xff] %v488
      %497 = vst [vmem:[#allocation2 + $0x38] sm:$0xff] %v489
      // Predicated region
      $region33: #{_lambda_.6} parent=27 // pred_check
        %p498 = pneg %p221
      $region34: #{_lambda_.6} parent=27 // pred_check_branch
        %500 = sbr.rel (%p498) target = $region36
      $region35: #{_lambda_.6} parent=27 // pred_region
        %v501 = vld [vmem:[#allocation2] sm:$0xff]
        %v502 = vld [vmem:[#allocation2 + $0x8] sm:$0xff]
        %v503 = vld [vmem:[#allocation2 + $0x10] sm:$0xff]
        %v504 = vld [vmem:[#allocation2 + $0x18] sm:$0xff]
        %v505 = vld [vmem:[#allocation2 + $0x20] sm:$0xff]
        %v506 = vld [vmem:[#allocation2 + $0x28] sm:$0xff]
        %v507 = vld [vmem:[#allocation2 + $0x30] sm:$0xff]
        %v508 = vld [vmem:[#allocation2 + $0x38] sm:$0xff]
        %v509 = vadd.f32 %v501, %v502
        %v510 = vadd.f32 %v509, %v503
        %v511 = vadd.f32 %v510, %v504
        %v512 = vadd.f32 %v511, %v505
        %v513 = vadd.f32 %v512, %v506
        %v514 = vadd.f32 %v513, %v507
        %v515 = vadd.f32 %v514, %v508
        %v516 = vrot.slane %v515, 4
        %v517 = vadd.f32 %v515, %v516
        %v518 = vrot.slane %v517, 2
        %v519 = vadd.f32 %v517, %v518
        %v520 = vrot.slane %v519, 1
        %v521 = vadd.f32 %v519, %v520
        %v522 = vmul.f32 %v501, %v501
        %v523 = vmul.f32 %v502, %v502
        %v524 = vmul.f32 %v503, %v503
        %v525 = vmul.f32 %v504, %v504
        %v526 = vmul.f32 %v505, %v505
        %v527 = vmul.f32 %v506, %v506
        %v528 = vmul.f32 %v507, %v507
        %v529 = vmul.f32 %v508, %v508
        %v530 = vadd.f32 %v522, %v523
        %v531 = vadd.f32 %v530, %v524
        %v532 = vadd.f32 %v531, %v525
        %v533 = vadd.f32 %v532, %v526
        %v534 = vadd.f32 %v533, %v527
        %v535 = vadd.f32 %v534, %v528
        %v536 = vadd.f32 %v535, %v529
        %v537 = vrot.slane %v536, 4
        %v538 = vadd.f32 %v536, %v537
        %v539 = vrot.slane %v538, 2
        %v540 = vadd.f32 %v538, %v539
        %v541 = vrot.slane %v540, 1
        %v542 = vadd.f32 %v540, %v541
        %v543 = vmul.f32 %v521, 0.015625
        %v544 = vmul.f32 %v542, 0.015625
        %v545 = vmul.f32 %v543, %v543
        %v546 = vsub.f32 %v544, %v545
        %v547 = vmax.f32 %v546, 0.0
        %v548 = vsub.f32 %v501, %v543
        %v549 = vsub.f32 %v502, %v543
        %v550 = vsub.f32 %v503, %v543
        %v551 = vsub.f32 %v504, %v543
        %v552 = vsub.f32 %v505, %v543
        %v553 = vsub.f32 %v506, %v543
        %v554 = vsub.f32 %v507, %v543
        %v555 = vsub.f32 %v508, %v543
        %v556 = vadd.f32 %v547, 1e-05
        %v557 = vrsqrt.pop %v556
        %v558 = vmul.f32 %v548, %v557
        %v559 = vmul.f32 %v549, %v557
        %v560 = vmul.f32 %v550, %v557
        %v561 = vmul.f32 %v551, %v557
        %v562 = vmul.f32 %v552, %v557
        %v563 = vmul.f32 %v553, %v557
        %v564 = vmul.f32 %v554, %v557
        %v565 = vmul.f32 %v555, %v557
        %vm566 = vcmp.gt.f32.partialorder %v558, 0.0
        %vm567 = vcmp.gt.f32.partialorder %v559, 0.0
        %vm568 = vcmp.gt.f32.partialorder %v560, 0.0
        %vm569 = vcmp.gt.f32.partialorder %v561, 0.0
        %vm570 = vcmp.gt.f32.partialorder %v562, 0.0
        %vm571 = vcmp.gt.f32.partialorder %v563, 0.0
        %vm572 = vcmp.gt.f32.partialorder %v564, 0.0
        %vm573 = vcmp.gt.f32.partialorder %v565, 0.0
        %v574 = vmul.f32 %v558, 0.2
        %v575 = vmul.f32 %v559, 0.2
        %v576 = vmul.f32 %v560, 0.2
        %v577 = vmul.f32 %v561, 0.2
        %v578 = vmul.f32 %v562, 0.2
        %v579 = vmul.f32 %v563, 0.2
        %v580 = vmul.f32 %v564, 0.2
        %v581 = vmul.f32 %v565, 0.2
        %v582 = vsel %vm566, %v558, %v574
        %v583 = vsel %vm567, %v559, %v575
        %v584 = vsel %vm568, %v560, %v576
        %v585 = vsel %vm569, %v561, %v577
        %v586 = vsel %vm570, %v562, %v578
        %v587 = vsel %vm571, %v563, %v579
        %v588 = vsel %vm572, %v564, %v580
        %v589 = vsel %vm573, %v565, %v581
        %v590 = vpack.c.bf16 %v583, %v582
        %v591 = vpack.c.bf16 %v585, %v584
        %v592 = vpack.c.bf16 %v587, %v586
        %v593 = vpack.c.bf16 %v589, %v588
        %v598 = vunpack.c.l.b16 %v590
        %v599 = vunpack.c.h.b16 %v590
        %v600 = vunpack.c.l.b16 %v591
        %v601 = vunpack.c.h.b16 %v591
        %v602 = vunpack.c.l.b16 %v592
        %v603 = vunpack.c.h.b16 %v592
        %v604 = vunpack.c.l.b16 %v593
        %v605 = vunpack.c.h.b16 %v593
        %v606 = vpack.c.b16 %v598, %v598
        %v607 = vpack.c.b16 %v599, %v599
        %v608 = vpack.c.b16 %v600, %v600
        %v609 = vpack.c.b16 %v601, %v601
        %v610 = vpack.c.b16 %v602, %v602
        %v611 = vpack.c.b16 %v603, %v603
        %v612 = vpack.c.b16 %v604, %v604
        %v613 = vpack.c.b16 %v605, %v605
        %622 = vst [vmem:[%s219] sm:$0xf] %v606
        %623 = vst [vmem:[%s219 + $0x4] sm:$0xf] %v607
        %624 = vst [vmem:[%s219 + $0x8] sm:$0xf] %v608
        %625 = vst [vmem:[%s219 + $0xc] sm:$0xf] %v609
        %626 = vst [vmem:[%s219 + $0x10] sm:$0xf] %v610
        %627 = vst [vmem:[%s219 + $0x14] sm:$0xf] %v611
        %628 = vst [vmem:[%s219 + $0x18] sm:$0xf] %v612
        %629 = vst [vmem:[%s219 + $0x1c] sm:$0xf] %v613
      $region36: #{_lambda_.6} parent=27 // pred_fallthru
        _
      %p630 = scmp.lt.s32.totalorder %s18, 1
      %s631 = scalar_select %p630, %s18, 1
      %p632 = scmp.lt.s32.totalorder %s19, 0
      %s633 = scalar_select %p632, %s19, 0
      %s634 = smul.addr %s631, 8
      %s635 = sadd.s32 %s633, %s634
      %s636 = smul.addr %s635, 4
      %s637 = scalar_lea.vmem %s2, %s636
      // Predicated region
      $region37: #{_lambda_.6} parent=27 // pred_check
        %p638 = pneg %p108
      $region38: #{_lambda_.6} parent=27 // pred_check_branch
        %640 = sbr.rel (%p638) target = $region40
      $region39: #{_lambda_.6} parent=27 // pred_region
        _
      $region40: #{_lambda_.6} parent=27 // pred_fallthru
        _
    $region28: #{_lambda_.6} parent=5 // pred_fallthru
      _
    %p641 = scmp.le.s32.totalorder 2, %s8
    // Predicated region
    $region41: #{_lambda_.6} parent=5 // pred_check
      %p642 = pneg %p641
    $region42: #{_lambda_.6} parent=5 // pred_check_branch
      %644 = sbr.rel (%p642) target = $region44
    $region43: #{_lambda_.6} parent=5 // pred_region
      %s645 = ssub.s32 %s8, 2
      // Predicated region
      $region45: #{_lambda_.6} parent=43 // pred_check
        %p646 = pneg %p114
      $region46: #{_lambda_.6} parent=43 // pred_check_branch
        %648 = sbr.rel (%p646) target = $region48
      $region47: #{_lambda_.6} parent=43 // pred_region
        %p649 = scmp.lt.s32.totalorder %s21, 1
        %s650 = scalar_select %p649, %s21, 1
        %p651 = scmp.lt.s32.totalorder %s22, 0
        %s652 = scalar_select %p651, %s22, 0
        %s653 = smul.addr %s650, 8
        %s654 = sadd.s32 %s652, %s653
        %s655 = smul.addr %s654, 4
        %s656 = scalar_lea.vmem %s2, %s655
      $region48: #{_lambda_.6} parent=43 // pred_fallthru
        _
    $region44: #{_lambda_.6} parent=5 // pred_fallthru
      _
  $region6: #{_lambda_.6} parent=0 // loop_footer
    %s12 = sadd.s32 1, %s8
  $region7: #{_lambda_.6} parent=0 // loop_footer_branch
    %7 = sbr.rel target = $region3
  $region8: #{_lambda_.6} parent=0 // loop_exit
    _

// kernel: _lambda_.7
$region0: #{_lambda_.7}
  #allocation0 [shape = 'u32[]', space=smem, size = 0x4, offset = 0x4, fixed_abs, tag = 'smem constant byte address 0x4 - core index']
  #allocation1 [shape = 'u32[144,128]{1,0:T(1,128)}', space=vmem, size = 0x12000, scoped, tag = 'internal scratch']
  #allocation2 [shape = 'f32[16,128]{1,0:T(8,128)}', space=vmem, size = 0x2000, scoped, tag = 'scratch operand']
  %s0 = inlined_call_operand.vmem [shape: bf16[2,16,512], index: 0, kind: input, shape index: {}]
  %s1 = inlined_call_operand.vmem [shape: bf16[512,128], index: 1, kind: input, shape index: {}]
  %s2 = inlined_call_operand.vmem [shape: bf16[2,16,128], index: 2, kind: output, shape index: {}]
  %s3 = sld [smem:[#allocation0]]
  $region49: #{_lambda_.7} parent=0
    _
  %s5 = ssub.s32 1, %s3
  %s6 = scalar_select 0, %s5, %s3
  loop: start=0, step=1, limit=4
  $region2: #{_lambda_.7} parent=0 // loop_pre_header
    _
  $region3: #{_lambda_.7} parent=0 // loop_header
    %s8 = sphi 0, %s12
    %p9 = scmp.ge.s32.totalorder %s8, 4
    %s15 = sphi 0, %s34
    %s16 = sphi 0, %s30
    %s17 = sphi 0, %s26
    %s18 = sphi 0, %s15
    %s19 = sphi 0, %s16
    %s20 = sphi 0, %s17
    %s21 = sphi 0, %s18
    %s22 = sphi 0, %s19
    %s23 = sphi 0, %s20
    %s39 = sphi 0, %s41
    %s42 = sphi 0, %s39
    %s43 = sphi 0, %s42
    %s59 = sphi 0, %s43
    %s67 = sphi 0, %s69
    %s70 = sphi 0, %s67
    %s71 = sphi 0, %s70
    %s87 = sphi 0, %s71
    %s95 = sphi 0, %s97
    %s98 = sphi 0, %s95
    %s99 = sphi 0, %s98
    %s115 = sphi 0, %s99
  $region4: #{_lambda_.7} parent=0 // loop_header_branch
    %11 = sbr.rel (%p9) target = $region8
  $region5: #{_lambda_.7} parent=0 // loop_body
    %s13 = ssub.s32 %s8, 1
    %s14 = ssub.s32 %s8, 2
    %s24 = sadd.s32 1, %s17
    %p25 = scmp.ge.s32.totalorder %s24, 1
    %s26 = scalar_select %p25, 0, %s24
    %s27 = sadd.s32 1, %s16
    %s28 = scalar_select %p25, %s27, %s16
    %p29 = scmp.ge.s32.totalorder %s28, 1
    %s30 = scalar_select %p29, 0, %s28
    %s31 = sadd.s32 1, %s15
    %s32 = scalar_select %p29, %s31, %s15
    %p33 = scmp.ge.s32.totalorder %s32, 2
    %s34 = scalar_select %p33, 0, %s32
    %s35 = ssub.s32 %s15, %s34
    %s36 = ssub.s32 %s17, %s26
    %s37 = sor.u32 %s35, %s36
    %p38 = scmp.eq.s32.totalorder %s37, 0
    %s40 = sadd.s32 %s39, 1
    %s41 = scalar_select %p38, %s39, %s40
    %p44 = pneg %p38
    %p45 = scmp.eq.s32.totalorder %s8, 1
    %p46 = por %p44, %p45
    %p47 = scmp.ne.s32.totalorder %s39, %s42
    %p48 = scmp.eq.s32.totalorder %s8, 0
    %p49 = por %p47, %p48
    %p50 = scmp.ne.s32.totalorder %s39, %s42
    %p51 = scmp.eq.s32.totalorder %s13, 1
    %p52 = por %p50, %p51
    %p53 = scmp.ne.s32.totalorder %s42, %s43
    %p54 = scmp.eq.s32.totalorder %s13, 0
    %p55 = por %p53, %p54
    %p56 = scmp.ne.s32.totalorder %s42, %s43
    %p57 = scmp.eq.s32.totalorder %s14, 1
    %p58 = por %p56, %p57
    %p60 = scmp.ne.s32.totalorder %s43, %s59
    %p61 = scmp.eq.s32.totalorder %s14, 0
    %p62 = por %p60, %p61
    %s63 = ssub.s32 %s17, %s26
    %s64 = ssub.s32 %s16, %s30
    %s65 = sor.u32 %s63, %s64
    %p66 = scmp.eq.s32.totalorder %s65, 0
    %s68 = sadd.s32 %s67, 1
    %s69 = scalar_select %p66, %s67, %s68
    %p72 = pneg %p66
    %p73 = scmp.eq.s32.totalorder %s8, 1
    %p74 = por %p72, %p73
    %p75 = scmp.ne.s32.totalorder %s67, %s70
    %p76 = scmp.eq.s32.totalorder %s8, 0
    %p77 = por %p75, %p76
    %p78 = scmp.ne.s32.totalorder %s67, %s70
    %p79 = scmp.eq.s32.totalorder %s13, 1
    %p80 = por %p78, %p79
    %p81 = scmp.ne.s32.totalorder %s70, %s71
    %p82 = scmp.eq.s32.totalorder %s13, 0
    %p83 = por %p81, %p82
    %p84 = scmp.ne.s32.totalorder %s70, %s71
    %p85 = scmp.eq.s32.totalorder %s14, 1
    %p86 = por %p84, %p85
    %p88 = scmp.ne.s32.totalorder %s71, %s87
    %p89 = scmp.eq.s32.totalorder %s14, 0
    %p90 = por %p88, %p89
    %s91 = ssub.s32 %s15, %s34
    %s92 = ssub.s32 %s16, %s30
    %s93 = sor.u32 %s91, %s92
    %p94 = scmp.eq.s32.totalorder %s93, 0
    %s96 = sadd.s32 %s95, 1
    %s97 = scalar_select %p94, %s95, %s96
    %p100 = pneg %p94
    %p101 = scmp.eq.s32.totalorder %s8, 1
    %p102 = por %p100, %p101
    %p103 = scmp.ne.s32.totalorder %s95, %s98
    %p104 = scmp.eq.s32.totalorder %s8, 0
    %p105 = por %p103, %p104
    %p106 = scmp.ne.s32.totalorder %s95, %s98
    %p107 = scmp.eq.s32.totalorder %s13, 1
    %p108 = por %p106, %p107
    %p109 = scmp.ne.s32.totalorder %s98, %s99
    %p110 = scmp.eq.s32.totalorder %s13, 0
    %p111 = por %p109, %p110
    %p112 = scmp.ne.s32.totalorder %s98, %s99
    %p113 = scmp.eq.s32.totalorder %s14, 1
    %p114 = por %p112, %p113
    %p116 = scmp.ne.s32.totalorder %s99, %s115
    %p117 = scmp.eq.s32.totalorder %s14, 0
    %p118 = por %p116, %p117
    %p119 = scmp.le.s32.totalorder 1, %s8
    %p120 = scmp.lt.s32.totalorder %s8, 3
    %p121 = pnand %p119, %p120
    %p122 = pneg %p121
    // Predicated region
    $region9: #{_lambda_.7} parent=5 // pred_check
      _
    $region10: #{_lambda_.7} parent=5 // pred_check_branch
      %124 = sbr.rel (%p121) target = $region12
    $region11: #{_lambda_.7} parent=5 // pred_region
      %s125 = ssub.s32 %s8, 1
      // Predicated region
      $region13: #{_lambda_.7} parent=11 // pred_check
        %p126 = pneg %p83
      $region14: #{_lambda_.7} parent=11 // pred_check_branch
        %128 = sbr.rel (%p126) target = $region16
      $region15: #{_lambda_.7} parent=11 // pred_region
        %s129 = smul.u32 64, %s20
        %p130 = scmp.lt.s32.totalorder %s129, 63
        %s131 = scalar_select %p130, %s129, 63
        %p132 = scmp.lt.s32.totalorder %s19, 0
        %s133 = scalar_select %p132, %s19, 0
        %s134 = sadd.s32 %s133, %s131
        %s135 = smul.addr %s134, 4
        %s136 = scalar_lea.vmem %s1, %s135
        %s137 = smul.u32 64, %s20
      $region16: #{_lambda_.7} parent=11 // pred_fallthru
        _
    $region12: #{_lambda_.7} parent=5 // pred_fallthru
      _
    %p138 = scmp.lt.s32.totalorder %s8, 2
    // Predicated region
    $region17: #{_lambda_.7} parent=5 // pred_check
      %p139 = pneg %p138
    $region18: #{_lambda_.7} parent=5 // pred_check_branch
      %141 = sbr.rel (%p139) target = $region20
    $region19: #{_lambda_.7} parent=5 // pred_region
      // Predicated region
      $region21: #{_lambda_.7} parent=19 // pred_check
        %p142 = pneg %p49
      $region22: #{_lambda_.7} parent=19 // pred_check_branch
        %144 = sbr.rel (%p142) target = $region24
      $region23: #{_lambda_.7} parent=19 // pred_region
        %s145 = smul.u32 4, %s17
        %p146 = scmp.lt.s32.totalorder %s15, 1
        %s147 = scalar_select %p146, %s15, 1
        %p148 = scmp.lt.s32.totalorder %s145, 3
        %s149 = scalar_select %p148, %s145, 3
        %s150 = smul.addr %s147, 8
        %s151 = sadd.s32 %s149, %s150
        %s152 = smul.addr %s151, 4
        %s153 = scalar_lea.vmem %s0, %s152
        %s154 = smul.u32 4, %s17
      $region24: #{_lambda_.7} parent=19 // pred_fallthru
        _
    $region20: #{_lambda_.7} parent=5 // pred_fallthru
      _
    %p155 = scmp.le.s32.totalorder 1, %s8
    %p156 = scmp.lt.s32.totalorder %s8, 3
    %p157 = pnand %p155, %p156
    %p158 = pneg %p157
    // Predicated region
    $region25: #{_lambda_.7} parent=5 // pred_check
      _
    $region26: #{_lambda_.7} parent=5 // pred_check_branch
      %160 = sbr.rel (%p157) target = $region28
    $region27: #{_lambda_.7} parent=5 // pred_region
      %s161 = ssub.s32 %s8, 1
      %s162 = smul.u32 4, %s20
      %p163 = scmp.lt.s32.totalorder %s18, 1
      %s164 = scalar_select %p163, %s18, 1
      %p165 = scmp.lt.s32.totalorder %s162, 3
      %s166 = scalar_select %p165, %s162, 3
      %s167 = smul.addr %s164, 8
      %s168 = sadd.s32 %s166, %s167
      %s169 = smul.addr %s168, 4
      %s170 = scalar_lea.vmem %s0, %s169
      %p171 = pneg %p55
      %p172 = pneg %p52
      %s173 = smul.u32 64, %s20
      %p174 = scmp.lt.s32.totalorder %s173, 63
      %s175 = scalar_select %p174, %s173, 63
      %p176 = scmp.lt.s32.totalorder %s19, 0
      %s177 = scalar_select %p176, %s19, 0
      %s178 = sadd.s32 %s177, %s175
      %s179 = smul.addr %s178, 4
      %s180 = scalar_lea.vmem %s1, %s179
      %p181 = pneg %p83
      %p182 = pneg %p80
      %p183 = pneg %p111
      %p184 = pneg %p108
      %p185 = scmp.lt.s32.totalorder %s18, 1
      %s186 = scalar_select %p185, %s18, 1
      %p187 = scmp.lt.s32.totalorder %s19, 0
      %s188 = scalar_select %p187, %s19, 0
      %s189 = smul.addr %s186, 2
      %s190 = sadd.s32 %s188, %s189
      %s191 = smul.addr %s190, 4
      %s192 = scalar_lea.vmem %s2, %s191
      %s193 = smul.u32 4, %s20
      %p194 = scmp.lt.s32.totalorder %s18, 1
      %s195 = scalar_select %p194, %s18, 1
      %p196 = scmp.lt.s32.totalorder %s193, 3
      %s197 = scalar_select %p196, %s193, 3
      %s198 = smul.addr %s195, 8
      %s199 = sadd.s32 %s197, %s198
      %s200 = smul.addr %s199, 4
      %s201 = scalar_lea.vmem %s0, %s200
      %s202 = smul.u32 4, %s20
      %s203 = smul.u32 64, %s20
      %p204 = scmp.lt.s32.totalorder %s203, 63
      %s205 = scalar_select %p204, %s203, 63
      %p206 = scmp.lt.s32.totalorder %s19, 0
      %s207 = scalar_select %p206, %s19, 0
      %s208 = sadd.s32 %s207, %s205
      %s209 = smul.addr %s208, 4
      %s210 = scalar_lea.vmem %s1, %s209
      %s211 = smul.u32 64, %s20
      %p212 = scmp.lt.s32.totalorder %s18, 1
      %s213 = scalar_select %p212, %s18, 1
      %p214 = scmp.lt.s32.totalorder %s19, 0
      %s215 = scalar_select %p214, %s19, 0
      %s216 = smul.addr %s213, 2
      %s217 = sadd.s32 %s215, %s216
      %s218 = smul.addr %s217, 4
      %s219 = scalar_lea.vmem %s2, %s218
      %p221 = scmp.eq.s32.totalorder %s20, 0
      // Predicated region
      $region29: #{_lambda_.7} parent=27 // pred_check
        %p222 = pneg %p221
      $region30: #{_lambda_.7} parent=27 // pred_check_branch
        %224 = sbr.rel (%p222) target = $region32
      $region31: #{_lambda_.7} parent=27 // pred_region
        %225 = vst [vmem:[#allocation2] sm:$0xff] 0.0
        %226 = vst [vmem:[#allocation2 + $0x8] sm:$0xff] 0.0
      $region32: #{_lambda_.7} parent=27 // pred_fallthru
        _
      %v227 = vld [vmem:[#allocation2] sm:$0xff]
      %v228 = vld [vmem:[#allocation2 + $0x8] sm:$0xff]
      %v229 = vld [vmem:[%s201] sm:$0xff]
      %v230 = vld [vmem:[%s201 + $0x8] sm:$0xff]
      %v231 = vld [vmem:[%s201 + $0x10] sm:$0xff]
      %v232 = vld [vmem:[%s201 + $0x18] sm:$0xff]
      %v233 = vld [vmem:[%s210] sm:$0xf]
      %v234 = vld [vmem:[%s210 + $0x4] sm:$0xf]
      %v235 = vld [vmem:[%s210 + $0x8] sm:$0xf]
      %v236 = vld [vmem:[%s210 + $0xc] sm:$0xf]
      %v237 = vld [vmem:[%s210 + $0x10] sm:$0xf]
      %v238 = vld [vmem:[%s210 + $0x14] sm:$0xf]
      %v239 = vld [vmem:[%s210 + $0x18] sm:$0xf]
      %v240 = vld [vmem:[%s210 + $0x1c] sm:$0xf]
      %v241 = vld [vmem:[%s210 + $0x20] sm:$0xf]
      %v242 = vld [vmem:[%s210 + $0x24] sm:$0xf]
      %v243 = vld [vmem:[%s210 + $0x28] sm:$0xf]
      %v244 = vld [vmem:[%s210 + $0x2c] sm:$0xf]
      %v245 = vld [vmem:[%s210 + $0x30] sm:$0xf]
      %v246 = vld [vmem:[%s210 + $0x34] sm:$0xf]
      %v247 = vld [vmem:[%s210 + $0x38] sm:$0xf]
      %v248 = vld [vmem:[%s210 + $0x3c] sm:$0xf]
      %v249 = vld [vmem:[%s210 + $0x40] sm:$0xf]
      %v250 = vld [vmem:[%s210 + $0x44] sm:$0xf]
      %v251 = vld [vmem:[%s210 + $0x48] sm:$0xf]
      %v252 = vld [vmem:[%s210 + $0x4c] sm:$0xf]
      %v253 = vld [vmem:[%s210 + $0x50] sm:$0xf]
      %v254 = vld [vmem:[%s210 + $0x54] sm:$0xf]
      %v255 = vld [vmem:[%s210 + $0x58] sm:$0xf]
      %v256 = vld [vmem:[%s210 + $0x5c] sm:$0xf]
      %v257 = vld [vmem:[%s210 + $0x60] sm:$0xf]
      %v258 = vld [vmem:[%s210 + $0x64] sm:$0xf]
      %v259 = vld [vmem:[%s210 + $0x68] sm:$0xf]
      %v260 = vld [vmem:[%s210 + $0x6c] sm:$0xf]
      %v261 = vld [vmem:[%s210 + $0x70] sm:$0xf]
      %v262 = vld [vmem:[%s210 + $0x74] sm:$0xf]
      %v263 = vld [vmem:[%s210 + $0x78] sm:$0xf]
      %v264 = vld [vmem:[%s210 + $0x7c] sm:$0xf]
      %v265 = vld [vmem:[%s210 + $0x80] sm:$0xf]
      %v266 = vld [vmem:[%s210 + $0x84] sm:$0xf]
      %v267 = vld [vmem:[%s210 + $0x88] sm:$0xf]
      %v268 = vld [vmem:[%s210 + $0x8c] sm:$0xf]
      %v269 = vld [vmem:[%s210 + $0x90] sm:$0xf]
      %v270 = vld [vmem:[%s210 + $0x94] sm:$0xf]
      %v271 = vld [vmem:[%s210 + $0x98] sm:$0xf]
      %v272 = vld [vmem:[%s210 + $0x9c] sm:$0xf]
      %v273 = vld [vmem:[%s210 + $0xa0] sm:$0xf]
      %v274 = vld [vmem:[%s210 + $0xa4] sm:$0xf]
      %v275 = vld [vmem:[%s210 + $0xa8] sm:$0xf]
      %v276 = vld [vmem:[%s210 + $0xac] sm:$0xf]
      %v277 = vld [vmem:[%s210 + $0xb0] sm:$0xf]
      %v278 = vld [vmem:[%s210 + $0xb4] sm:$0xf]
      %v279 = vld [vmem:[%s210 + $0xb8] sm:$0xf]
      %v280 = vld [vmem:[%s210 + $0xbc] sm:$0xf]
      %v281 = vld [vmem:[%s210 + $0xc0] sm:$0xf]
      %v282 = vld [vmem:[%s210 + $0xc4] sm:$0xf]
      %v283 = vld [vmem:[%s210 + $0xc8] sm:$0xf]
      %v284 = vld [vmem:[%s210 + $0xcc] sm:$0xf]
      %v285 = vld [vmem:[%s210 + $0xd0] sm:$0xf]
      %v286 = vld [vmem:[%s210 + $0xd4] sm:$0xf]
      %v287 = vld [vmem:[%s210 + $0xd8] sm:$0xf]
      %v288 = vld [vmem:[%s210 + $0xdc] sm:$0xf]
      %v289 = vld [vmem:[%s210 + $0xe0] sm:$0xf]
      %v290 = vld [vmem:[%s210 + $0xe4] sm:$0xf]
      %v291 = vld [vmem:[%s210 + $0xe8] sm:$0xf]
      %v292 = vld [vmem:[%s210 + $0xec] sm:$0xf]
      %v293 = vld [vmem:[%s210 + $0xf0] sm:$0xf]
      %v294 = vld [vmem:[%s210 + $0xf4] sm:$0xf]
      %v295 = vld [vmem:[%s210 + $0xf8] sm:$0xf]
      %v296 = vld [vmem:[%s210 + $0xfc] sm:$0xf]
      %v301 = vunpack.c.l.b16 %v229
      %v302 = vunpack.c.h.b16 %v229
      %v303 = vunpack.c.l.b16 %v230
      %v304 = vunpack.c.h.b16 %v230
      %v305 = vunpack.c.l.b16 %v231
      %v306 = vunpack.c.h.b16 %v231
      %v307 = vunpack.c.l.b16 %v232
      %v308 = vunpack.c.h.b16 %v232
      %v309 = vpack.c.b16 %v305, %v301
      %v310 = vpack.c.b16 %v306, %v302
      %v311 = vpack.c.b16 %v307, %v303
      %v312 = vpack.c.b16 %v308, %v304
      %v381 = vunpack.c.l.b16 %v233
      %v382 = vunpack.c.l.b16 %v234
      %v383 = vunpack.c.l.b16 %v235
      %v384 = vunpack.c.l.b16 %v236
      %v385 = vunpack.c.l.b16 %v237
      %v386 = vunpack.c.l.b16 %v238
      %v387 = vunpack.c.l.b16 %v239
      %v388 = vunpack.c.l.b16 %v240
      %v389 = vunpack.c.l.b16 %v241
      %v390 = vunpack.c.l.b16 %v242
      %v391 = vunpack.c.l.b16 %v243
      %v392 = vunpack.c.l.b16 %v244
      %v393 = vunpack.c.l.b16 %v245
      %v394 = vunpack.c.l.b16 %v246
      %v395 = vunpack.c.l.b16 %v247
      %v396 = vunpack.c.l.b16 %v248
      %v397 = vunpack.c.l.b16 %v249
      %v398 = vunpack.c.l.b16 %v250
      %v399 = vunpack.c.l.b16 %v251
      %v400 = vunpack.c.l.b16 %v252
      %v401 = vunpack.c.l.b16 %v253
      %v402 = vunpack.c.l.b16 %v254
      %v403 = vunpack.c.l.b16 %v255
      %v404 = vunpack.c.l.b16 %v256
      %v405 = vunpack.c.l.b16 %v257
      %v406 = vunpack.c.l.b16 %v258
      %v407 = vunpack.c.l.b16 %v259
      %v408 = vunpack.c.l.b16 %v260
      %v409 = vunpack.c.l.b16 %v261
      %v410 = vunpack.c.l.b16 %v262
      %v411 = vunpack.c.l.b16 %v263
      %v412 = vunpack.c.l.b16 %v264
      %v413 = vunpack.c.l.b16 %v265
      %v414 = vunpack.c.l.b16 %v266
      %v415 = vunpack.c.l.b16 %v267
      %v416 = vunpack.c.l.b16 %v268
      %v417 = vunpack.c.l.b16 %v269
      %v418 = vunpack.c.l.b16 %v270
      %v419 = vunpack.c.l.b16 %v271
      %v420 = vunpack.c.l.b16 %v272
      %v421 = vunpack.c.l.b16 %v273
      %v422 = vunpack.c.l.b16 %v274
      %v423 = vunpack.c.l.b16 %v275
      %v424 = vunpack.c.l.b16 %v276
      %v425 = vunpack.c.l.b16 %v277
      %v426 = vunpack.c.l.b16 %v278
      %v427 = vunpack.c.l.b16 %v279
      %v428 = vunpack.c.l.b16 %v280
      %v429 = vunpack.c.l.b16 %v281
      %v430 = vunpack.c.l.b16 %v282
      %v431 = vunpack.c.l.b16 %v283
      %v432 = vunpack.c.l.b16 %v284
      %v433 = vunpack.c.l.b16 %v285
      %v434 = vunpack.c.l.b16 %v286
      %v435 = vunpack.c.l.b16 %v287
      %v436 = vunpack.c.l.b16 %v288
      %v437 = vunpack.c.l.b16 %v289
      %v438 = vunpack.c.l.b16 %v290
      %v439 = vunpack.c.l.b16 %v291
      %v440 = vunpack.c.l.b16 %v292
      %v441 = vunpack.c.l.b16 %v293
      %v442 = vunpack.c.l.b16 %v294
      %v443 = vunpack.c.l.b16 %v295
      %v444 = vunpack.c.l.b16 %v296
      %v445 = vpack.c.b16 %v382, %v381
      %v446 = vpack.c.b16 %v384, %v383
      %v447 = vpack.c.b16 %v386, %v385
      %v448 = vpack.c.b16 %v388, %v387
      %v449 = vpack.c.b16 %v390, %v389
      %v450 = vpack.c.b16 %v392, %v391
      %v451 = vpack.c.b16 %v394, %v393
      %v452 = vpack.c.b16 %v396, %v395
      %v453 = vpack.c.b16 %v398, %v397
      %v454 = vpack.c.b16 %v400, %v399
      %v455 = vpack.c.b16 %v402, %v401
      %v456 = vpack.c.b16 %v404, %v403
      %v457 = vpack.c.b16 %v406, %v405
      %v458 = vpack.c.b16 %v408, %v407
      %v459 = vpack.c.b16 %v410, %v409
      %v460 = vpack.c.b16 %v412, %v411
      %v461 = vpack.c.b16 %v414, %v413
      %v462 = vpack.c.b16 %v416, %v415
      %v463 = vpack.c.b16 %v418, %v417
      %v464 = vpack.c.b16 %v420, %v419
      %v465 = vpack.c.b16 %v422, %v421
      %v466 = vpack.c.b16 %v424, %v423
      %v467 = vpack.c.b16 %v426, %v425
      %v468 = vpack.c.b16 %v428, %v427
      %v469 = vpack.c.b16 %v430, %v429
      %v470 = vpack.c.b16 %v432, %v431
      %v471 = vpack.c.b16 %v434, %v433
      %v472 = vpack.c.b16 %v436, %v435
      %v473 = vpack.c.b16 %v438, %v437
      %v474 = vpack.c.b16 %v440, %v439
      %v475 = vpack.c.b16 %v442, %v441
      %v476 = vpack.c.b16 %v444, %v443
      %509 = vmatprep.subr.bf16.mxu0 0
      %510 = vmatpush1.bf16.msra.mxu0 %v445
      %511 = vmatprep.subr.bf16.mxu0 0
      %512 = vmatpush1.bf16.msra.mxu0 %v446
      %513 = vmatprep.subr.bf16.mxu0 0
      %514 = vmatpush1.bf16.msra.mxu0 %v447
      %515 = vmatprep.subr.bf16.mxu0 0
      %516 = vmatpush1.bf16.msra.mxu0 %v448
      %517 = vmatprep.subr.bf16.mxu0 0
      %518 = vmatpush1.bf16.msra.mxu0 %v449
      %519 = vmatprep.subr.bf16.mxu0 0
      %520 = vmatpush1.bf16.msra.mxu0 %v450
      %521 = vmatprep.subr.bf16.mxu0 0
      %522 = vmatpush1.bf16.msra.mxu0 %v451
      %523 = vmatprep.subr.bf16.mxu0 0
      %524 = vmatpush1.bf16.msra.mxu0 %v452
      %525 = vmatprep.subr.bf16.mxu0 0
      %526 = vmatpush1.bf16.msra.mxu0 %v453
      %527 = vmatprep.subr.bf16.mxu0 0
      %528 = vmatpush1.bf16.msra.mxu0 %v454
      %529 = vmatprep.subr.bf16.mxu0 0
      %530 = vmatpush1.bf16.msra.mxu0 %v455
      %531 = vmatprep.subr.bf16.mxu0 0
      %532 = vmatpush1.bf16.msra.mxu0 %v456
      %533 = vmatprep.subr.bf16.mxu0 0
      %534 = vmatpush1.bf16.msra.mxu0 %v457
      %535 = vmatprep.subr.bf16.mxu0 0
      %536 = vmatpush1.bf16.msra.mxu0 %v458
      %537 = vmatprep.subr.bf16.mxu0 0
      %538 = vmatpush1.bf16.msra.mxu0 %v459
      %539 = vmatprep.subr.bf16.mxu0 0
      %540 = vmatpush1.bf16.msra.mxu0 %v460
      %541 = vmatprep.mubr.bf16.mxu0 %v310
      %542 = vmatmul.mubr.bf16.gmra.mrb[0].mxu0 %v309
      %v543 = vpop.f32.mrb[0].mxu0
      %v544 = vadd.f32 0.0, %v543
      %v545 = vpop.f32.mrb[0].mxu0
      %v546 = vpop.f32.mrb[0].mxu0
      %v547 = vadd.f32 0.0, %v546
      %v548 = vpop.f32.mrb[0].mxu0
      %549 = vdwg.mxu0
      %550 = vmatprep.subr.bf16.mxu0 0
      %551 = vmatpush1.bf16.msra.mxu0 %v461
      %552 = vmatprep.subr.bf16.mxu0 0
      %553 = vmatpush1.bf16.msra.mxu0 %v462
      %554 = vmatprep.subr.bf16.mxu0 0
      %555 = vmatpush1.bf16.msra.mxu0 %v463
      %556 = vmatprep.subr.bf16.mxu0 0
      %557 = vmatpush1.bf16.msra.mxu0 %v464
      %558 = vmatprep.subr.bf16.mxu0 0
      %559 = vmatpush1.bf16.msra.mxu0 %v465
      %560 = vmatprep.subr.bf16.mxu0 0
      %561 = vmatpush1.bf16.msra.mxu0 %v466
      %562 = vmatprep.subr.bf16.mxu0 0
      %563 = vmatpush1.bf16.msra.mxu0 %v467
      %564 = vmatprep.subr.bf16.mxu0 0
      %565 = vmatpush1.bf16.msra.mxu0 %v468
      %566 = vmatprep.subr.bf16.mxu0 0
      %567 = vmatpush1.bf16.msra.mxu0 %v469
      %568 = vmatprep.subr.bf16.mxu0 0
      %569 = vmatpush1.bf16.msra.mxu0 %v470
      %570 = vmatprep.subr.bf16.mxu0 0
      %571 = vmatpush1.bf16.msra.mxu0 %v471
      %572 = vmatprep.subr.bf16.mxu0 0
      %573 = vmatpush1.bf16.msra.mxu0 %v472
      %574 = vmatprep.subr.bf16.mxu0 0
      %575 = vmatpush1.bf16.msra.mxu0 %v473
      %576 = vmatprep.subr.bf16.mxu0 0
      %577 = vmatpush1.bf16.msra.mxu0 %v474
      %578 = vmatprep.subr.bf16.mxu0 0
      %579 = vmatpush1.bf16.msra.mxu0 %v475
      %580 = vmatprep.subr.bf16.mxu0 0
      %581 = vmatpush1.bf16.msra.mxu0 %v476
      %582 = vmatprep.mubr.bf16.mxu0 %v312
      %583 = vmatmul.mubr.bf16.gmra.mrb[0].mxu0 %v311
      %v584 = vpop.f32.mrb[0].mxu0
      %v585 = vadd.f32 %v544, %v584
      %v586 = vpop.f32.mrb[0].mxu0
      %v587 = vpop.f32.mrb[0].mxu0
      %v588 = vadd.f32 %v547, %v587
      %v589 = vpop.f32.mrb[0].mxu0
      %590 = vdwg.mxu0
      %v591 = vadd.f32 %v227, %v585
      %v592 = vadd.f32 %v228, %v588
      %593 = vst [vmem:[#allocation2] sm:$0xff] %v591
      %594 = vst [vmem:[#allocation2 + $0x8] sm:$0xff] %v592
      // Predicated region
      $region33: #{_lambda_.7} parent=27 // pred_check
        %p595 = pneg %p221
      $region34: #{_lambda_.7} parent=27 // pred_check_branch
        %597 = sbr.rel (%p595) target = $region36
      $region35: #{_lambda_.7} parent=27 // pred_region
        %v598 = vld [vmem:[#allocation2] sm:$0xff]
        %v599 = vld [vmem:[#allocation2 + $0x8] sm:$0xff]
        %v600 = vadd.f32 %v598, %v599
        %v601 = vrot.slane %v600, 4
        %v602 = vadd.f32 %v600, %v601
        %v603 = vrot.slane %v602, 2
        %v604 = vadd.f32 %v602, %v603
        %v605 = vrot.slane %v604, 1
        %v606 = vadd.f32 %v604, %v605
        %v607 = vmul.f32 %v598, %v598
        %v608 = vmul.f32 %v599, %v599
        %v609 = vadd.f32 %v607, %v608
        %v610 = vrot.slane %v609, 4
        %v611 = vadd.f32 %v609, %v610
        %v612 = vrot.slane %v611, 2
        %v613 = vadd.f32 %v611, %v612
        %v614 = vrot.slane %v613, 1
        %v615 = vadd.f32 %v613, %v614
        %v616 = vmul.f32 %v606, 0.0625
        %v617 = vmul.f32 %v615, 0.0625
        %v618 = vmul.f32 %v616, %v616
        %v619 = vsub.f32 %v617, %v618
        %v620 = vmax.f32 %v619, 0.0
        %v621 = vsub.f32 %v598, %v616
        %v622 = vsub.f32 %v599, %v616
        %v623 = vadd.f32 %v620, 1e-05
        %v624 = vrsqrt.pop %v623
        %v625 = vmul.f32 %v621, %v624
        %v626 = vmul.f32 %v622, %v624
        %vm627 = vcmp.gt.f32.partialorder %v625, 0.0
        %vm628 = vcmp.gt.f32.partialorder %v626, 0.0
        %v629 = vmul.f32 %v625, 0.2
        %v630 = vmul.f32 %v626, 0.2
        %v631 = vsel %vm627, %v625, %v629
        %v632 = vsel %vm628, %v626, %v630
        %v633 = vpack.c.bf16 %v632, %v631
        %v635 = vunpack.c.l.b16 %v633
        %v636 = vunpack.c.h.b16 %v633
        %v637 = vpack.c.b16 %v635, %v635
        %v638 = vpack.c.b16 %v636, %v636
        %641 = vst [vmem:[%s219] sm:$0xf] %v637
        %642 = vst [vmem:[%s219 + $0x4] sm:$0xf] %v638
      $region36: #{_lambda_.7} parent=27 // pred_fallthru
        _
      %p643 = scmp.lt.s32.totalorder %s18, 1
      %s644 = scalar_select %p643, %s18, 1
      %p645 = scmp.lt.s32.totalorder %s19, 0
      %s646 = scalar_select %p645, %s19, 0
      %s647 = smul.addr %s644, 2
      %s648 = sadd.s32 %s646, %s647
      %s649 = smul.addr %s648, 4
      %s650 = scalar_lea.vmem %s2, %s649
      // Predicated region
      $region37: #{_lambda_.7} parent=27 // pred_check
        %p651 = pneg %p108
      $region38: #{_lambda_.7} parent=27 // pred_check_branch
        %653 = sbr.rel (%p651) target = $region40
      $region39: #{_lambda_.7} parent=27 // pred_region
        _
      $region40: #{_lambda_.7} parent=27 // pred_fallthru
        _
    $region28: #{_lambda_.7} parent=5 // pred_fallthru
      _
    %p654 = scmp.le.s32.totalorder 2, %s8
    // Predicated region
    $region41: #{_lambda_.7} parent=5 // pred_check
      %p655 = pneg %p654
    $region42: #{_lambda_.7} parent=5 // pred_check_branch
      %657 = sbr.rel (%p655) target = $region44
    $region43: #{_lambda_.7} parent=5 // pred_region
      %s658 = ssub.s32 %s8, 2
      // Predicated region
      $region45: #{_lambda_.7} parent=43 // pred_check
        %p659 = pneg %p114
      $region46: #{_lambda_.7} parent=43 // pred_check_branch
        %661 = sbr.rel (%p659) target = $region48
      $region47: #{_lambda_.7} parent=43 // pred_region
        %p662 = scmp.lt.s32.totalorder %s21, 1
        %s663 = scalar_select %p662, %s21, 1
        %p664 = scmp.lt.s32.totalorder %s22, 0
        %s665 = scalar_select %p664, %s22, 0
        %s666 = smul.addr %s663, 2
        %s667 = sadd.s32 %s665, %s666
        %s668 = smul.addr %s667, 4
        %s669 = scalar_lea.vmem %s2, %s668
      $region48: #{_lambda_.7} parent=43 // pred_fallthru
        _
    $region44: #{_lambda_.7} parent=5 // pred_fallthru
      _
  $region6: #{_lambda_.7} parent=0 // loop_footer
    %s12 = sadd.s32 1, %s8
  $region7: #{_lambda_.7} parent=0 // loop_footer_branch
    %7 = sbr.rel target = $region3
  $region8: #{_lambda_.7} parent=0 // loop_exit
    _

// kernel: _lambda_.8
$region0: #{_lambda_.8}
  #allocation0 [shape = 'u32[]', space=smem, size = 0x4, offset = 0x4, fixed_abs, tag = 'smem constant byte address 0x4 - core index']
  #allocation1 [shape = 'u32[144,128]{1,0:T(1,128)}', space=vmem, size = 0x12000, scoped, tag = 'internal scratch']
  #allocation2 [shape = 'f32[9,128]{1,0:T(8,128)}', space=vmem, size = 0x2000, scoped, tag = 'scratch operand']
  %s0 = inlined_call_operand.vmem [shape: bf16[2,9,1024], index: 0, kind: input, shape index: {}]
  %s1 = inlined_call_operand.vmem [shape: bf16[1024,128], index: 1, kind: input, shape index: {}]
  %s2 = inlined_call_operand.vmem [shape: bf16[2,9,128], index: 2, kind: output, shape index: {}]
  %s3 = sld [smem:[#allocation0]]
  $region49: #{_lambda_.8} parent=0
    _
  %s5 = ssub.s32 1, %s3
  %s6 = scalar_select 0, %s5, %s3
  loop: start=0, step=1, limit=4
  $region2: #{_lambda_.8} parent=0 // loop_pre_header
    _
  $region3: #{_lambda_.8} parent=0 // loop_header
    %s8 = sphi 0, %s12
    %p9 = scmp.ge.s32.totalorder %s8, 4
    %s15 = sphi 0, %s34
    %s16 = sphi 0, %s30
    %s17 = sphi 0, %s26
    %s18 = sphi 0, %s15
    %s19 = sphi 0, %s16
    %s20 = sphi 0, %s17
    %s21 = sphi 0, %s18
    %s22 = sphi 0, %s19
    %s23 = sphi 0, %s20
    %s39 = sphi 0, %s41
    %s42 = sphi 0, %s39
    %s43 = sphi 0, %s42
    %s59 = sphi 0, %s43
    %s67 = sphi 0, %s69
    %s70 = sphi 0, %s67
    %s71 = sphi 0, %s70
    %s87 = sphi 0, %s71
    %s95 = sphi 0, %s97
    %s98 = sphi 0, %s95
    %s99 = sphi 0, %s98
    %s115 = sphi 0, %s99
  $region4: #{_lambda_.8} parent=0 // loop_header_branch
    %11 = sbr.rel (%p9) target = $region8
  $region5: #{_lambda_.8} parent=0 // loop_body
    %s13 = ssub.s32 %s8, 1
    %s14 = ssub.s32 %s8, 2
    %s24 = sadd.s32 1, %s17
    %p25 = scmp.ge.s32.totalorder %s24, 1
    %s26 = scalar_select %p25, 0, %s24
    %s27 = sadd.s32 1, %s16
    %s28 = scalar_select %p25, %s27, %s16
    %p29 = scmp.ge.s32.totalorder %s28, 1
    %s30 = scalar_select %p29, 0, %s28
    %s31 = sadd.s32 1, %s15
    %s32 = scalar_select %p29, %s31, %s15
    %p33 = scmp.ge.s32.totalorder %s32, 2
    %s34 = scalar_select %p33, 0, %s32
    %s35 = ssub.s32 %s15, %s34
    %s36 = ssub.s32 %s17, %s26
    %s37 = sor.u32 %s35, %s36
    %p38 = scmp.eq.s32.totalorder %s37, 0
    %s40 = sadd.s32 %s39, 1
    %s41 = scalar_select %p38, %s39, %s40
    %p44 = pneg %p38
    %p45 = scmp.eq.s32.totalorder %s8, 1
    %p46 = por %p44, %p45
    %p47 = scmp.ne.s32.totalorder %s39, %s42
    %p48 = scmp.eq.s32.totalorder %s8, 0
    %p49 = por %p47, %p48
    %p50 = scmp.ne.s32.totalorder %s39, %s42
    %p51 = scmp.eq.s32.totalorder %s13, 1
    %p52 = por %p50, %p51
    %p53 = scmp.ne.s32.totalorder %s42, %s43
    %p54 = scmp.eq.s32.totalorder %s13, 0
    %p55 = por %p53, %p54
    %p56 = scmp.ne.s32.totalorder %s42, %s43
    %p57 = scmp.eq.s32.totalorder %s14, 1
    %p58 = por %p56, %p57
    %p60 = scmp.ne.s32.totalorder %s43, %s59
    %p61 = scmp.eq.s32.totalorder %s14, 0
    %p62 = por %p60, %p61
    %s63 = ssub.s32 %s17, %s26
    %s64 = ssub.s32 %s16, %s30
    %s65 = sor.u32 %s63, %s64
    %p66 = scmp.eq.s32.totalorder %s65, 0
    %s68 = sadd.s32 %s67, 1
    %s69 = scalar_select %p66, %s67, %s68
    %p72 = pneg %p66
    %p73 = scmp.eq.s32.totalorder %s8, 1
    %p74 = por %p72, %p73
    %p75 = scmp.ne.s32.totalorder %s67, %s70
    %p76 = scmp.eq.s32.totalorder %s8, 0
    %p77 = por %p75, %p76
    %p78 = scmp.ne.s32.totalorder %s67, %s70
    %p79 = scmp.eq.s32.totalorder %s13, 1
    %p80 = por %p78, %p79
    %p81 = scmp.ne.s32.totalorder %s70, %s71
    %p82 = scmp.eq.s32.totalorder %s13, 0
    %p83 = por %p81, %p82
    %p84 = scmp.ne.s32.totalorder %s70, %s71
    %p85 = scmp.eq.s32.totalorder %s14, 1
    %p86 = por %p84, %p85
    %p88 = scmp.ne.s32.totalorder %s71, %s87
    %p89 = scmp.eq.s32.totalorder %s14, 0
    %p90 = por %p88, %p89
    %s91 = ssub.s32 %s15, %s34
    %s92 = ssub.s32 %s16, %s30
    %s93 = sor.u32 %s91, %s92
    %p94 = scmp.eq.s32.totalorder %s93, 0
    %s96 = sadd.s32 %s95, 1
    %s97 = scalar_select %p94, %s95, %s96
    %p100 = pneg %p94
    %p101 = scmp.eq.s32.totalorder %s8, 1
    %p102 = por %p100, %p101
    %p103 = scmp.ne.s32.totalorder %s95, %s98
    %p104 = scmp.eq.s32.totalorder %s8, 0
    %p105 = por %p103, %p104
    %p106 = scmp.ne.s32.totalorder %s95, %s98
    %p107 = scmp.eq.s32.totalorder %s13, 1
    %p108 = por %p106, %p107
    %p109 = scmp.ne.s32.totalorder %s98, %s99
    %p110 = scmp.eq.s32.totalorder %s13, 0
    %p111 = por %p109, %p110
    %p112 = scmp.ne.s32.totalorder %s98, %s99
    %p113 = scmp.eq.s32.totalorder %s14, 1
    %p114 = por %p112, %p113
    %p116 = scmp.ne.s32.totalorder %s99, %s115
    %p117 = scmp.eq.s32.totalorder %s14, 0
    %p118 = por %p116, %p117
    %p119 = scmp.le.s32.totalorder 1, %s8
    %p120 = scmp.lt.s32.totalorder %s8, 3
    %p121 = pnand %p119, %p120
    %p122 = pneg %p121
    // Predicated region
    $region9: #{_lambda_.8} parent=5 // pred_check
      _
    $region10: #{_lambda_.8} parent=5 // pred_check_branch
      %124 = sbr.rel (%p121) target = $region12
    $region11: #{_lambda_.8} parent=5 // pred_region
      %s125 = ssub.s32 %s8, 1
      // Predicated region
      $region13: #{_lambda_.8} parent=11 // pred_check
        %p126 = pneg %p83
      $region14: #{_lambda_.8} parent=11 // pred_check_branch
        %128 = sbr.rel (%p126) target = $region16
      $region15: #{_lambda_.8} parent=11 // pred_region
        %s129 = smul.u32 128, %s20
        %p130 = scmp.lt.s32.totalorder %s129, 127
        %s131 = scalar_select %p130, %s129, 127
        %p132 = scmp.lt.s32.totalorder %s19, 0
        %s133 = scalar_select %p132, %s19, 0
        %s134 = sadd.s32 %s133, %s131
        %s135 = smul.addr %s134, 4
        %s136 = scalar_lea.vmem %s1, %s135
        %s137 = smul.u32 128, %s20
      $region16: #{_lambda_.8} parent=11 // pred_fallthru
        _
    $region12: #{_lambda_.8} parent=5 // pred_fallthru
      _
    %p138 = scmp.lt.s32.totalorder %s8, 2
    // Predicated region
    $region17: #{_lambda_.8} parent=5 // pred_check
      %p139 = pneg %p138
    $region18: #{_lambda_.8} parent=5 // pred_check_branch
      %141 = sbr.rel (%p139) target = $region20
    $region19: #{_lambda_.8} parent=5 // pred_region
      // Predicated region
      $region21: #{_lambda_.8} parent=19 // pred_check
        %p142 = pneg %p49
      $region22: #{_lambda_.8} parent=19 // pred_check_branch
        %144 = sbr.rel (%p142) target = $region24
      $region23: #{_lambda_.8} parent=19 // pred_region
        %s145 = smul.u32 8, %s17
        %p146 = scmp.lt.s32.totalorder %s15, 1
        %s147 = scalar_select %p146, %s15, 1
        %p148 = scmp.lt.s32.totalorder %s145, 7
        %s149 = scalar_select %p148, %s145, 7
        %s150 = smul.addr %s147, 16
        %s151 = sadd.s32 %s149, %s150
        %s152 = smul.addr %s151, 4
        %s153 = scalar_lea.vmem %s0, %s152
        %s154 = smul.u32 8, %s17
      $region24: #{_lambda_.8} parent=19 // pred_fallthru
        _
    $region20: #{_lambda_.8} parent=5 // pred_fallthru
      _
    %p155 = scmp.le.s32.totalorder 1, %s8
    %p156 = scmp.lt.s32.totalorder %s8, 3
    %p157 = pnand %p155, %p156
    %p158 = pneg %p157
    // Predicated region
    $region25: #{_lambda_.8} parent=5 // pred_check
      _
    $region26: #{_lambda_.8} parent=5 // pred_check_branch
      %160 = sbr.rel (%p157) target = $region28
    $region27: #{_lambda_.8} parent=5 // pred_region
      %s161 = ssub.s32 %s8, 1
      %s162 = smul.u32 8, %s20
      %p163 = scmp.lt.s32.totalorder %s18, 1
      %s164 = scalar_select %p163, %s18, 1
      %p165 = scmp.lt.s32.totalorder %s162, 7
      %s166 = scalar_select %p165, %s162, 7
      %s167 = smul.addr %s164, 16
      %s168 = sadd.s32 %s166, %s167
      %s169 = smul.addr %s168, 4
      %s170 = scalar_lea.vmem %s0, %s169
      %p171 = pneg %p55
      %p172 = pneg %p52
      %s173 = smul.u32 128, %s20
      %p174 = scmp.lt.s32.totalorder %s173, 127
      %s175 = scalar_select %p174, %s173, 127
      %p176 = scmp.lt.s32.totalorder %s19, 0
      %s177 = scalar_select %p176, %s19, 0
      %s178 = sadd.s32 %s177, %s175
      %s179 = smul.addr %s178, 4
      %s180 = scalar_lea.vmem %s1, %s179
      %p181 = pneg %p83
      %p182 = pneg %p80
      %p183 = pneg %p111
      %p184 = pneg %p108
      %p185 = scmp.lt.s32.totalorder %s18, 1
      %s186 = scalar_select %p185, %s18, 1
      %p187 = scmp.lt.s32.totalorder %s19, 0
      %s188 = scalar_select %p187, %s19, 0
      %s189 = smul.addr %s186, 2
      %s190 = sadd.s32 %s188, %s189
      %s191 = smul.addr %s190, 4
      %s192 = scalar_lea.vmem %s2, %s191
      %s193 = smul.u32 8, %s20
      %p194 = scmp.lt.s32.totalorder %s18, 1
      %s195 = scalar_select %p194, %s18, 1
      %p196 = scmp.lt.s32.totalorder %s193, 7
      %s197 = scalar_select %p196, %s193, 7
      %s198 = smul.addr %s195, 16
      %s199 = sadd.s32 %s197, %s198
      %s200 = smul.addr %s199, 4
      %s201 = scalar_lea.vmem %s0, %s200
      %s202 = smul.u32 8, %s20
      %s203 = smul.u32 128, %s20
      %p204 = scmp.lt.s32.totalorder %s203, 127
      %s205 = scalar_select %p204, %s203, 127
      %p206 = scmp.lt.s32.totalorder %s19, 0
      %s207 = scalar_select %p206, %s19, 0
      %s208 = sadd.s32 %s207, %s205
      %s209 = smul.addr %s208, 4
      %s210 = scalar_lea.vmem %s1, %s209
      %s211 = smul.u32 128, %s20
      %p212 = scmp.lt.s32.totalorder %s18, 1
      %s213 = scalar_select %p212, %s18, 1
      %p214 = scmp.lt.s32.totalorder %s19, 0
      %s215 = scalar_select %p214, %s19, 0
      %s216 = smul.addr %s213, 2
      %s217 = sadd.s32 %s215, %s216
      %s218 = smul.addr %s217, 4
      %s219 = scalar_lea.vmem %s2, %s218
      %p221 = scmp.eq.s32.totalorder %s20, 0
      // Predicated region
      $region29: #{_lambda_.8} parent=27 // pred_check
        %p222 = pneg %p221
      $region30: #{_lambda_.8} parent=27 // pred_check_branch
        %224 = sbr.rel (%p222) target = $region32
      $region31: #{_lambda_.8} parent=27 // pred_region
        %225 = vst [vmem:[#allocation2] sm:$0xff] 0.0
        %226 = vst [vmem:[#allocation2 + $0x8] sm:$0x1] 0.0
      $region32: #{_lambda_.8} parent=27 // pred_fallthru
        _
      %v227 = vld [vmem:[#allocation2] sm:$0xff]
      %v228 = vld [vmem:[#allocation2 + $0x8] sm:$0x1]
      %v229 = vld [vmem:[%s201] sm:$0xff]
      %v230 = vld [vmem:[%s201 + $0x8] sm:$0xff]
      %v231 = vld [vmem:[%s201 + $0x10] sm:$0xff]
      %v232 = vld [vmem:[%s201 + $0x18] sm:$0xff]
      %v233 = vld [vmem:[%s201 + $0x20] sm:$0x11]
      %v234 = vld [vmem:[%s201 + $0x28] sm:$0x11]
      %v235 = vld [vmem:[%s201 + $0x30] sm:$0x11]
      %v236 = vld [vmem:[%s201 + $0x38] sm:$0x11]
      %v237 = vld [vmem:[%s210] sm:$0xf]
      %v238 = vld [vmem:[%s210 + $0x4] sm:$0xf]
      %v239 = vld [vmem:[%s210 + $0x8] sm:$0xf]
      %v240 = vld [vmem:[%s210 + $0xc] sm:$0xf]
      %v241 = vld [vmem:[%s210 + $0x10] sm:$0xf]
      %v242 = vld [vmem:[%s210 + $0x14] sm:$0xf]
      %v243 = vld [vmem:[%s210 + $0x18] sm:$0xf]
      %v244 = vld [vmem:[%s210 + $0x1c] sm:$0xf]
      %v245 = vld [vmem:[%s210 + $0x20] sm:$0xf]
      %v246 = vld [vmem:[%s210 + $0x24] sm:$0xf]
      %v247 = vld [vmem:[%s210 + $0x28] sm:$0xf]
      %v248 = vld [vmem:[%s210 + $0x2c] sm:$0xf]
      %v249 = vld [vmem:[%s210 + $0x30] sm:$0xf]
      %v250 = vld [vmem:[%s210 + $0x34] sm:$0xf]
      %v251 = vld [vmem:[%s210 + $0x38] sm:$0xf]
      %v252 = vld [vmem:[%s210 + $0x3c] sm:$0xf]
      %v253 = vld [vmem:[%s210 + $0x40] sm:$0xf]
      %v254 = vld [vmem:[%s210 + $0x44] sm:$0xf]
      %v255 = vld [vmem:[%s210 + $0x48] sm:$0xf]
      %v256 = vld [vmem:[%s210 + $0x4c] sm:$0xf]
      %v257 = vld [vmem:[%s210 + $0x50] sm:$0xf]
      %v258 = vld [vmem:[%s210 + $0x54] sm:$0xf]
      %v259 = vld [vmem:[%s210 + $0x58] sm:$0xf]
      %v260 = vld [vmem:[%s210 + $0x5c] sm:$0xf]
      %v261 = vld [vmem:[%s210 + $0x60] sm:$0xf]
      %v262 = vld [vmem:[%s210 + $0x64] sm:$0xf]
      %v263 = vld [vmem:[%s210 + $0x68] sm:$0xf]
      %v264 = vld [vmem:[%s210 + $0x6c] sm:$0xf]
      %v265 = vld [vmem:[%s210 + $0x70] sm:$0xf]
      %v266 = vld [vmem:[%s210 + $0x74] sm:$0xf]
      %v267 = vld [vmem:[%s210 + $0x78] sm:$0xf]
      %v268 = vld [vmem:[%s210 + $0x7c] sm:$0xf]
      %v269 = vld [vmem:[%s210 + $0x80] sm:$0xf]
      %v270 = vld [vmem:[%s210 + $0x84] sm:$0xf]
      %v271 = vld [vmem:[%s210 + $0x88] sm:$0xf]
      %v272 = vld [vmem:[%s210 + $0x8c] sm:$0xf]
      %v273 = vld [vmem:[%s210 + $0x90] sm:$0xf]
      %v274 = vld [vmem:[%s210 + $0x94] sm:$0xf]
      %v275 = vld [vmem:[%s210 + $0x98] sm:$0xf]
      %v276 = vld [vmem:[%s210 + $0x9c] sm:$0xf]
      %v277 = vld [vmem:[%s210 + $0xa0] sm:$0xf]
      %v278 = vld [vmem:[%s210 + $0xa4] sm:$0xf]
      %v279 = vld [vmem:[%s210 + $0xa8] sm:$0xf]
      %v280 = vld [vmem:[%s210 + $0xac] sm:$0xf]
      %v281 = vld [vmem:[%s210 + $0xb0] sm:$0xf]
      %v282 = vld [vmem:[%s210 + $0xb4] sm:$0xf]
      %v283 = vld [vmem:[%s210 + $0xb8] sm:$0xf]
      %v284 = vld [vmem:[%s210 + $0xbc] sm:$0xf]
      %v285 = vld [vmem:[%s210 + $0xc0] sm:$0xf]
      %v286 = vld [vmem:[%s210 + $0xc4] sm:$0xf]
      %v287 = vld [vmem:[%s210 + $0xc8] sm:$0xf]
      %v288 = vld [vmem:[%s210 + $0xcc] sm:$0xf]
      %v289 = vld [vmem:[%s210 + $0xd0] sm:$0xf]
      %v290 = vld [vmem:[%s210 + $0xd4] sm:$0xf]
      %v291 = vld [vmem:[%s210 + $0xd8] sm:$0xf]
      %v292 = vld [vmem:[%s210 + $0xdc] sm:$0xf]
      %v293 = vld [vmem:[%s210 + $0xe0] sm:$0xf]
      %v294 = vld [vmem:[%s210 + $0xe4] sm:$0xf]
      %v295 = vld [vmem:[%s210 + $0xe8] sm:$0xf]
      %v296 = vld [vmem:[%s210 + $0xec] sm:$0xf]
      %v297 = vld [vmem:[%s210 + $0xf0] sm:$0xf]
      %v298 = vld [vmem:[%s210 + $0xf4] sm:$0xf]
      %v299 = vld [vmem:[%s210 + $0xf8] sm:$0xf]
      %v300 = vld [vmem:[%s210 + $0xfc] sm:$0xf]
      %v301 = vld [vmem:[%s210 + $0x100] sm:$0xf]
      %v302 = vld [vmem:[%s210 + $0x104] sm:$0xf]
      %v303 = vld [vmem:[%s210 + $0x108] sm:$0xf]
      %v304 = vld [vmem:[%s210 + $0x10c] sm:$0xf]
      %v305 = vld [vmem:[%s210 + $0x110] sm:$0xf]
      %v306 = vld [vmem:[%s210 + $0x114] sm:$0xf]
      %v307 = vld [vmem:[%s210 + $0x118] sm:$0xf]
      %v308 = vld [vmem:[%s210 + $0x11c] sm:$0xf]
      %v309 = vld [vmem:[%s210 + $0x120] sm:$0xf]
      %v310 = vld [vmem:[%s210 + $0x124] sm:$0xf]
      %v311 = vld [vmem:[%s210 + $0x128] sm:$0xf]
      %v312 = vld [vmem:[%s210 + $0x12c] sm:$0xf]
      %v313 = vld [vmem:[%s210 + $0x130] sm:$0xf]
      %v314 = vld [vmem:[%s210 + $0x134] sm:$0xf]
      %v315 = vld [vmem:[%s210 + $0x138] sm:$0xf]
      %v316 = vld [vmem:[%s210 + $0x13c] sm:$0xf]
      %v317 = vld [vmem:[%s210 + $0x140] sm:$0xf]
      %v318 = vld [vmem:[%s210 + $0x144] sm:$0xf]
      %v319 = vld [vmem:[%s210 + $0x148] sm:$0xf]
      %v320 = vld [vmem:[%s210 + $0x14c] sm:$0xf]
      %v321 = vld [vmem:[%s210 + $0x150] sm:$0xf]
      %v322 = vld [vmem:[%s210 + $0x154] sm:$0xf]
      %v323 = vld [vmem:[%s210 + $0x158] sm:$0xf]
      %v324 = vld [vmem:[%s210 + $0x15c] sm:$0xf]
      %v325 = vld [vmem:[%s210 + $0x160] sm:$0xf]
      %v326 = vld [vmem:[%s210 + $0x164] sm:$0xf]
      %v327 = vld [vmem:[%s210 + $0x168] sm:$0xf]
      %v328 = vld [vmem:[%s210 + $0x16c] sm:$0xf]
      %v329 = vld [vmem:[%s210 + $0x170] sm:$0xf]
      %v330 = vld [vmem:[%s210 + $0x174] sm:$0xf]
      %v331 = vld [vmem:[%s210 + $0x178] sm:$0xf]
      %v332 = vld [vmem:[%s210 + $0x17c] sm:$0xf]
      %v333 = vld [vmem:[%s210 + $0x180] sm:$0xf]
      %v334 = vld [vmem:[%s210 + $0x184] sm:$0xf]
      %v335 = vld [vmem:[%s210 + $0x188] sm:$0xf]
      %v336 = vld [vmem:[%s210 + $0x18c] sm:$0xf]
      %v337 = vld [vmem:[%s210 + $0x190] sm:$0xf]
      %v338 = vld [vmem:[%s210 + $0x194] sm:$0xf]
      %v339 = vld [vmem:[%s210 + $0x198] sm:$0xf]
      %v340 = vld [vmem:[%s210 + $0x19c] sm:$0xf]
      %v341 = vld [vmem:[%s210 + $0x1a0] sm:$0xf]
      %v342 = vld [vmem:[%s210 + $0x1a4] sm:$0xf]
      %v343 = vld [vmem:[%s210 + $0x1a8] sm:$0xf]
      %v344 = vld [vmem:[%s210 + $0x1ac] sm:$0xf]
      %v345 = vld [vmem:[%s210 + $0x1b0] sm:$0xf]
      %v346 = vld [vmem:[%s210 + $0x1b4] sm:$0xf]
      %v347 = vld [vmem:[%s210 + $0x1b8] sm:$0xf]
      %v348 = vld [vmem:[%s210 + $0x1bc] sm:$0xf]
      %v349 = vld [vmem:[%s210 + $0x1c0] sm:$0xf]
      %v350 = vld [vmem:[%s210 + $0x1c4] sm:$0xf]
      %v351 = vld [vmem:[%s210 + $0x1c8] sm:$0xf]
      %v352 = vld [vmem:[%s210 + $0x1cc] sm:$0xf]
      %v353 = vld [vmem:[%s210 + $0x1d0] sm:$0xf]
      %v354 = vld [vmem:[%s210 + $0x1d4] sm:$0xf]
      %v355 = vld [vmem:[%s210 + $0x1d8] sm:$0xf]
      %v356 = vld [vmem:[%s210 + $0x1dc] sm:$0xf]
      %v357 = vld [vmem:[%s210 + $0x1e0] sm:$0xf]
      %v358 = vld [vmem:[%s210 + $0x1e4] sm:$0xf]
      %v359 = vld [vmem:[%s210 + $0x1e8] sm:$0xf]
      %v360 = vld [vmem:[%s210 + $0x1ec] sm:$0xf]
      %v361 = vld [vmem:[%s210 + $0x1f0] sm:$0xf]
      %v362 = vld [vmem:[%s210 + $0x1f4] sm:$0xf]
      %v363 = vld [vmem:[%s210 + $0x1f8] sm:$0xf]
      %v364 = vld [vmem:[%s210 + $0x1fc] sm:$0xf]
      %v373 = vunpack.c.l.b16 %v229
      %v374 = vunpack.c.h.b16 %v229
      %v375 = vunpack.c.l.b16 %v230
      %v376 = vunpack.c.h.b16 %v230
      %v377 = vunpack.c.l.b16 %v231
      %v378 = vunpack.c.h.b16 %v231
      %v379 = vunpack.c.l.b16 %v232
      %v380 = vunpack.c.h.b16 %v232
      %v381 = vunpack.c.l.b16 %v233
      %v382 = vunpack.c.h.b16 %v233
      %v383 = vunpack.c.l.b16 %v234
      %v384 = vunpack.c.h.b16 %v234
      %v385 = vunpack.c.l.b16 %v235
      %v386 = vunpack.c.h.b16 %v235
      %v387 = vunpack.c.l.b16 %v236
      %v388 = vunpack.c.h.b16 %v236
      %v389 = vpack.c.b16 %v381, %v373
      %v390 = vpack.c.b16 %v382, %v374
      %v391 = vpack.c.b16 %v383, %v375
      %v392 = vpack.c.b16 %v384, %v376
      %v393 = vpack.c.b16 %v385, %v377
      %v394 = vpack.c.b16 %v386, %v378
      %v395 = vpack.c.b16 %v387, %v379
      %v396 = vpack.c.b16 %v388, %v380
      %v533 = vunpack.c.l.b16 %v237
      %v534 = vunpack.c.l.b16 %v238
      %v535 = vunpack.c.l.b16 %v239
      %v536 = vunpack.c.l.b16 %v240
      %v537 = vunpack.c.l.b16 %v241
      %v538 = vunpack.c.l.b16 %v242
      %v539 = vunpack.c.l.b16 %v243
      %v540 = vunpack.c.l.b16 %v244
      %v541 = vunpack.c.l.b16 %v245
      %v542 = vunpack.c.l.b16 %v246
      %v543 = vunpack.c.l.b16 %v247
      %v544 = vunpack.c.l.b16 %v248
      %v545 = vunpack.c.l.b16 %v249
      %v546 = vunpack.c.l.b16 %v250
      %v547 = vunpack.c.l.b16 %v251
      %v548 = vunpack.c.l.b16 %v252
      %v549 = vunpack.c.l.b16 %v253
      %v550 = vunpack.c.l.b16 %v254
      %v551 = vunpack.c.l.b16 %v255
      %v552 = vunpack.c.l.b16 %v256
      %v553 = vunpack.c.l.b16 %v257
      %v554 = vunpack.c.l.b16 %v258
      %v555 = vunpack.c.l.b16 %v259
      %v556 = vunpack.c.l.b16 %v260
      %v557 = vunpack.c.l.b16 %v261
      %v558 = vunpack.c.l.b16 %v262
      %v559 = vunpack.c.l.b16 %v263
      %v560 = vunpack.c.l.b16 %v264
      %v561 = vunpack.c.l.b16 %v265
      %v562 = vunpack.c.l.b16 %v266
      %v563 = vunpack.c.l.b16 %v267
      %v564 = vunpack.c.l.b16 %v268
      %v565 = vunpack.c.l.b16 %v269
      %v566 = vunpack.c.l.b16 %v270
      %v567 = vunpack.c.l.b16 %v271
      %v568 = vunpack.c.l.b16 %v272
      %v569 = vunpack.c.l.b16 %v273
      %v570 = vunpack.c.l.b16 %v274
      %v571 = vunpack.c.l.b16 %v275
      %v572 = vunpack.c.l.b16 %v276
      %v573 = vunpack.c.l.b16 %v277
      %v574 = vunpack.c.l.b16 %v278
      %v575 = vunpack.c.l.b16 %v279
      %v576 = vunpack.c.l.b16 %v280
      %v577 = vunpack.c.l.b16 %v281
      %v578 = vunpack.c.l.b16 %v282
      %v579 = vunpack.c.l.b16 %v283
      %v580 = vunpack.c.l.b16 %v284
      %v581 = vunpack.c.l.b16 %v285
      %v582 = vunpack.c.l.b16 %v286
      %v583 = vunpack.c.l.b16 %v287
      %v584 = vunpack.c.l.b16 %v288
      %v585 = vunpack.c.l.b16 %v289
      %v586 = vunpack.c.l.b16 %v290
      %v587 = vunpack.c.l.b16 %v291
      %v588 = vunpack.c.l.b16 %v292
      %v589 = vunpack.c.l.b16 %v293
      %v590 = vunpack.c.l.b16 %v294
      %v591 = vunpack.c.l.b16 %v295
      %v592 = vunpack.c.l.b16 %v296
      %v593 = vunpack.c.l.b16 %v297
      %v594 = vunpack.c.l.b16 %v298
      %v595 = vunpack.c.l.b16 %v299
      %v596 = vunpack.c.l.b16 %v300
      %v597 = vunpack.c.l.b16 %v301
      %v598 = vunpack.c.l.b16 %v302
      %v599 = vunpack.c.l.b16 %v303
      %v600 = vunpack.c.l.b16 %v304
      %v601 = vunpack.c.l.b16 %v305
      %v602 = vunpack.c.l.b16 %v306
      %v603 = vunpack.c.l.b16 %v307
      %v604 = vunpack.c.l.b16 %v308
      %v605 = vunpack.c.l.b16 %v309
      %v606 = vunpack.c.l.b16 %v310
      %v607 = vunpack.c.l.b16 %v311
      %v608 = vunpack.c.l.b16 %v312
      %v609 = vunpack.c.l.b16 %v313
      %v610 = vunpack.c.l.b16 %v314
      %v611 = vunpack.c.l.b16 %v315
      %v612 = vunpack.c.l.b16 %v316
      %v613 = vunpack.c.l.b16 %v317
      %v614 = vunpack.c.l.b16 %v318
      %v615 = vunpack.c.l.b16 %v319
      %v616 = vunpack.c.l.b16 %v320
      %v617 = vunpack.c.l.b16 %v321
      %v618 = vunpack.c.l.b16 %v322
      %v619 = vunpack.c.l.b16 %v323
      %v620 = vunpack.c.l.b16 %v324
      %v621 = vunpack.c.l.b16 %v325
      %v622 = vunpack.c.l.b16 %v326
      %v623 = vunpack.c.l.b16 %v327
      %v624 = vunpack.c.l.b16 %v328
      %v625 = vunpack.c.l.b16 %v329
      %v626 = vunpack.c.l.b16 %v330
      %v627 = vunpack.c.l.b16 %v331
      %v628 = vunpack.c.l.b16 %v332
      %v629 = vunpack.c.l.b16 %v333
      %v630 = vunpack.c.l.b16 %v334
      %v631 = vunpack.c.l.b16 %v335
      %v632 = vunpack.c.l.b16 %v336
      %v633 = vunpack.c.l.b16 %v337
      %v634 = vunpack.c.l.b16 %v338
      %v635 = vunpack.c.l.b16 %v339
      %v636 = vunpack.c.l.b16 %v340
      %v637 = vunpack.c.l.b16 %v341
      %v638 = vunpack.c.l.b16 %v342
      %v639 = vunpack.c.l.b16 %v343
      %v640 = vunpack.c.l.b16 %v344
      %v641 = vunpack.c.l.b16 %v345
      %v642 = vunpack.c.l.b16 %v346
      %v643 = vunpack.c.l.b16 %v347
      %v644 = vunpack.c.l.b16 %v348
      %v645 = vunpack.c.l.b16 %v349
      %v646 = vunpack.c.l.b16 %v350
      %v647 = vunpack.c.l.b16 %v351
      %v648 = vunpack.c.l.b16 %v352
      %v649 = vunpack.c.l.b16 %v353
      %v650 = vunpack.c.l.b16 %v354
      %v651 = vunpack.c.l.b16 %v355
      %v652 = vunpack.c.l.b16 %v356
      %v653 = vunpack.c.l.b16 %v357
      %v654 = vunpack.c.l.b16 %v358
      %v655 = vunpack.c.l.b16 %v359
      %v656 = vunpack.c.l.b16 %v360
      %v657 = vunpack.c.l.b16 %v361
      %v658 = vunpack.c.l.b16 %v362
      %v659 = vunpack.c.l.b16 %v363
      %v660 = vunpack.c.l.b16 %v364
      %v661 = vpack.c.b16 %v534, %v533
      %v662 = vpack.c.b16 %v536, %v535
      %v663 = vpack.c.b16 %v538, %v537
      %v664 = vpack.c.b16 %v540, %v539
      %v665 = vpack.c.b16 %v542, %v541
      %v666 = vpack.c.b16 %v544, %v543
      %v667 = vpack.c.b16 %v546, %v545
      %v668 = vpack.c.b16 %v548, %v547
      %v669 = vpack.c.b16 %v550, %v549
      %v670 = vpack.c.b16 %v552, %v551
      %v671 = vpack.c.b16 %v554, %v553
      %v672 = vpack.c.b16 %v556, %v555
      %v673 = vpack.c.b16 %v558, %v557
      %v674 = vpack.c.b16 %v560, %v559
      %v675 = vpack.c.b16 %v562, %v561
      %v676 = vpack.c.b16 %v564, %v563
      %v677 = vpack.c.b16 %v566, %v565
      %v678 = vpack.c.b16 %v568, %v567
      %v679 = vpack.c.b16 %v570, %v569
      %v680 = vpack.c.b16 %v572, %v571
      %v681 = vpack.c.b16 %v574, %v573
      %v682 = vpack.c.b16 %v576, %v575
      %v683 = vpack.c.b16 %v578, %v577
      %v684 = vpack.c.b16 %v580, %v579
      %v685 = vpack.c.b16 %v582, %v581
      %v686 = vpack.c.b16 %v584, %v583
      %v687 = vpack.c.b16 %v586, %v585
      %v688 = vpack.c.b16 %v588, %v587
      %v689 = vpack.c.b16 %v590, %v589
      %v690 = vpack.c.b16 %v592, %v591
      %v691 = vpack.c.b16 %v594, %v593
      %v692 = vpack.c.b16 %v596, %v595
      %v693 = vpack.c.b16 %v598, %v597
      %v694 = vpack.c.b16 %v600, %v599
      %v695 = vpack.c.b16 %v602, %v601
      %v696 = vpack.c.b16 %v604, %v603
      %v697 = vpack.c.b16 %v606, %v605
      %v698 = vpack.c.b16 %v608, %v607
      %v699 = vpack.c.b16 %v610, %v609
      %v700 = vpack.c.b16 %v612, %v611
      %v701 = vpack.c.b16 %v614, %v613
      %v702 = vpack.c.b16 %v616, %v615
      %v703 = vpack.c.b16 %v618, %v617
      %v704 = vpack.c.b16 %v620, %v619
      %v705 = vpack.c.b16 %v622, %v621
      %v706 = vpack.c.b16 %v624, %v623
      %v707 = vpack.c.b16 %v626, %v625
      %v708 = vpack.c.b16 %v628, %v627
      %v709 = vpack.c.b16 %v630, %v629
      %v710 = vpack.c.b16 %v632, %v631
      %v711 = vpack.c.b16 %v634, %v633
      %v712 = vpack.c.b16 %v636, %v635
      %v713 = vpack.c.b16 %v638, %v637
      %v714 = vpack.c.b16 %v640, %v639
      %v715 = vpack.c.b16 %v642, %v641
      %v716 = vpack.c.b16 %v644, %v643
      %v717 = vpack.c.b16 %v646, %v645
      %v718 = vpack.c.b16 %v648, %v647
      %v719 = vpack.c.b16 %v650, %v649
      %v720 = vpack.c.b16 %v652, %v651
      %v721 = vpack.c.b16 %v654, %v653
      %v722 = vpack.c.b16 %v656, %v655
      %v723 = vpack.c.b16 %v658, %v657
      %v724 = vpack.c.b16 %v660, %v659
      %789 = vmatprep.subr.bf16.mxu0 0
      %790 = vmatpush1.bf16.msra.mxu0 %v661
      %791 = vmatprep.subr.bf16.mxu0 0
      %792 = vmatpush1.bf16.msra.mxu0 %v662
      %793 = vmatprep.subr.bf16.mxu0 0
      %794 = vmatpush1.bf16.msra.mxu0 %v663
      %795 = vmatprep.subr.bf16.mxu0 0
      %796 = vmatpush1.bf16.msra.mxu0 %v664
      %797 = vmatprep.subr.bf16.mxu0 0
      %798 = vmatpush1.bf16.msra.mxu0 %v665
      %799 = vmatprep.subr.bf16.mxu0 0
      %800 = vmatpush1.bf16.msra.mxu0 %v666
      %801 = vmatprep.subr.bf16.mxu0 0
      %802 = vmatpush1.bf16.msra.mxu0 %v667
      %803 = vmatprep.subr.bf16.mxu0 0
      %804 = vmatpush1.bf16.msra.mxu0 %v668
      %805 = vmatprep.subr.bf16.mxu0 0
      %806 = vmatpush1.bf16.msra.mxu0 %v669
      %807 = vmatprep.subr.bf16.mxu0 0
      %808 = vmatpush1.bf16.msra.mxu0 %v670
      %809 = vmatprep.subr.bf16.mxu0 0
      %810 = vmatpush1.bf16.msra.mxu0 %v671
      %811 = vmatprep.subr.bf16.mxu0 0
      %812 = vmatpush1.bf16.msra.mxu0 %v672
      %813 = vmatprep.subr.bf16.mxu0 0
      %814 = vmatpush1.bf16.msra.mxu0 %v673
      %815 = vmatprep.subr.bf16.mxu0 0
      %816 = vmatpush1.bf16.msra.mxu0 %v674
      %817 = vmatprep.subr.bf16.mxu0 0
      %818 = vmatpush1.bf16.msra.mxu0 %v675
      %819 = vmatprep.subr.bf16.mxu0 0
      %820 = vmatpush1.bf16.msra.mxu0 %v676
      %821 = vmatprep.mubr.bf16.mxu0 %v390
      %822 = vmatmul.mubr.bf16.gmra.mrb[0].mxu0 %v389
      %v823 = vpop.f32.mrb[0].mxu0
      %v824 = vadd.f32 0.0, %v823
      %v825 = vpop.f32.mrb[0].mxu0
      %v826 = vpop.f32.mrb[0].mxu0
      %v827 = vadd.f32 0.0, %v826
      %v828 = vpop.f32.mrb[0].mxu0
      %829 = vdwg.mxu0
      %830 = vmatprep.subr.bf16.mxu0 0
      %831 = vmatpush1.bf16.msra.mxu0 %v677
      %832 = vmatprep.subr.bf16.mxu0 0
      %833 = vmatpush1.bf16.msra.mxu0 %v678
      %834 = vmatprep.subr.bf16.mxu0 0
      %835 = vmatpush1.bf16.msra.mxu0 %v679
      %836 = vmatprep.subr.bf16.mxu0 0
      %837 = vmatpush1.bf16.msra.mxu0 %v680
      %838 = vmatprep.subr.bf16.mxu0 0
      %839 = vmatpush1.bf16.msra.mxu0 %v681
      %840 = vmatprep.subr.bf16.mxu0 0
      %841 = vmatpush1.bf16.msra.mxu0 %v682
      %842 = vmatprep.subr.bf16.mxu0 0
      %843 = vmatpush1.bf16.msra.mxu0 %v683
      %844 = vmatprep.subr.bf16.mxu0 0
      %845 = vmatpush1.bf16.msra.mxu0 %v684
      %846 = vmatprep.subr.bf16.mxu0 0
      %847 = vmatpush1.bf16.msra.mxu0 %v685
      %848 = vmatprep.subr.bf16.mxu0 0
      %849 = vmatpush1.bf16.msra.mxu0 %v686
      %850 = vmatprep.subr.bf16.mxu0 0
      %851 = vmatpush1.bf16.msra.mxu0 %v687
      %852 = vmatprep.subr.bf16.mxu0 0
      %853 = vmatpush1.bf16.msra.mxu0 %v688
      %854 = vmatprep.subr.bf16.mxu0 0
      %855 = vmatpush1.bf16.msra.mxu0 %v689
      %856 = vmatprep.subr.bf16.mxu0 0
      %857 = vmatpush1.bf16.msra.mxu0 %v690
      %858 = vmatprep.subr.bf16.mxu0 0
      %859 = vmatpush1.bf16.msra.mxu0 %v691
      %860 = vmatprep.subr.bf16.mxu0 0
      %861 = vmatpush1.bf16.msra.mxu0 %v692
      %862 = vmatprep.mubr.bf16.mxu0 %v392
      %863 = vmatmul.mubr.bf16.gmra.mrb[0].mxu0 %v391
      %v864 = vpop.f32.mrb[0].mxu0
      %v865 = vadd.f32 %v824, %v864
      %v866 = vpop.f32.mrb[0].mxu0
      %v867 = vpop.f32.mrb[0].mxu0
      %v868 = vadd.f32 %v827, %v867
      %v869 = vpop.f32.mrb[0].mxu0
      %870 = vdwg.mxu0
      %871 = vmatprep.subr.bf16.mxu0 0
      %872 = vmatpush1.bf16.msra.mxu0 %v693
      %873 = vmatprep.subr.bf16.mxu0 0
      %874 = vmatpush1.bf16.msra.mxu0 %v694
      %875 = vmatprep.subr.bf16.mxu0 0
      %876 = vmatpush1.bf16.msra.mxu0 %v695
      %877 = vmatprep.subr.bf16.mxu0 0
      %878 = vmatpush1.bf16.msra.mxu0 %v696
      %879 = vmatprep.subr.bf16.mxu0 0
      %880 = vmatpush1.bf16.msra.mxu0 %v697
      %881 = vmatprep.subr.bf16.mxu0 0
      %882 = vmatpush1.bf16.msra.mxu0 %v698
      %883 = vmatprep.subr.bf16.mxu0 0
      %884 = vmatpush1.bf16.msra.mxu0 %v699
      %885 = vmatprep.subr.bf16.mxu0 0
      %886 = vmatpush1.bf16.msra.mxu0 %v700
      %887 = vmatprep.subr.bf16.mxu0 0
      %888 = vmatpush1.bf16.msra.mxu0 %v701
      %889 = vmatprep.subr.bf16.mxu0 0
      %890 = vmatpush1.bf16.msra.mxu0 %v702
      %891 = vmatprep.subr.bf16.mxu0 0
      %892 = vmatpush1.bf16.msra.mxu0 %v703
      %893 = vmatprep.subr.bf16.mxu0 0
      %894 = vmatpush1.bf16.msra.mxu0 %v704
      %895 = vmatprep.subr.bf16.mxu0 0
      %896 = vmatpush1.bf16.msra.mxu0 %v705
      %897 = vmatprep.subr.bf16.mxu0 0
      %898 = vmatpush1.bf16.msra.mxu0 %v706
      %899 = vmatprep.subr.bf16.mxu0 0
      %900 = vmatpush1.bf16.msra.mxu0 %v707
      %901 = vmatprep.subr.bf16.mxu0 0
      %902 = vmatpush1.bf16.msra.mxu0 %v708
      %903 = vmatprep.mubr.bf16.mxu0 %v394
      %904 = vmatmul.mubr.bf16.gmra.mrb[0].mxu0 %v393
      %v905 = vpop.f32.mrb[0].mxu0
      %v906 = vadd.f32 %v865, %v905
      %v907 = vpop.f32.mrb[0].mxu0
      %v908 = vpop.f32.mrb[0].mxu0
      %v909 = vadd.f32 %v868, %v908
      %v910 = vpop.f32.mrb[0].mxu0
      %911 = vdwg.mxu0
      %912 = vmatprep.subr.bf16.mxu0 0
      %913 = vmatpush1.bf16.msra.mxu0 %v709
      %914 = vmatprep.subr.bf16.mxu0 0
      %915 = vmatpush1.bf16.msra.mxu0 %v710
      %916 = vmatprep.subr.bf16.mxu0 0
      %917 = vmatpush1.bf16.msra.mxu0 %v711
      %918 = vmatprep.subr.bf16.mxu0 0
      %919 = vmatpush1.bf16.msra.mxu0 %v712
      %920 = vmatprep.subr.bf16.mxu0 0
      %921 = vmatpush1.bf16.msra.mxu0 %v713
      %922 = vmatprep.subr.bf16.mxu0 0
      %923 = vmatpush1.bf16.msra.mxu0 %v714
      %924 = vmatprep.subr.bf16.mxu0 0
      %925 = vmatpush1.bf16.msra.mxu0 %v715
      %926 = vmatprep.subr.bf16.mxu0 0
      %927 = vmatpush1.bf16.msra.mxu0 %v716
      %928 = vmatprep.subr.bf16.mxu0 0
      %929 = vmatpush1.bf16.msra.mxu0 %v717
      %930 = vmatprep.subr.bf16.mxu0 0
      %931 = vmatpush1.bf16.msra.mxu0 %v718
      %932 = vmatprep.subr.bf16.mxu0 0
      %933 = vmatpush1.bf16.msra.mxu0 %v719
      %934 = vmatprep.subr.bf16.mxu0 0
      %935 = vmatpush1.bf16.msra.mxu0 %v720
      %936 = vmatprep.subr.bf16.mxu0 0
      %937 = vmatpush1.bf16.msra.mxu0 %v721
      %938 = vmatprep.subr.bf16.mxu0 0
      %939 = vmatpush1.bf16.msra.mxu0 %v722
      %940 = vmatprep.subr.bf16.mxu0 0
      %941 = vmatpush1.bf16.msra.mxu0 %v723
      %942 = vmatprep.subr.bf16.mxu0 0
      %943 = vmatpush1.bf16.msra.mxu0 %v724
      %944 = vmatprep.mubr.bf16.mxu0 %v396
      %945 = vmatmul.mubr.bf16.gmra.mrb[0].mxu0 %v395
      %v946 = vpop.f32.mrb[0].mxu0
      %v947 = vadd.f32 %v906, %v946
      %v948 = vpop.f32.mrb[0].mxu0
      %v949 = vpop.f32.mrb[0].mxu0
      %v950 = vadd.f32 %v909, %v949
      %v951 = vpop.f32.mrb[0].mxu0
      %952 = vdwg.mxu0
      %v953 = vadd.f32 %v227, %v947
      %v954 = vadd.f32 %v228, %v950
      %955 = vst [vmem:[#allocation2] sm:$0xff] %v953
      %956 = vst [vmem:[#allocation2 + $0x8] sm:$0x1] %v954
      // Predicated region
      $region33: #{_lambda_.8} parent=27 // pred_check
        %p957 = pneg %p221
      $region34: #{_lambda_.8} parent=27 // pred_check_branch
        %959 = sbr.rel (%p957) target = $region36
      $region35: #{_lambda_.8} parent=27 // pred_region
        %v960 = vld [vmem:[#allocation2] sm:$0xff]
        %v961 = vld [vmem:[#allocation2 + $0x8] sm:$0x1]
        %vm962 = vcmask 1040384
        %v963 = vsel %vm962, %v961, 0.0
        %v964 = vadd.f32 %v960, %v963
        %v965 = vrot.slane %v964, 4
        %v966 = vadd.f32 %v964, %v965
        %v967 = vrot.slane %v966, 2
        %v968 = vadd.f32 %v966, %v967
        %v969 = vrot.slane %v968, 1
        %v970 = vadd.f32 %v968, %v969
        %v971 = vmul.f32 %v960, %v960
        %v972 = vmul.f32 %v961, %v961
        %v973 = vsel %vm962, %v972, 0.0
        %v974 = vadd.f32 %v971, %v973
        %v975 = vrot.slane %v974, 4
        %v976 = vadd.f32 %v974, %v975
        %v977 = vrot.slane %v976, 2
        %v978 = vadd.f32 %v976, %v977
        %v979 = vrot.slane %v978, 1
        %v980 = vadd.f32 %v978, %v979
        %v981 = vmul.f32 %v970, 0.11111111
        %v982 = vmul.f32 %v980, 0.11111111
        %v983 = vmul.f32 %v981, %v981
        %v984 = vsub.f32 %v982, %v983
        %v985 = vmax.f32 %v984, 0.0
        %v986 = vsub.f32 %v960, %v981
        %v987 = vsub.f32 %v961, %v981
        %v988 = vadd.f32 %v985, 1e-05
        %v989 = vrsqrt.pop %v988
        %v990 = vmul.f32 %v986, %v989
        %v991 = vmul.f32 %v987, %v989
        %vm992 = vcmp.gt.f32.partialorder %v990, 0.0
        %vm993 = vcmp.gt.f32.partialorder %v991, 0.0
        %v994 = vmul.f32 %v990, 0.2
        %v995 = vmul.f32 %v991, 0.2
        %v996 = vsel %vm992, %v990, %v994
        %v997 = vsel %vm993, %v991, %v995
        %v998 = vpack.c.bf16 %v997, %v996
        %v1000 = vunpack.c.l.b16 %v998
        %v1001 = vunpack.c.h.b16 %v998
        %v1002 = vpack.c.b16 %v1000, %v1000
        %v1003 = vpack.c.b16 %v1001, %v1001
        %1006 = vst [vmem:[%s219] sm:$0xf] %v1002
        %vm1007 = vcmask 1040384
        %vm1008 = vsmask.f32 256
        %vm1009 = vmand %vm1007, %vm1008
        %v1010 = vld [vmem:[%s219 + $0x4] sm:$0x1]
        %v1011 = vsel %vm1009, %v1003, %v1010
        %1012 = vst [vmem:[%s219 + $0x4] sm:$0x1] %v1011
      $region36: #{_lambda_.8} parent=27 // pred_fallthru
        _
      %p1013 = scmp.lt.s32.totalorder %s18, 1
      %s1014 = scalar_select %p1013, %s18, 1
      %p1015 = scmp.lt.s32.totalorder %s19, 0
      %s1016 = scalar_select %p1015, %s19, 0
      %s1017 = smul.addr %s1014, 2
      %s1018 = sadd.s32 %s1016, %s1017
      %s1019 = smul.addr %s1018, 4
      %s1020 = scalar_lea.vmem %s2, %s1019
      // Predicated region
      $region37: #{_lambda_.8} parent=27 // pred_check
        %p1021 = pneg %p108
      $region38: #{_lambda_.8} parent=27 // pred_check_branch
        %1023 = sbr.rel (%p1021) target = $region40
      $region39: #{_lambda_.8} parent=27 // pred_region
        _
      $region40: #{_lambda_.8} parent=27 // pred_fallthru
        _
    $region28: #{_lambda_.8} parent=5 // pred_fallthru
      _
    %p1024 = scmp.le.s32.totalorder 2, %s8
    // Predicated region
    $region41: #{_lambda_.8} parent=5 // pred_check
      %p1025 = pneg %p1024
    $region42: #{_lambda_.8} parent=5 // pred_check_branch
      %1027 = sbr.rel (%p1025) target = $region44
    $region43: #{_lambda_.8} parent=5 // pred_region
      %s1028 = ssub.s32 %s8, 2
      // Predicated region
      $region45: #{_lambda_.8} parent=43 // pred_check
        %p1029 = pneg %p114
      $region46: #{_lambda_.8} parent=43 // pred_check_branch
        %1031 = sbr.rel (%p1029) target = $region48
      $region47: #{_lambda_.8} parent=43 // pred_region
        %p1032 = scmp.lt.s32.totalorder %s21, 1
        %s1033 = scalar_select %p1032, %s21, 1
        %p1034 = scmp.lt.s32.totalorder %s22, 0
        %s1035 = scalar_select %p1034, %s22, 0
        %s1036 = smul.addr %s1033, 2
        %s1037 = sadd.s32 %s1035, %s1036
        %s1038 = smul.addr %s1037, 4
        %s1039 = scalar_lea.vmem %s2, %s1038
      $region48: #{_lambda_.8} parent=43 // pred_fallthru
        _
    $region44: #{_lambda_.8} parent=5 // pred_fallthru
      _
  $region6: #{_lambda_.8} parent=0 // loop_footer
    %s12 = sadd.s32 1, %s8
  $region7: #{_lambda_.8} parent=0 // loop_footer_branch
    %7 = sbr.rel target = $region3
  $region8: #{_lambda_.8} parent=0 // loop_exit
    _

// kernel: _lambda_.9
$region0: #{_lambda_.9}
  #allocation0 [shape = 'u32[]', space=smem, size = 0x4, offset = 0x4, fixed_abs, tag = 'smem constant byte address 0x4 - core index']
  #allocation1 [shape = 'u32[144,128]{1,0:T(1,128)}', space=vmem, size = 0x12000, scoped, tag = 'internal scratch']
  #allocation2 [shape = 'f32[4,128]{1,0:T(4,128)}', space=vmem, size = 0x800, scoped, tag = 'scratch operand']
  %s0 = inlined_call_operand.vmem [shape: bf16[2,4,2048], index: 0, kind: input, shape index: {}]
  %s1 = inlined_call_operand.vmem [shape: bf16[2048,128], index: 1, kind: input, shape index: {}]
  %s2 = inlined_call_operand.vmem [shape: f32[1,128], index: 2, kind: input, shape index: {}]
  %s3 = inlined_call_operand.vmem [shape: f32[2,4,128], index: 3, kind: output, shape index: {}]
  %s4 = sld [smem:[#allocation0]]
  $region53: #{_lambda_.9} parent=0
    _
  %s6 = ssub.s32 1, %s4
  %s7 = scalar_select 0, %s6, %s4
  loop: start=0, step=1, limit=4
  $region2: #{_lambda_.9} parent=0 // loop_pre_header
    _
  $region3: #{_lambda_.9} parent=0 // loop_header
    %s9 = sphi 0, %s13
    %p10 = scmp.ge.s32.totalorder %s9, 4
    %s16 = sphi 0, %s35
    %s17 = sphi 0, %s31
    %s18 = sphi 0, %s27
    %s19 = sphi 0, %s16
    %s20 = sphi 0, %s17
    %s21 = sphi 0, %s18
    %s22 = sphi 0, %s19
    %s23 = sphi 0, %s20
    %s24 = sphi 0, %s21
    %s40 = sphi 0, %s42
    %s43 = sphi 0, %s40
    %s44 = sphi 0, %s43
    %s60 = sphi 0, %s44
    %s68 = sphi 0, %s70
    %s71 = sphi 0, %s68
    %s72 = sphi 0, %s71
    %s88 = sphi 0, %s72
    %s94 = sphi 0, %s96
    %s97 = sphi 0, %s94
    %s98 = sphi 0, %s97
    %s114 = sphi 0, %s98
    %s122 = sphi 0, %s124
    %s125 = sphi 0, %s122
    %s126 = sphi 0, %s125
    %s142 = sphi 0, %s126
  $region4: #{_lambda_.9} parent=0 // loop_header_branch
    %12 = sbr.rel (%p10) target = $region8
  $region5: #{_lambda_.9} parent=0 // loop_body
    %s14 = ssub.s32 %s9, 1
    %s15 = ssub.s32 %s9, 2
    %s25 = sadd.s32 1, %s18
    %p26 = scmp.ge.s32.totalorder %s25, 1
    %s27 = scalar_select %p26, 0, %s25
    %s28 = sadd.s32 1, %s17
    %s29 = scalar_select %p26, %s28, %s17
    %p30 = scmp.ge.s32.totalorder %s29, 1
    %s31 = scalar_select %p30, 0, %s29
    %s32 = sadd.s32 1, %s16
    %s33 = scalar_select %p30, %s32, %s16
    %p34 = scmp.ge.s32.totalorder %s33, 2
    %s35 = scalar_select %p34, 0, %s33
    %s36 = ssub.s32 %s16, %s35
    %s37 = ssub.s32 %s18, %s27
    %s38 = sor.u32 %s36, %s37
    %p39 = scmp.eq.s32.totalorder %s38, 0
    %s41 = sadd.s32 %s40, 1
    %s42 = scalar_select %p39, %s40, %s41
    %p45 = pneg %p39
    %p46 = scmp.eq.s32.totalorder %s9, 1
    %p47 = por %p45, %p46
    %p48 = scmp.ne.s32.totalorder %s40, %s43
    %p49 = scmp.eq.s32.totalorder %s9, 0
    %p50 = por %p48, %p49
    %p51 = scmp.ne.s32.totalorder %s40, %s43
    %p52 = scmp.eq.s32.totalorder %s14, 1
    %p53 = por %p51, %p52
    %p54 = scmp.ne.s32.totalorder %s43, %s44
    %p55 = scmp.eq.s32.totalorder %s14, 0
    %p56 = por %p54, %p55
    %p57 = scmp.ne.s32.totalorder %s43, %s44
    %p58 = scmp.eq.s32.totalorder %s15, 1
    %p59 = por %p57, %p58
    %p61 = scmp.ne.s32.totalorder %s44, %s60
    %p62 = scmp.eq.s32.totalorder %s15, 0
    %p63 = por %p61, %p62
    %s64 = ssub.s32 %s18, %s27
    %s65 = ssub.s32 %s17, %s31
    %s66 = sor.u32 %s64, %s65
    %p67 = scmp.eq.s32.totalorder %s66, 0
    %s69 = sadd.s32 %s68, 1
    %s70 = scalar_select %p67, %s68, %s69
    %p73 = pneg %p67
    %p74 = scmp.eq.s32.totalorder %s9, 1
    %p75 = por %p73, %p74
    %p76 = scmp.ne.s32.totalorder %s68, %s71
    %p77 = scmp.eq.s32.totalorder %s9, 0
    %p78 = por %p76, %p77
    %p79 = scmp.ne.s32.totalorder %s68, %s71
    %p80 = scmp.eq.s32.totalorder %s14, 1
    %p81 = por %p79, %p80
    %p82 = scmp.ne.s32.totalorder %s71, %s72
    %p83 = scmp.eq.s32.totalorder %s14, 0
    %p84 = por %p82, %p83
    %p85 = scmp.ne.s32.totalorder %s71, %s72
    %p86 = scmp.eq.s32.totalorder %s15, 1
    %p87 = por %p85, %p86
    %p89 = scmp.ne.s32.totalorder %s72, %s88
    %p90 = scmp.eq.s32.totalorder %s15, 0
    %p91 = por %p89, %p90
    %s92 = ssub.s32 %s17, %s31
    %p93 = scmp.eq.s32.totalorder %s92, 0
    %s95 = sadd.s32 %s94, 1
    %s96 = scalar_select %p93, %s94, %s95
    %p99 = pneg %p93
    %p100 = scmp.eq.s32.totalorder %s9, 1
    %p101 = por %p99, %p100
    %p102 = scmp.ne.s32.totalorder %s94, %s97
    %p103 = scmp.eq.s32.totalorder %s9, 0
    %p104 = por %p102, %p103
    %p105 = scmp.ne.s32.totalorder %s94, %s97
    %p106 = scmp.eq.s32.totalorder %s14, 1
    %p107 = por %p105, %p106
    %p108 = scmp.ne.s32.totalorder %s97, %s98
    %p109 = scmp.eq.s32.totalorder %s14, 0
    %p110 = por %p108, %p109
    %p111 = scmp.ne.s32.totalorder %s97, %s98
    %p112 = scmp.eq.s32.totalorder %s15, 1
    %p113 = por %p111, %p112
    %p115 = scmp.ne.s32.totalorder %s98, %s114
    %p116 = scmp.eq.s32.totalorder %s15, 0
    %p117 = por %p115, %p116
    %s118 = ssub.s32 %s16, %s35
    %s119 = ssub.s32 %s17, %s31
    %s120 = sor.u32 %s118, %s119
    %p121 = scmp.eq.s32.totalorder %s120, 0
    %s123 = sadd.s32 %s122, 1
    %s124 = scalar_select %p121, %s122, %s123
    %p127 = pneg %p121
    %p128 = scmp.eq.s32.totalorder %s9, 1
    %p129 = por %p127, %p128
    %p130 = scmp.ne.s32.totalorder %s122, %s125
    %p131 = scmp.eq.s32.totalorder %s9, 0
    %p132 = por %p130, %p131
    %p133 = scmp.ne.s32.totalorder %s122, %s125
    %p134 = scmp.eq.s32.totalorder %s14, 1
    %p135 = por %p133, %p134
    %p136 = scmp.ne.s32.totalorder %s125, %s126
    %p137 = scmp.eq.s32.totalorder %s14, 0
    %p138 = por %p136, %p137
    %p139 = scmp.ne.s32.totalorder %s125, %s126
    %p140 = scmp.eq.s32.totalorder %s15, 1
    %p141 = por %p139, %p140
    %p143 = scmp.ne.s32.totalorder %s126, %s142
    %p144 = scmp.eq.s32.totalorder %s15, 0
    %p145 = por %p143, %p144
    %p146 = scmp.le.s32.totalorder 1, %s9
    %p147 = scmp.lt.s32.totalorder %s9, 3
    %p148 = pnand %p146, %p147
    %p149 = pneg %p148
    // Predicated region
    $region9: #{_lambda_.9} parent=5 // pred_check
      _
    $region10: #{_lambda_.9} parent=5 // pred_check_branch
      %151 = sbr.rel (%p148) target = $region12
    $region11: #{_lambda_.9} parent=5 // pred_region
      %s152 = ssub.s32 %s9, 1
      // Predicated region
      $region13: #{_lambda_.9} parent=11 // pred_check
        %p153 = pneg %p84
      $region14: #{_lambda_.9} parent=11 // pred_check_branch
        %155 = sbr.rel (%p153) target = $region16
      $region15: #{_lambda_.9} parent=11 // pred_region
        %s156 = smul.u32 256, %s21
        %p157 = scmp.lt.s32.totalorder %s156, 255
        %s158 = scalar_select %p157, %s156, 255
        %p159 = scmp.lt.s32.totalorder %s20, 0
        %s160 = scalar_select %p159, %s20, 0
        %s161 = sadd.s32 %s160, %s158
        %s162 = smul.addr %s161, 4
        %s163 = scalar_lea.vmem %s1, %s162
        %s164 = smul.u32 256, %s21
      $region16: #{_lambda_.9} parent=11 // pred_fallthru
        _
      // Predicated region
      $region17: #{_lambda_.9} parent=11 // pred_check
        %p165 = pneg %p110
      $region18: #{_lambda_.9} parent=11 // pred_check_branch
        %167 = sbr.rel (%p165) target = $region20
      $region19: #{_lambda_.9} parent=11 // pred_region
        %p168 = scmp.lt.s32.totalorder %s20, 0
        %s169 = scalar_select %p168, %s20, 0
        %s170 = scalar_lea.vmem %s2, %s169
      $region20: #{_lambda_.9} parent=11 // pred_fallthru
        _
    $region12: #{_lambda_.9} parent=5 // pred_fallthru
      _
    %p171 = scmp.lt.s32.totalorder %s9, 2
    // Predicated region
    $region21: #{_lambda_.9} parent=5 // pred_check
      %p172 = pneg %p171
    $region22: #{_lambda_.9} parent=5 // pred_check_branch
      %174 = sbr.rel (%p172) target = $region24
    $region23: #{_lambda_.9} parent=5 // pred_region
      // Predicated region
      $region25: #{_lambda_.9} parent=23 // pred_check
        %p175 = pneg %p50
      $region26: #{_lambda_.9} parent=23 // pred_check_branch
        %177 = sbr.rel (%p175) target = $region28
      $region27: #{_lambda_.9} parent=23 // pred_region
        %s178 = smul.u32 16, %s18
        %p179 = scmp.lt.s32.totalorder %s16, 1
        %s180 = scalar_select %p179, %s16, 1
        %p181 = scmp.lt.s32.totalorder %s178, 15
        %s182 = scalar_select %p181, %s178, 15
        %s183 = smul.addr %s180, 16
        %s184 = sadd.s32 %s182, %s183
        %s185 = smul.addr %s184, 2
        %s186 = scalar_lea.vmem %s0, %s185
        %s187 = smul.u32 16, %s18
      $region28: #{_lambda_.9} parent=23 // pred_fallthru
        _
    $region24: #{_lambda_.9} parent=5 // pred_fallthru
      _
    %p188 = scmp.le.s32.totalorder 1, %s9
    %p189 = scmp.lt.s32.totalorder %s9, 3
    %p190 = pnand %p188, %p189
    %p191 = pneg %p190
    // Predicated region
    $region29: #{_lambda_.9} parent=5 // pred_check
      _
    $region30: #{_lambda_.9} parent=5 // pred_check_branch
      %193 = sbr.rel (%p190) target = $region32
    $region31: #{_lambda_.9} parent=5 // pred_region
      %s194 = ssub.s32 %s9, 1
      %s195 = smul.u32 16, %s21
      %p196 = scmp.lt.s32.totalorder %s19, 1
      %s197 = scalar_select %p196, %s19, 1
      %p198 = scmp.lt.s32.totalorder %s195, 15
      %s199 = scalar_select %p198, %s195, 15
      %s200 = smul.addr %s197, 16
      %s201 = sadd.s32 %s199, %s200
      %s202 = smul.addr %s201, 2
      %s203 = scalar_lea.vmem %s0, %s202
      %p204 = pneg %p56
      %p205 = pneg %p53
      %s206 = smul.u32 256, %s21
      %p207 = scmp.lt.s32.totalorder %s206, 255
      %s208 = scalar_select %p207, %s206, 255
      %p209 = scmp.lt.s32.totalorder %s20, 0
      %s210 = scalar_select %p209, %s20, 0
      %s211 = sadd.s32 %s210, %s208
      %s212 = smul.addr %s211, 4
      %s213 = scalar_lea.vmem %s1, %s212
      %p214 = pneg %p84
      %p215 = pneg %p81
      %p216 = scmp.lt.s32.totalorder %s20, 0
      %s217 = scalar_select %p216, %s20, 0
      %s218 = scalar_lea.vmem %s2, %s217
      %p219 = pneg %p110
      %p220 = pneg %p107
      %p221 = pneg %p138
      %p222 = pneg %p135
      %p223 = scmp.lt.s32.totalorder %s19, 1
      %s224 = scalar_select %p223, %s19, 1
      %p225 = scmp.lt.s32.totalorder %s20, 0
      %s226 = scalar_select %p225, %s20, 0
      %s227 = sadd.s32 %s226, %s224
      %s228 = smul.addr %s227, 4
      %s229 = scalar_lea.vmem %s3, %s228
      %s230 = smul.u32 16, %s21
      %p231 = scmp.lt.s32.totalorder %s19, 1
      %s232 = scalar_select %p231, %s19, 1
      %p233 = scmp.lt.s32.totalorder %s230, 15
      %s234 = scalar_select %p233, %s230, 15
      %s235 = smul.addr %s232, 16
      %s236 = sadd.s32 %s234, %s235
      %s237 = smul.addr %s236, 2
      %s238 = scalar_lea.vmem %s0, %s237
      %s239 = smul.u32 16, %s21
      %s240 = smul.u32 256, %s21
      %p241 = scmp.lt.s32.totalorder %s240, 255
      %s242 = scalar_select %p241, %s240, 255
      %p243 = scmp.lt.s32.totalorder %s20, 0
      %s244 = scalar_select %p243, %s20, 0
      %s245 = sadd.s32 %s244, %s242
      %s246 = smul.addr %s245, 4
      %s247 = scalar_lea.vmem %s1, %s246
      %s248 = smul.u32 256, %s21
      %p249 = scmp.lt.s32.totalorder %s20, 0
      %s250 = scalar_select %p249, %s20, 0
      %s251 = scalar_lea.vmem %s2, %s250
      %p252 = scmp.lt.s32.totalorder %s19, 1
      %s253 = scalar_select %p252, %s19, 1
      %p254 = scmp.lt.s32.totalorder %s20, 0
      %s255 = scalar_select %p254, %s20, 0
      %s256 = sadd.s32 %s255, %s253
      %s257 = smul.addr %s256, 4
      %s258 = scalar_lea.vmem %s3, %s257
      %p260 = scmp.eq.s32.totalorder %s21, 0
      // Predicated region
      $region33: #{_lambda_.9} parent=31 // pred_check
        %p261 = pneg %p260
      $region34: #{_lambda_.9} parent=31 // pred_check_branch
        %263 = sbr.rel (%p261) target = $region36
      $region35: #{_lambda_.9} parent=31 // pred_region
        %264 = vst [vmem:[#allocation2] sm:$0xf] 0.0
      $region36: #{_lambda_.9} parent=31 // pred_fallthru
        _
      %v265 = vld [vmem:[#allocation2] sm:$0xf]
      %v266 = vld [vmem:[%s238] sm:$0xff]
      %v267 = vld [vmem:[%s238 + $0x8] sm:$0xff]
      %v268 = vld [vmem:[%s238 + $0x10] sm:$0xff]
      %v269 = vld [vmem:[%s238 + $0x18] sm:$0xff]
      %v270 = vld [vmem:[%s247] sm:$0xf]
      %v271 = vld [vmem:[%s247 + $0x4] sm:$0xf]
      %v272 = vld [vmem:[%s247 + $0x8] sm:$0xf]
      %v273 = vld [vmem:[%s247 + $0xc] sm:$0xf]
      %v274 = vld [vmem:[%s247 + $0x10] sm:$0xf]
      %v275 = vld [vmem:[%s247 + $0x14] sm:$0xf]
      %v276 = vld [vmem:[%s247 + $0x18] sm:$0xf]
      %v277 = vld [vmem:[%s247 + $0x1c] sm:$0xf]
      %v278 = vld [vmem:[%s247 + $0x20] sm:$0xf]
      %v279 = vld [vmem:[%s247 + $0x24] sm:$0xf]
      %v280 = vld [vmem:[%s247 + $0x28] sm:$0xf]
      %v281 = vld [vmem:[%s247 + $0x2c] sm:$0xf]
      %v282 = vld [vmem:[%s247 + $0x30] sm:$0xf]
      %v283 = vld [vmem:[%s247 + $0x34] sm:$0xf]
      %v284 = vld [vmem:[%s247 + $0x38] sm:$0xf]
      %v285 = vld [vmem:[%s247 + $0x3c] sm:$0xf]
      %v286 = vld [vmem:[%s247 + $0x40] sm:$0xf]
      %v287 = vld [vmem:[%s247 + $0x44] sm:$0xf]
      %v288 = vld [vmem:[%s247 + $0x48] sm:$0xf]
      %v289 = vld [vmem:[%s247 + $0x4c] sm:$0xf]
      %v290 = vld [vmem:[%s247 + $0x50] sm:$0xf]
      %v291 = vld [vmem:[%s247 + $0x54] sm:$0xf]
      %v292 = vld [vmem:[%s247 + $0x58] sm:$0xf]
      %v293 = vld [vmem:[%s247 + $0x5c] sm:$0xf]
      %v294 = vld [vmem:[%s247 + $0x60] sm:$0xf]
      %v295 = vld [vmem:[%s247 + $0x64] sm:$0xf]
      %v296 = vld [vmem:[%s247 + $0x68] sm:$0xf]
      %v297 = vld [vmem:[%s247 + $0x6c] sm:$0xf]
      %v298 = vld [vmem:[%s247 + $0x70] sm:$0xf]
      %v299 = vld [vmem:[%s247 + $0x74] sm:$0xf]
      %v300 = vld [vmem:[%s247 + $0x78] sm:$0xf]
      %v301 = vld [vmem:[%s247 + $0x7c] sm:$0xf]
      %v302 = vld [vmem:[%s247 + $0x80] sm:$0xf]
      %v303 = vld [vmem:[%s247 + $0x84] sm:$0xf]
      %v304 = vld [vmem:[%s247 + $0x88] sm:$0xf]
      %v305 = vld [vmem:[%s247 + $0x8c] sm:$0xf]
      %v306 = vld [vmem:[%s247 + $0x90] sm:$0xf]
      %v307 = vld [vmem:[%s247 + $0x94] sm:$0xf]
      %v308 = vld [vmem:[%s247 + $0x98] sm:$0xf]
      %v309 = vld [vmem:[%s247 + $0x9c] sm:$0xf]
      %v310 = vld [vmem:[%s247 + $0xa0] sm:$0xf]
      %v311 = vld [vmem:[%s247 + $0xa4] sm:$0xf]
      %v312 = vld [vmem:[%s247 + $0xa8] sm:$0xf]
      %v313 = vld [vmem:[%s247 + $0xac] sm:$0xf]
      %v314 = vld [vmem:[%s247 + $0xb0] sm:$0xf]
      %v315 = vld [vmem:[%s247 + $0xb4] sm:$0xf]
      %v316 = vld [vmem:[%s247 + $0xb8] sm:$0xf]
      %v317 = vld [vmem:[%s247 + $0xbc] sm:$0xf]
      %v318 = vld [vmem:[%s247 + $0xc0] sm:$0xf]
      %v319 = vld [vmem:[%s247 + $0xc4] sm:$0xf]
      %v320 = vld [vmem:[%s247 + $0xc8] sm:$0xf]
      %v321 = vld [vmem:[%s247 + $0xcc] sm:$0xf]
      %v322 = vld [vmem:[%s247 + $0xd0] sm:$0xf]
      %v323 = vld [vmem:[%s247 + $0xd4] sm:$0xf]
      %v324 = vld [vmem:[%s247 + $0xd8] sm:$0xf]
      %v325 = vld [vmem:[%s247 + $0xdc] sm:$0xf]
      %v326 = vld [vmem:[%s247 + $0xe0] sm:$0xf]
      %v327 = vld [vmem:[%s247 + $0xe4] sm:$0xf]
      %v328 = vld [vmem:[%s247 + $0xe8] sm:$0xf]
      %v329 = vld [vmem:[%s247 + $0xec] sm:$0xf]
      %v330 = vld [vmem:[%s247 + $0xf0] sm:$0xf]
      %v331 = vld [vmem:[%s247 + $0xf4] sm:$0xf]
      %v332 = vld [vmem:[%s247 + $0xf8] sm:$0xf]
      %v333 = vld [vmem:[%s247 + $0xfc] sm:$0xf]
      %v334 = vld [vmem:[%s247 + $0x100] sm:$0xf]
      %v335 = vld [vmem:[%s247 + $0x104] sm:$0xf]
      %v336 = vld [vmem:[%s247 + $0x108] sm:$0xf]
      %v337 = vld [vmem:[%s247 + $0x10c] sm:$0xf]
      %v338 = vld [vmem:[%s247 + $0x110] sm:$0xf]
      %v339 = vld [vmem:[%s247 + $0x114] sm:$0xf]
      %v340 = vld [vmem:[%s247 + $0x118] sm:$0xf]
      %v341 = vld [vmem:[%s247 + $0x11c] sm:$0xf]
      %v342 = vld [vmem:[%s247 + $0x120] sm:$0xf]
      %v343 = vld [vmem:[%s247 + $0x124] sm:$0xf]
      %v344 = vld [vmem:[%s247 + $0x128] sm:$0xf]
      %v345 = vld [vmem:[%s247 + $0x12c] sm:$0xf]
      %v346 = vld [vmem:[%s247 + $0x130] sm:$0xf]
      %v347 = vld [vmem:[%s247 + $0x134] sm:$0xf]
      %v348 = vld [vmem:[%s247 + $0x138] sm:$0xf]
      %v349 = vld [vmem:[%s247 + $0x13c] sm:$0xf]
      %v350 = vld [vmem:[%s247 + $0x140] sm:$0xf]
      %v351 = vld [vmem:[%s247 + $0x144] sm:$0xf]
      %v352 = vld [vmem:[%s247 + $0x148] sm:$0xf]
      %v353 = vld [vmem:[%s247 + $0x14c] sm:$0xf]
      %v354 = vld [vmem:[%s247 + $0x150] sm:$0xf]
      %v355 = vld [vmem:[%s247 + $0x154] sm:$0xf]
      %v356 = vld [vmem:[%s247 + $0x158] sm:$0xf]
      %v357 = vld [vmem:[%s247 + $0x15c] sm:$0xf]
      %v358 = vld [vmem:[%s247 + $0x160] sm:$0xf]
      %v359 = vld [vmem:[%s247 + $0x164] sm:$0xf]
      %v360 = vld [vmem:[%s247 + $0x168] sm:$0xf]
      %v361 = vld [vmem:[%s247 + $0x16c] sm:$0xf]
      %v362 = vld [vmem:[%s247 + $0x170] sm:$0xf]
      %v363 = vld [vmem:[%s247 + $0x174] sm:$0xf]
      %v364 = vld [vmem:[%s247 + $0x178] sm:$0xf]
      %v365 = vld [vmem:[%s247 + $0x17c] sm:$0xf]
      %v366 = vld [vmem:[%s247 + $0x180] sm:$0xf]
      %v367 = vld [vmem:[%s247 + $0x184] sm:$0xf]
      %v368 = vld [vmem:[%s247 + $0x188] sm:$0xf]
      %v369 = vld [vmem:[%s247 + $0x18c] sm:$0xf]
      %v370 = vld [vmem:[%s247 + $0x190] sm:$0xf]
      %v371 = vld [vmem:[%s247 + $0x194] sm:$0xf]
      %v372 = vld [vmem:[%s247 + $0x198] sm:$0xf]
      %v373 = vld [vmem:[%s247 + $0x19c] sm:$0xf]
      %v374 = vld [vmem:[%s247 + $0x1a0] sm:$0xf]
      %v375 = vld [vmem:[%s247 + $0x1a4] sm:$0xf]
      %v376 = vld [vmem:[%s247 + $0x1a8] sm:$0xf]
      %v377 = vld [vmem:[%s247 + $0x1ac] sm:$0xf]
      %v378 = vld [vmem:[%s247 + $0x1b0] sm:$0xf]
      %v379 = vld [vmem:[%s247 + $0x1b4] sm:$0xf]
      %v380 = vld [vmem:[%s247 + $0x1b8] sm:$0xf]
      %v381 = vld [vmem:[%s247 + $0x1bc] sm:$0xf]
      %v382 = vld [vmem:[%s247 + $0x1c0] sm:$0xf]
      %v383 = vld [vmem:[%s247 + $0x1c4] sm:$0xf]
      %v384 = vld [vmem:[%s247 + $0x1c8] sm:$0xf]
      %v385 = vld [vmem:[%s247 + $0x1cc] sm:$0xf]
      %v386 = vld [vmem:[%s247 + $0x1d0] sm:$0xf]
      %v387 = vld [vmem:[%s247 + $0x1d4] sm:$0xf]
      %v388 = vld [vmem:[%s247 + $0x1d8] sm:$0xf]
      %v389 = vld [vmem:[%s247 + $0x1dc] sm:$0xf]
      %v390 = vld [vmem:[%s247 + $0x1e0] sm:$0xf]
      %v391 = vld [vmem:[%s247 + $0x1e4] sm:$0xf]
      %v392 = vld [vmem:[%s247 + $0x1e8] sm:$0xf]
      %v393 = vld [vmem:[%s247 + $0x1ec] sm:$0xf]
      %v394 = vld [vmem:[%s247 + $0x1f0] sm:$0xf]
      %v395 = vld [vmem:[%s247 + $0x1f4] sm:$0xf]
      %v396 = vld [vmem:[%s247 + $0x1f8] sm:$0xf]
      %v397 = vld [vmem:[%s247 + $0x1fc] sm:$0xf]
      %v398 = vld [vmem:[%s247 + $0x200] sm:$0xf]
      %v399 = vld [vmem:[%s247 + $0x204] sm:$0xf]
      %v400 = vld [vmem:[%s247 + $0x208] sm:$0xf]
      %v401 = vld [vmem:[%s247 + $0x20c] sm:$0xf]
      %v402 = vld [vmem:[%s247 + $0x210] sm:$0xf]
      %v403 = vld [vmem:[%s247 + $0x214] sm:$0xf]
      %v404 = vld [vmem:[%s247 + $0x218] sm:$0xf]
      %v405 = vld [vmem:[%s247 + $0x21c] sm:$0xf]
      %v406 = vld [vmem:[%s247 + $0x220] sm:$0xf]
      %v407 = vld [vmem:[%s247 + $0x224] sm:$0xf]
      %v408 = vld [vmem:[%s247 + $0x228] sm:$0xf]
      %v409 = vld [vmem:[%s247 + $0x22c] sm:$0xf]
      %v410 = vld [vmem:[%s247 + $0x230] sm:$0xf]
      %v411 = vld [vmem:[%s247 + $0x234] sm:$0xf]
      %v412 = vld [vmem:[%s247 + $0x238] sm:$0xf]
      %v413 = vld [vmem:[%s247 + $0x23c] sm:$0xf]
      %v414 = vld [vmem:[%s247 + $0x240] sm:$0xf]
      %v415 = vld [vmem:[%s247 + $0x244] sm:$0xf]
      %v416 = vld [vmem:[%s247 + $0x248] sm:$0xf]
      %v417 = vld [vmem:[%s247 + $0x24c] sm:$0xf]
      %v418 = vld [vmem:[%s247 + $0x250] sm:$0xf]
      %v419 = vld [vmem:[%s247 + $0x254] sm:$0xf]
      %v420 = vld [vmem:[%s247 + $0x258] sm:$0xf]
      %v421 = vld [vmem:[%s247 + $0x25c] sm:$0xf]
      %v422 = vld [vmem:[%s247 + $0x260] sm:$0xf]
      %v423 = vld [vmem:[%s247 + $0x264] sm:$0xf]
      %v424 = vld [vmem:[%s247 + $0x268] sm:$0xf]
      %v425 = vld [vmem:[%s247 + $0x26c] sm:$0xf]
      %v426 = vld [vmem:[%s247 + $0x270] sm:$0xf]
      %v427 = vld [vmem:[%s247 + $0x274] sm:$0xf]
      %v428 = vld [vmem:[%s247 + $0x278] sm:$0xf]
      %v429 = vld [vmem:[%s247 + $0x27c] sm:$0xf]
      %v430 = vld [vmem:[%s247 + $0x280] sm:$0xf]
      %v431 = vld [vmem:[%s247 + $0x284] sm:$0xf]
      %v432 = vld [vmem:[%s247 + $0x288] sm:$0xf]
      %v433 = vld [vmem:[%s247 + $0x28c] sm:$0xf]
      %v434 = vld [vmem:[%s247 + $0x290] sm:$0xf]
      %v435 = vld [vmem:[%s247 + $0x294] sm:$0xf]
      %v436 = vld [vmem:[%s247 + $0x298] sm:$0xf]
      %v437 = vld [vmem:[%s247 + $0x29c] sm:$0xf]
      %v438 = vld [vmem:[%s247 + $0x2a0] sm:$0xf]
      %v439 = vld [vmem:[%s247 + $0x2a4] sm:$0xf]
      %v440 = vld [vmem:[%s247 + $0x2a8] sm:$0xf]
      %v441 = vld [vmem:[%s247 + $0x2ac] sm:$0xf]
      %v442 = vld [vmem:[%s247 + $0x2b0] sm:$0xf]
      %v443 = vld [vmem:[%s247 + $0x2b4] sm:$0xf]
      %v444 = vld [vmem:[%s247 + $0x2b8] sm:$0xf]
      %v445 = vld [vmem:[%s247 + $0x2bc] sm:$0xf]
      %v446 = vld [vmem:[%s247 + $0x2c0] sm:$0xf]
      %v447 = vld [vmem:[%s247 + $0x2c4] sm:$0xf]
      %v448 = vld [vmem:[%s247 + $0x2c8] sm:$0xf]
      %v449 = vld [vmem:[%s247 + $0x2cc] sm:$0xf]
      %v450 = vld [vmem:[%s247 + $0x2d0] sm:$0xf]
      %v451 = vld [vmem:[%s247 + $0x2d4] sm:$0xf]
      %v452 = vld [vmem:[%s247 + $0x2d8] sm:$0xf]
      %v453 = vld [vmem:[%s247 + $0x2dc] sm:$0xf]
      %v454 = vld [vmem:[%s247 + $0x2e0] sm:$0xf]
      %v455 = vld [vmem:[%s247 + $0x2e4] sm:$0xf]
      %v456 = vld [vmem:[%s247 + $0x2e8] sm:$0xf]
      %v457 = vld [vmem:[%s247 + $0x2ec] sm:$0xf]
      %v458 = vld [vmem:[%s247 + $0x2f0] sm:$0xf]
      %v459 = vld [vmem:[%s247 + $0x2f4] sm:$0xf]
      %v460 = vld [vmem:[%s247 + $0x2f8] sm:$0xf]
      %v461 = vld [vmem:[%s247 + $0x2fc] sm:$0xf]
      %v462 = vld [vmem:[%s247 + $0x300] sm:$0xf]
      %v463 = vld [vmem:[%s247 + $0x304] sm:$0xf]
      %v464 = vld [vmem:[%s247 + $0x308] sm:$0xf]
      %v465 = vld [vmem:[%s247 + $0x30c] sm:$0xf]
      %v466 = vld [vmem:[%s247 + $0x310] sm:$0xf]
      %v467 = vld [vmem:[%s247 + $0x314] sm:$0xf]
      %v468 = vld [vmem:[%s247 + $0x318] sm:$0xf]
      %v469 = vld [vmem:[%s247 + $0x31c] sm:$0xf]
      %v470 = vld [vmem:[%s247 + $0x320] sm:$0xf]
      %v471 = vld [vmem:[%s247 + $0x324] sm:$0xf]
      %v472 = vld [vmem:[%s247 + $0x328] sm:$0xf]
      %v473 = vld [vmem:[%s247 + $0x32c] sm:$0xf]
      %v474 = vld [vmem:[%s247 + $0x330] sm:$0xf]
      %v475 = vld [vmem:[%s247 + $0x334] sm:$0xf]
      %v476 = vld [vmem:[%s247 + $0x338] sm:$0xf]
      %v477 = vld [vmem:[%s247 + $0x33c] sm:$0xf]
      %v478 = vld [vmem:[%s247 + $0x340] sm:$0xf]
      %v479 = vld [vmem:[%s247 + $0x344] sm:$0xf]
      %v480 = vld [vmem:[%s247 + $0x348] sm:$0xf]
      %v481 = vld [vmem:[%s247 + $0x34c] sm:$0xf]
      %v482 = vld [vmem:[%s247 + $0x350] sm:$0xf]
      %v483 = vld [vmem:[%s247 + $0x354] sm:$0xf]
      %v484 = vld [vmem:[%s247 + $0x358] sm:$0xf]
      %v485 = vld [vmem:[%s247 + $0x35c] sm:$0xf]
      %v486 = vld [vmem:[%s247 + $0x360] sm:$0xf]
      %v487 = vld [vmem:[%s247 + $0x364] sm:$0xf]
      %v488 = vld [vmem:[%s247 + $0x368] sm:$0xf]
      %v489 = vld [vmem:[%s247 + $0x36c] sm:$0xf]
      %v490 = vld [vmem:[%s247 + $0x370] sm:$0xf]
      %v491 = vld [vmem:[%s247 + $0x374] sm:$0xf]
      %v492 = vld [vmem:[%s247 + $0x378] sm:$0xf]
      %v493 = vld [vmem:[%s247 + $0x37c] sm:$0xf]
      %v494 = vld [vmem:[%s247 + $0x380] sm:$0xf]
      %v495 = vld [vmem:[%s247 + $0x384] sm:$0xf]
      %v496 = vld [vmem:[%s247 + $0x388] sm:$0xf]
      %v497 = vld [vmem:[%s247 + $0x38c] sm:$0xf]
      %v498 = vld [vmem:[%s247 + $0x390] sm:$0xf]
      %v499 = vld [vmem:[%s247 + $0x394] sm:$0xf]
      %v500 = vld [vmem:[%s247 + $0x398] sm:$0xf]
      %v501 = vld [vmem:[%s247 + $0x39c] sm:$0xf]
      %v502 = vld [vmem:[%s247 + $0x3a0] sm:$0xf]
      %v503 = vld [vmem:[%s247 + $0x3a4] sm:$0xf]
      %v504 = vld [vmem:[%s247 + $0x3a8] sm:$0xf]
      %v505 = vld [vmem:[%s247 + $0x3ac] sm:$0xf]
      %v506 = vld [vmem:[%s247 + $0x3b0] sm:$0xf]
      %v507 = vld [vmem:[%s247 + $0x3b4] sm:$0xf]
      %v508 = vld [vmem:[%s247 + $0x3b8] sm:$0xf]
      %v509 = vld [vmem:[%s247 + $0x3bc] sm:$0xf]
      %v510 = vld [vmem:[%s247 + $0x3c0] sm:$0xf]
      %v511 = vld [vmem:[%s247 + $0x3c4] sm:$0xf]
      %v512 = vld [vmem:[%s247 + $0x3c8] sm:$0xf]
      %v513 = vld [vmem:[%s247 + $0x3cc] sm:$0xf]
      %v514 = vld [vmem:[%s247 + $0x3d0] sm:$0xf]
      %v515 = vld [vmem:[%s247 + $0x3d4] sm:$0xf]
      %v516 = vld [vmem:[%s247 + $0x3d8] sm:$0xf]
      %v517 = vld [vmem:[%s247 + $0x3dc] sm:$0xf]
      %v518 = vld [vmem:[%s247 + $0x3e0] sm:$0xf]
      %v519 = vld [vmem:[%s247 + $0x3e4] sm:$0xf]
      %v520 = vld [vmem:[%s247 + $0x3e8] sm:$0xf]
      %v521 = vld [vmem:[%s247 + $0x3ec] sm:$0xf]
      %v522 = vld [vmem:[%s247 + $0x3f0] sm:$0xf]
      %v523 = vld [vmem:[%s247 + $0x3f4] sm:$0xf]
      %v524 = vld [vmem:[%s247 + $0x3f8] sm:$0xf]
      %v525 = vld [vmem:[%s247 + $0x3fc] sm:$0xf]
      %v530 = vcombine.high %v266, %v266
      %v532 = vunpack.c.l.s4 1983009808
      %v533 = vunpack.c.0.s8 %v532
      %v534 = vlaneseq
      %v535 = vshrl.u32 %v534, 7
      %v536 = vsub.s32 %v533, %v535
      %v537 = vrot.slane %v266, %v536
      %v539 = vunpack.c.l.s4 1983009808
      %v540 = vunpack.c.0.s8 %v539
      %v541 = vlaneseq
      %v542 = vshrl.u32 %v541, 7
      %v543 = vsub.s32 %v540, %v542
      %v544 = vrot.slane %v530, %v543
      %v545 = vcombine.high %v537, %v537
      %v546 = vcombine.high %v544, %v544
      %v547 = vcombine.high %v267, %v267
      %v549 = vunpack.c.l.s4 1983009808
      %v550 = vunpack.c.0.s8 %v549
      %v551 = vlaneseq
      %v552 = vshrl.u32 %v551, 7
      %v553 = vsub.s32 %v550, %v552
      %v554 = vrot.slane %v267, %v553
      %v556 = vunpack.c.l.s4 1983009808
      %v557 = vunpack.c.0.s8 %v556
      %v558 = vlaneseq
      %v559 = vshrl.u32 %v558, 7
      %v560 = vsub.s32 %v557, %v559
      %v561 = vrot.slane %v547, %v560
      %v562 = vcombine.high %v554, %v554
      %v563 = vcombine.high %v561, %v561
      %v564 = vcombine.high %v268, %v268
      %v566 = vunpack.c.l.s4 1983009808
      %v567 = vunpack.c.0.s8 %v566
      %v568 = vlaneseq
      %v569 = vshrl.u32 %v568, 7
      %v570 = vsub.s32 %v567, %v569
      %v571 = vrot.slane %v268, %v570
      %v573 = vunpack.c.l.s4 1983009808
      %v574 = vunpack.c.0.s8 %v573
      %v575 = vlaneseq
      %v576 = vshrl.u32 %v575, 7
      %v577 = vsub.s32 %v574, %v576
      %v578 = vrot.slane %v564, %v577
      %v579 = vcombine.high %v571, %v571
      %v580 = vcombine.high %v578, %v578
      %v581 = vcombine.high %v269, %v269
      %v583 = vunpack.c.l.s4 1983009808
      %v584 = vunpack.c.0.s8 %v583
      %v585 = vlaneseq
      %v586 = vshrl.u32 %v585, 7
      %v587 = vsub.s32 %v584, %v586
      %v588 = vrot.slane %v269, %v587
      %v590 = vunpack.c.l.s4 1983009808
      %v591 = vunpack.c.0.s8 %v590
      %v592 = vlaneseq
      %v593 = vshrl.u32 %v592, 7
      %v594 = vsub.s32 %v591, %v593
      %v595 = vrot.slane %v581, %v594
      %v596 = vcombine.high %v588, %v588
      %v597 = vcombine.high %v595, %v595
      %v870 = vunpack.c.l.b16 %v270
      %v871 = vunpack.c.l.b16 %v271
      %v872 = vunpack.c.l.b16 %v272
      %v873 = vunpack.c.l.b16 %v273
      %v874 = vunpack.c.l.b16 %v274
      %v875 = vunpack.c.l.b16 %v275
      %v876 = vunpack.c.l.b16 %v276
      %v877 = vunpack.c.l.b16 %v277
      %v878 = vunpack.c.l.b16 %v278
      %v879 = vunpack.c.l.b16 %v279
      %v880 = vunpack.c.l.b16 %v280
      %v881 = vunpack.c.l.b16 %v281
      %v882 = vunpack.c.l.b16 %v282
      %v883 = vunpack.c.l.b16 %v283
      %v884 = vunpack.c.l.b16 %v284
      %v885 = vunpack.c.l.b16 %v285
      %v886 = vunpack.c.l.b16 %v286
      %v887 = vunpack.c.l.b16 %v287
      %v888 = vunpack.c.l.b16 %v288
      %v889 = vunpack.c.l.b16 %v289
      %v890 = vunpack.c.l.b16 %v290
      %v891 = vunpack.c.l.b16 %v291
      %v892 = vunpack.c.l.b16 %v292
      %v893 = vunpack.c.l.b16 %v293
      %v894 = vunpack.c.l.b16 %v294
      %v895 = vunpack.c.l.b16 %v295
      %v896 = vunpack.c.l.b16 %v296
      %v897 = vunpack.c.l.b16 %v297
      %v898 = vunpack.c.l.b16 %v298
      %v899 = vunpack.c.l.b16 %v299
      %v900 = vunpack.c.l.b16 %v300
      %v901 = vunpack.c.l.b16 %v301
      %v902 = vunpack.c.l.b16 %v302
      %v903 = vunpack.c.l.b16 %v303
      %v904 = vunpack.c.l.b16 %v304
      %v905 = vunpack.c.l.b16 %v305
      %v906 = vunpack.c.l.b16 %v306
      %v907 = vunpack.c.l.b16 %v307
      %v908 = vunpack.c.l.b16 %v308
      %v909 = vunpack.c.l.b16 %v309
      %v910 = vunpack.c.l.b16 %v310
      %v911 = vunpack.c.l.b16 %v311
      %v912 = vunpack.c.l.b16 %v312
      %v913 = vunpack.c.l.b16 %v313
      %v914 = vunpack.c.l.b16 %v314
      %v915 = vunpack.c.l.b16 %v315
      %v916 = vunpack.c.l.b16 %v316
      %v917 = vunpack.c.l.b16 %v317
      %v918 = vunpack.c.l.b16 %v318
      %v919 = vunpack.c.l.b16 %v319
      %v920 = vunpack.c.l.b16 %v320
      %v921 = vunpack.c.l.b16 %v321
      %v922 = vunpack.c.l.b16 %v322
      %v923 = vunpack.c.l.b16 %v323
      %v924 = vunpack.c.l.b16 %v324
      %v925 = vunpack.c.l.b16 %v325
      %v926 = vunpack.c.l.b16 %v326
      %v927 = vunpack.c.l.b16 %v327
      %v928 = vunpack.c.l.b16 %v328
      %v929 = vunpack.c.l.b16 %v329
      %v930 = vunpack.c.l.b16 %v330
      %v931 = vunpack.c.l.b16 %v331
      %v932 = vunpack.c.l.b16 %v332
      %v933 = vunpack.c.l.b16 %v333
      %v934 = vunpack.c.l.b16 %v334
      %v935 = vunpack.c.l.b16 %v335
      %v936 = vunpack.c.l.b16 %v336
      %v937 = vunpack.c.l.b16 %v337
      %v938 = vunpack.c.l.b16 %v338
      %v939 = vunpack.c.l.b16 %v339
      %v940 = vunpack.c.l.b16 %v340
      %v941 = vunpack.c.l.b16 %v341
      %v942 = vunpack.c.l.b16 %v342
      %v943 = vunpack.c.l.b16 %v343
      %v944 = vunpack.c.l.b16 %v344
      %v945 = vunpack.c.l.b16 %v345
      %v946 = vunpack.c.l.b16 %v346
      %v947 = vunpack.c.l.b16 %v347
      %v948 = vunpack.c.l.b16 %v348
      %v949 = vunpack.c.l.b16 %v349
      %v950 = vunpack.c.l.b16 %v350
      %v951 = vunpack.c.l.b16 %v351
      %v952 = vunpack.c.l.b16 %v352
      %v953 = vunpack.c.l.b16 %v353
      %v954 = vunpack.c.l.b16 %v354
      %v955 = vunpack.c.l.b16 %v355
      %v956 = vunpack.c.l.b16 %v356
      %v957 = vunpack.c.l.b16 %v357
      %v958 = vunpack.c.l.b16 %v358
      %v959 = vunpack.c.l.b16 %v359
      %v960 = vunpack.c.l.b16 %v360
      %v961 = vunpack.c.l.b16 %v361
      %v962 = vunpack.c.l.b16 %v362
      %v963 = vunpack.c.l.b16 %v363
      %v964 = vunpack.c.l.b16 %v364
      %v965 = vunpack.c.l.b16 %v365
      %v966 = vunpack.c.l.b16 %v366
      %v967 = vunpack.c.l.b16 %v367
      %v968 = vunpack.c.l.b16 %v368
      %v969 = vunpack.c.l.b16 %v369
      %v970 = vunpack.c.l.b16 %v370
      %v971 = vunpack.c.l.b16 %v371
      %v972 = vunpack.c.l.b16 %v372
      %v973 = vunpack.c.l.b16 %v373
      %v974 = vunpack.c.l.b16 %v374
      %v975 = vunpack.c.l.b16 %v375
      %v976 = vunpack.c.l.b16 %v376
      %v977 = vunpack.c.l.b16 %v377
      %v978 = vunpack.c.l.b16 %v378
      %v979 = vunpack.c.l.b16 %v379
      %v980 = vunpack.c.l.b16 %v380
      %v981 = vunpack.c.l.b16 %v381
      %v982 = vunpack.c.l.b16 %v382
      %v983 = vunpack.c.l.b16 %v383
      %v984 = vunpack.c.l.b16 %v384
      %v985 = vunpack.c.l.b16 %v385
      %v986 = vunpack.c.l.b16 %v386
      %v987 = vunpack.c.l.b16 %v387
      %v988 = vunpack.c.l.b16 %v388
      %v989 = vunpack.c.l.b16 %v389
      %v990 = vunpack.c.l.b16 %v390
      %v991 = vunpack.c.l.b16 %v391
      %v992 = vunpack.c.l.b16 %v392
      %v993 = vunpack.c.l.b16 %v393
      %v994 = vunpack.c.l.b16 %v394
      %v995 = vunpack.c.l.b16 %v395
      %v996 = vunpack.c.l.b16 %v396
      %v997 = vunpack.c.l.b16 %v397
      %v998 = vunpack.c.l.b16 %v398
      %v999 = vunpack.c.l.b16 %v399
      %v1000 = vunpack.c.l.b16 %v400
      %v1001 = vunpack.c.l.b16 %v401
      %v1002 = vunpack.c.l.b16 %v402
      %v1003 = vunpack.c.l.b16 %v403
      %v1004 = vunpack.c.l.b16 %v404
      %v1005 = vunpack.c.l.b16 %v405
      %v1006 = vunpack.c.l.b16 %v406
      %v1007 = vunpack.c.l.b16 %v407
      %v1008 = vunpack.c.l.b16 %v408
      %v1009 = vunpack.c.l.b16 %v409
      %v1010 = vunpack.c.l.b16 %v410
      %v1011 = vunpack.c.l.b16 %v411
      %v1012 = vunpack.c.l.b16 %v412
      %v1013 = vunpack.c.l.b16 %v413
      %v1014 = vunpack.c.l.b16 %v414
      %v1015 = vunpack.c.l.b16 %v415
      %v1016 = vunpack.c.l.b16 %v416
      %v1017 = vunpack.c.l.b16 %v417
      %v1018 = vunpack.c.l.b16 %v418
      %v1019 = vunpack.c.l.b16 %v419
      %v1020 = vunpack.c.l.b16 %v420
      %v1021 = vunpack.c.l.b16 %v421
      %v1022 = vunpack.c.l.b16 %v422
      %v1023 = vunpack.c.l.b16 %v423
      %v1024 = vunpack.c.l.b16 %v424
      %v1025 = vunpack.c.l.b16 %v425
      %v1026 = vunpack.c.l.b16 %v426
      %v1027 = vunpack.c.l.b16 %v427
      %v1028 = vunpack.c.l.b16 %v428
      %v1029 = vunpack.c.l.b16 %v429
      %v1030 = vunpack.c.l.b16 %v430
      %v1031 = vunpack.c.l.b16 %v431
      %v1032 = vunpack.c.l.b16 %v432
      %v1033 = vunpack.c.l.b16 %v433
      %v1034 = vunpack.c.l.b16 %v434
      %v1035 = vunpack.c.l.b16 %v435
      %v1036 = vunpack.c.l.b16 %v436
      %v1037 = vunpack.c.l.b16 %v437
      %v1038 = vunpack.c.l.b16 %v438
      %v1039 = vunpack.c.l.b16 %v439
      %v1040 = vunpack.c.l.b16 %v440
      %v1041 = vunpack.c.l.b16 %v441
      %v1042 = vunpack.c.l.b16 %v442
      %v1043 = vunpack.c.l.b16 %v443
      %v1044 = vunpack.c.l.b16 %v444
      %v1045 = vunpack.c.l.b16 %v445
      %v1046 = vunpack.c.l.b16 %v446
      %v1047 = vunpack.c.l.b16 %v447
      %v1048 = vunpack.c.l.b16 %v448
      %v1049 = vunpack.c.l.b16 %v449
      %v1050 = vunpack.c.l.b16 %v450
      %v1051 = vunpack.c.l.b16 %v451
      %v1052 = vunpack.c.l.b16 %v452
      %v1053 = vunpack.c.l.b16 %v453
      %v1054 = vunpack.c.l.b16 %v454
      %v1055 = vunpack.c.l.b16 %v455
      %v1056 = vunpack.c.l.b16 %v456
      %v1057 = vunpack.c.l.b16 %v457
      %v1058 = vunpack.c.l.b16 %v458
      %v1059 = vunpack.c.l.b16 %v459
      %v1060 = vunpack.c.l.b16 %v460
      %v1061 = vunpack.c.l.b16 %v461
      %v1062 = vunpack.c.l.b16 %v462
      %v1063 = vunpack.c.l.b16 %v463
      %v1064 = vunpack.c.l.b16 %v464
      %v1065 = vunpack.c.l.b16 %v465
      %v1066 = vunpack.c.l.b16 %v466
      %v1067 = vunpack.c.l.b16 %v467
      %v1068 = vunpack.c.l.b16 %v468
      %v1069 = vunpack.c.l.b16 %v469
      %v1070 = vunpack.c.l.b16 %v470
      %v1071 = vunpack.c.l.b16 %v471
      %v1072 = vunpack.c.l.b16 %v472
      %v1073 = vunpack.c.l.b16 %v473
      %v1074 = vunpack.c.l.b16 %v474
      %v1075 = vunpack.c.l.b16 %v475
      %v1076 = vunpack.c.l.b16 %v476
      %v1077 = vunpack.c.l.b16 %v477
      %v1078 = vunpack.c.l.b16 %v478
      %v1079 = vunpack.c.l.b16 %v479
      %v1080 = vunpack.c.l.b16 %v480
      %v1081 = vunpack.c.l.b16 %v481
      %v1082 = vunpack.c.l.b16 %v482
      %v1083 = vunpack.c.l.b16 %v483
      %v1084 = vunpack.c.l.b16 %v484
      %v1085 = vunpack.c.l.b16 %v485
      %v1086 = vunpack.c.l.b16 %v486
      %v1087 = vunpack.c.l.b16 %v487
      %v1088 = vunpack.c.l.b16 %v488
      %v1089 = vunpack.c.l.b16 %v489
      %v1090 = vunpack.c.l.b16 %v490
      %v1091 = vunpack.c.l.b16 %v491
      %v1092 = vunpack.c.l.b16 %v492
      %v1093 = vunpack.c.l.b16 %v493
      %v1094 = vunpack.c.l.b16 %v494
      %v1095 = vunpack.c.l.b16 %v495
      %v1096 = vunpack.c.l.b16 %v496
      %v1097 = vunpack.c.l.b16 %v497
      %v1098 = vunpack.c.l.b16 %v498
      %v1099 = vunpack.c.l.b16 %v499
      %v1100 = vunpack.c.l.b16 %v500
      %v1101 = vunpack.c.l.b16 %v501
      %v1102 = vunpack.c.l.b16 %v502
      %v1103 = vunpack.c.l.b16 %v503
      %v1104 = vunpack.c.l.b16 %v504
      %v1105 = vunpack.c.l.b16 %v505
      %v1106 = vunpack.c.l.b16 %v506
      %v1107 = vunpack.c.l.b16 %v507
      %v1108 = vunpack.c.l.b16 %v508
      %v1109 = vunpack.c.l.b16 %v509
      %v1110 = vunpack.c.l.b16 %v510
      %v1111 = vunpack.c.l.b16 %v511
      %v1112 = vunpack.c.l.b16 %v512
      %v1113 = vunpack.c.l.b16 %v513
      %v1114 = vunpack.c.l.b16 %v514
      %v1115 = vunpack.c.l.b16 %v515
      %v1116 = vunpack.c.l.b16 %v516
      %v1117 = vunpack.c.l.b16 %v517
      %v1118 = vunpack.c.l.b16 %v518
      %v1119 = vunpack.c.l.b16 %v519
      %v1120 = vunpack.c.l.b16 %v520
      %v1121 = vunpack.c.l.b16 %v521
      %v1122 = vunpack.c.l.b16 %v522
      %v1123 = vunpack.c.l.b16 %v523
      %v1124 = vunpack.c.l.b16 %v524
      %v1125 = vunpack.c.l.b16 %v525
      %v1126 = vpack.c.b16 %v871, %v870
      %v1127 = vpack.c.b16 %v873, %v872
      %v1128 = vpack.c.b16 %v875, %v874
      %v1129 = vpack.c.b16 %v877, %v876
      %v1130 = vpack.c.b16 %v879, %v878
      %v1131 = vpack.c.b16 %v881, %v880
      %v1132 = vpack.c.b16 %v883, %v882
      %v1133 = vpack.c.b16 %v885, %v884
      %v1134 = vpack.c.b16 %v887, %v886
      %v1135 = vpack.c.b16 %v889, %v888
      %v1136 = vpack.c.b16 %v891, %v890
      %v1137 = vpack.c.b16 %v893, %v892
      %v1138 = vpack.c.b16 %v895, %v894
      %v1139 = vpack.c.b16 %v897, %v896
      %v1140 = vpack.c.b16 %v899, %v898
      %v1141 = vpack.c.b16 %v901, %v900
      %v1142 = vpack.c.b16 %v903, %v902
      %v1143 = vpack.c.b16 %v905, %v904
      %v1144 = vpack.c.b16 %v907, %v906
      %v1145 = vpack.c.b16 %v909, %v908
      %v1146 = vpack.c.b16 %v911, %v910
      %v1147 = vpack.c.b16 %v913, %v912
      %v1148 = vpack.c.b16 %v915, %v914
      %v1149 = vpack.c.b16 %v917, %v916
      %v1150 = vpack.c.b16 %v919, %v918
      %v1151 = vpack.c.b16 %v921, %v920
      %v1152 = vpack.c.b16 %v923, %v922
      %v1153 = vpack.c.b16 %v925, %v924
      %v1154 = vpack.c.b16 %v927, %v926
      %v1155 = vpack.c.b16 %v929, %v928
      %v1156 = vpack.c.b16 %v931, %v930
      %v1157 = vpack.c.b16 %v933, %v932
      %v1158 = vpack.c.b16 %v935, %v934
      %v1159 = vpack.c.b16 %v937, %v936
      %v1160 = vpack.c.b16 %v939, %v938
      %v1161 = vpack.c.b16 %v941, %v940
      %v1162 = vpack.c.b16 %v943, %v942
      %v1163 = vpack.c.b16 %v945, %v944
      %v1164 = vpack.c.b16 %v947, %v946
      %v1165 = vpack.c.b16 %v949, %v948
      %v1166 = vpack.c.b16 %v951, %v950
      %v1167 = vpack.c.b16 %v953, %v952
      %v1168 = vpack.c.b16 %v955, %v954
      %v1169 = vpack.c.b16 %v957, %v956
      %v1170 = vpack.c.b16 %v959, %v958
      %v1171 = vpack.c.b16 %v961, %v960
      %v1172 = vpack.c.b16 %v963, %v962
      %v1173 = vpack.c.b16 %v965, %v964
      %v1174 = vpack.c.b16 %v967, %v966
      %v1175 = vpack.c.b16 %v969, %v968
      %v1176 = vpack.c.b16 %v971, %v970
      %v1177 = vpack.c.b16 %v973, %v972
      %v1178 = vpack.c.b16 %v975, %v974
      %v1179 = vpack.c.b16 %v977, %v976
      %v1180 = vpack.c.b16 %v979, %v978
      %v1181 = vpack.c.b16 %v981, %v980
      %v1182 = vpack.c.b16 %v983, %v982
      %v1183 = vpack.c.b16 %v985, %v984
      %v1184 = vpack.c.b16 %v987, %v986
      %v1185 = vpack.c.b16 %v989, %v988
      %v1186 = vpack.c.b16 %v991, %v990
      %v1187 = vpack.c.b16 %v993, %v992
      %v1188 = vpack.c.b16 %v995, %v994
      %v1189 = vpack.c.b16 %v997, %v996
      %v1190 = vpack.c.b16 %v999, %v998
      %v1191 = vpack.c.b16 %v1001, %v1000
      %v1192 = vpack.c.b16 %v1003, %v1002
      %v1193 = vpack.c.b16 %v1005, %v1004
      %v1194 = vpack.c.b16 %v1007, %v1006
      %v1195 = vpack.c.b16 %v1009, %v1008
      %v1196 = vpack.c.b16 %v1011, %v1010
      %v1197 = vpack.c.b16 %v1013, %v1012
      %v1198 = vpack.c.b16 %v1015, %v1014
      %v1199 = vpack.c.b16 %v1017, %v1016
      %v1200 = vpack.c.b16 %v1019, %v1018
      %v1201 = vpack.c.b16 %v1021, %v1020
      %v1202 = vpack.c.b16 %v1023, %v1022
      %v1203 = vpack.c.b16 %v1025, %v1024
      %v1204 = vpack.c.b16 %v1027, %v1026
      %v1205 = vpack.c.b16 %v1029, %v1028
      %v1206 = vpack.c.b16 %v1031, %v1030
      %v1207 = vpack.c.b16 %v1033, %v1032
      %v1208 = vpack.c.b16 %v1035, %v1034
      %v1209 = vpack.c.b16 %v1037, %v1036
      %v1210 = vpack.c.b16 %v1039, %v1038
      %v1211 = vpack.c.b16 %v1041, %v1040
      %v1212 = vpack.c.b16 %v1043, %v1042
      %v1213 = vpack.c.b16 %v1045, %v1044
      %v1214 = vpack.c.b16 %v1047, %v1046
      %v1215 = vpack.c.b16 %v1049, %v1048
      %v1216 = vpack.c.b16 %v1051, %v1050
      %v1217 = vpack.c.b16 %v1053, %v1052
      %v1218 = vpack.c.b16 %v1055, %v1054
      %v1219 = vpack.c.b16 %v1057, %v1056
      %v1220 = vpack.c.b16 %v1059, %v1058
      %v1221 = vpack.c.b16 %v1061, %v1060
      %v1222 = vpack.c.b16 %v1063, %v1062
      %v1223 = vpack.c.b16 %v1065, %v1064
      %v1224 = vpack.c.b16 %v1067, %v1066
      %v1225 = vpack.c.b16 %v1069, %v1068
      %v1226 = vpack.c.b16 %v1071, %v1070
      %v1227 = vpack.c.b16 %v1073, %v1072
      %v1228 = vpack.c.b16 %v1075, %v1074
      %v1229 = vpack.c.b16 %v1077, %v1076
      %v1230 = vpack.c.b16 %v1079, %v1078
      %v1231 = vpack.c.b16 %v1081, %v1080
      %v1232 = vpack.c.b16 %v1083, %v1082
      %v1233 = vpack.c.b16 %v1085, %v1084
      %v1234 = vpack.c.b16 %v1087, %v1086
      %v1235 = vpack.c.b16 %v1089, %v1088
      %v1236 = vpack.c.b16 %v1091, %v1090
      %v1237 = vpack.c.b16 %v1093, %v1092
      %v1238 = vpack.c.b16 %v1095, %v1094
      %v1239 = vpack.c.b16 %v1097, %v1096
      %v1240 = vpack.c.b16 %v1099, %v1098
      %v1241 = vpack.c.b16 %v1101, %v1100
      %v1242 = vpack.c.b16 %v1103, %v1102
      %v1243 = vpack.c.b16 %v1105, %v1104
      %v1244 = vpack.c.b16 %v1107, %v1106
      %v1245 = vpack.c.b16 %v1109, %v1108
      %v1246 = vpack.c.b16 %v1111, %v1110
      %v1247 = vpack.c.b16 %v1113, %v1112
      %v1248 = vpack.c.b16 %v1115, %v1114
      %v1249 = vpack.c.b16 %v1117, %v1116
      %v1250 = vpack.c.b16 %v1119, %v1118
      %v1251 = vpack.c.b16 %v1121, %v1120
      %v1252 = vpack.c.b16 %v1123, %v1122
      %v1253 = vpack.c.b16 %v1125, %v1124
      %1382 = vmatprep.subr.bf16.mxu0 0
      %1383 = vmatpush1.bf16.msra.mxu0 %v1126
      %1384 = vmatprep.subr.bf16.mxu0 0
      %1385 = vmatpush1.bf16.msra.mxu0 %v1127
      %1386 = vmatprep.subr.bf16.mxu0 0
      %1387 = vmatpush1.bf16.msra.mxu0 %v1128
      %1388 = vmatprep.subr.bf16.mxu0 0
      %1389 = vmatpush1.bf16.msra.mxu0 %v1129
      %1390 = vmatprep.subr.bf16.mxu0 0
      %1391 = vmatpush1.bf16.msra.mxu0 %v1130
      %1392 = vmatprep.subr.bf16.mxu0 0
      %1393 = vmatpush1.bf16.msra.mxu0 %v1131
      %1394 = vmatprep.subr.bf16.mxu0 0
      %1395 = vmatpush1.bf16.msra.mxu0 %v1132
      %1396 = vmatprep.subr.bf16.mxu0 0
      %1397 = vmatpush1.bf16.msra.mxu0 %v1133
      %1398 = vmatprep.subr.bf16.mxu0 0
      %1399 = vmatpush1.bf16.msra.mxu0 %v1134
      %1400 = vmatprep.subr.bf16.mxu0 0
      %1401 = vmatpush1.bf16.msra.mxu0 %v1135
      %1402 = vmatprep.subr.bf16.mxu0 0
      %1403 = vmatpush1.bf16.msra.mxu0 %v1136
      %1404 = vmatprep.subr.bf16.mxu0 0
      %1405 = vmatpush1.bf16.msra.mxu0 %v1137
      %1406 = vmatprep.subr.bf16.mxu0 0
      %1407 = vmatpush1.bf16.msra.mxu0 %v1138
      %1408 = vmatprep.subr.bf16.mxu0 0
      %1409 = vmatpush1.bf16.msra.mxu0 %v1139
      %1410 = vmatprep.subr.bf16.mxu0 0
      %1411 = vmatpush1.bf16.msra.mxu0 %v1140
      %1412 = vmatprep.subr.bf16.mxu0 0
      %1413 = vmatpush1.bf16.msra.mxu0 %v1141
      %1414 = vmatprep.mubr.bf16.mxu0 %v545
      %1415 = vmatmul.mubr.bf16.gmra.mrb[0].mxu0 %v537
      %v1416 = vpop.f32.mrb[0].mxu0
      %v1417 = vadd.f32 0.0, %v1416
      %v1418 = vpop.f32.mrb[0].mxu0
      %v1419 = vpop.f32.mrb[0].mxu0
      %v1420 = vpop.f32.mrb[0].mxu0
      %1421 = vdwg.mxu0
      %1422 = vmatprep.subr.bf16.mxu0 0
      %1423 = vmatpush1.bf16.msra.mxu0 %v1142
      %1424 = vmatprep.subr.bf16.mxu0 0
      %1425 = vmatpush1.bf16.msra.mxu0 %v1143
      %1426 = vmatprep.subr.bf16.mxu0 0
      %1427 = vmatpush1.bf16.msra.mxu0 %v1144
      %1428 = vmatprep.subr.bf16.mxu0 0
      %1429 = vmatpush1.bf16.msra.mxu0 %v1145
      %1430 = vmatprep.subr.bf16.mxu0 0
      %1431 = vmatpush1.bf16.msra.mxu0 %v1146
      %1432 = vmatprep.subr.bf16.mxu0 0
      %1433 = vmatpush1.bf16.msra.mxu0 %v1147
      %1434 = vmatprep.subr.bf16.mxu0 0
      %1435 = vmatpush1.bf16.msra.mxu0 %v1148
      %1436 = vmatprep.subr.bf16.mxu0 0
      %1437 = vmatpush1.bf16.msra.mxu0 %v1149
      %1438 = vmatprep.subr.bf16.mxu0 0
      %1439 = vmatpush1.bf16.msra.mxu0 %v1150
      %1440 = vmatprep.subr.bf16.mxu0 0
      %1441 = vmatpush1.bf16.msra.mxu0 %v1151
      %1442 = vmatprep.subr.bf16.mxu0 0
      %1443 = vmatpush1.bf16.msra.mxu0 %v1152
      %1444 = vmatprep.subr.bf16.mxu0 0
      %1445 = vmatpush1.bf16.msra.mxu0 %v1153
      %1446 = vmatprep.subr.bf16.mxu0 0
      %1447 = vmatpush1.bf16.msra.mxu0 %v1154
      %1448 = vmatprep.subr.bf16.mxu0 0
      %1449 = vmatpush1.bf16.msra.mxu0 %v1155
      %1450 = vmatprep.subr.bf16.mxu0 0
      %1451 = vmatpush1.bf16.msra.mxu0 %v1156
      %1452 = vmatprep.subr.bf16.mxu0 0
      %1453 = vmatpush1.bf16.msra.mxu0 %v1157
      %1454 = vmatprep.mubr.bf16.mxu0 %v546
      %1455 = vmatmul.mubr.bf16.gmra.mrb[0].mxu0 %v544
      %v1456 = vpop.f32.mrb[0].mxu0
      %v1457 = vadd.f32 %v1417, %v1456
      %v1458 = vpop.f32.mrb[0].mxu0
      %v1459 = vpop.f32.mrb[0].mxu0
      %v1460 = vpop.f32.mrb[0].mxu0
      %1461 = vdwg.mxu0
      %1462 = vmatprep.subr.bf16.mxu0 0
      %1463 = vmatpush1.bf16.msra.mxu0 %v1158
      %1464 = vmatprep.subr.bf16.mxu0 0
      %1465 = vmatpush1.bf16.msra.mxu0 %v1159
      %1466 = vmatprep.subr.bf16.mxu0 0
      %1467 = vmatpush1.bf16.msra.mxu0 %v1160
      %1468 = vmatprep.subr.bf16.mxu0 0
      %1469 = vmatpush1.bf16.msra.mxu0 %v1161
      %1470 = vmatprep.subr.bf16.mxu0 0
      %1471 = vmatpush1.bf16.msra.mxu0 %v1162
      %1472 = vmatprep.subr.bf16.mxu0 0
      %1473 = vmatpush1.bf16.msra.mxu0 %v1163
      %1474 = vmatprep.subr.bf16.mxu0 0
      %1475 = vmatpush1.bf16.msra.mxu0 %v1164
      %1476 = vmatprep.subr.bf16.mxu0 0
      %1477 = vmatpush1.bf16.msra.mxu0 %v1165
      %1478 = vmatprep.subr.bf16.mxu0 0
      %1479 = vmatpush1.bf16.msra.mxu0 %v1166
      %1480 = vmatprep.subr.bf16.mxu0 0
      %1481 = vmatpush1.bf16.msra.mxu0 %v1167
      %1482 = vmatprep.subr.bf16.mxu0 0
      %1483 = vmatpush1.bf16.msra.mxu0 %v1168
      %1484 = vmatprep.subr.bf16.mxu0 0
      %1485 = vmatpush1.bf16.msra.mxu0 %v1169
      %1486 = vmatprep.subr.bf16.mxu0 0
      %1487 = vmatpush1.bf16.msra.mxu0 %v1170
      %1488 = vmatprep.subr.bf16.mxu0 0
      %1489 = vmatpush1.bf16.msra.mxu0 %v1171
      %1490 = vmatprep.subr.bf16.mxu0 0
      %1491 = vmatpush1.bf16.msra.mxu0 %v1172
      %1492 = vmatprep.subr.bf16.mxu0 0
      %1493 = vmatpush1.bf16.msra.mxu0 %v1173
      %1494 = vmatprep.mubr.bf16.mxu0 %v562
      %1495 = vmatmul.mubr.bf16.gmra.mrb[0].mxu0 %v554
      %v1496 = vpop.f32.mrb[0].mxu0
      %v1497 = vadd.f32 %v1457, %v1496
      %v1498 = vpop.f32.mrb[0].mxu0
      %v1499 = vpop.f32.mrb[0].mxu0
      %v1500 = vpop.f32.mrb[0].mxu0
      %1501 = vdwg.mxu0
      %1502 = vmatprep.subr.bf16.mxu0 0
      %1503 = vmatpush1.bf16.msra.mxu0 %v1174
      %1504 = vmatprep.subr.bf16.mxu0 0
      %1505 = vmatpush1.bf16.msra.mxu0 %v1175
      %1506 = vmatprep.subr.bf16.mxu0 0
      %1507 = vmatpush1.bf16.msra.mxu0 %v1176
      %1508 = vmatprep.subr.bf16.mxu0 0
      %1509 = vmatpush1.bf16.msra.mxu0 %v1177
      %1510 = vmatprep.subr.bf16.mxu0 0
      %1511 = vmatpush1.bf16.msra.mxu0 %v1178
      %1512 = vmatprep.subr.bf16.mxu0 0
      %1513 = vmatpush1.bf16.msra.mxu0 %v1179
      %1514 = vmatprep.subr.bf16.mxu0 0
      %1515 = vmatpush1.bf16.msra.mxu0 %v1180
      %1516 = vmatprep.subr.bf16.mxu0 0
      %1517 = vmatpush1.bf16.msra.mxu0 %v1181
      %1518 = vmatprep.subr.bf16.mxu0 0
      %1519 = vmatpush1.bf16.msra.mxu0 %v1182
      %1520 = vmatprep.subr.bf16.mxu0 0
      %1521 = vmatpush1.bf16.msra.mxu0 %v1183
      %1522 = vmatprep.subr.bf16.mxu0 0
      %1523 = vmatpush1.bf16.msra.mxu0 %v1184
      %1524 = vmatprep.subr.bf16.mxu0 0
      %1525 = vmatpush1.bf16.msra.mxu0 %v1185
      %1526 = vmatprep.subr.bf16.mxu0 0
      %1527 = vmatpush1.bf16.msra.mxu0 %v1186
      %1528 = vmatprep.subr.bf16.mxu0 0
      %1529 = vmatpush1.bf16.msra.mxu0 %v1187
      %1530 = vmatprep.subr.bf16.mxu0 0
      %1531 = vmatpush1.bf16.msra.mxu0 %v1188
      %1532 = vmatprep.subr.bf16.mxu0 0
      %1533 = vmatpush1.bf16.msra.mxu0 %v1189
      %1534 = vmatprep.mubr.bf16.mxu0 %v563
      %1535 = vmatmul.mubr.bf16.gmra.mrb[0].mxu0 %v561
      %v1536 = vpop.f32.mrb[0].mxu0
      %v1537 = vadd.f32 %v1497, %v1536
      %v1538 = vpop.f32.mrb[0].mxu0
      %v1539 = vpop.f32.mrb[0].mxu0
      %v1540 = vpop.f32.mrb[0].mxu0
      %1541 = vdwg.mxu0
      %1542 = vmatprep.subr.bf16.mxu0 0
      %1543 = vmatpush1.bf16.msra.mxu0 %v1190
      %1544 = vmatprep.subr.bf16.mxu0 0
      %1545 = vmatpush1.bf16.msra.mxu0 %v1191
      %1546 = vmatprep.subr.bf16.mxu0 0
      %1547 = vmatpush1.bf16.msra.mxu0 %v1192
      %1548 = vmatprep.subr.bf16.mxu0 0
      %1549 = vmatpush1.bf16.msra.mxu0 %v1193
      %1550 = vmatprep.subr.bf16.mxu0 0
      %1551 = vmatpush1.bf16.msra.mxu0 %v1194
      %1552 = vmatprep.subr.bf16.mxu0 0
      %1553 = vmatpush1.bf16.msra.mxu0 %v1195
      %1554 = vmatprep.subr.bf16.mxu0 0
      %1555 = vmatpush1.bf16.msra.mxu0 %v1196
      %1556 = vmatprep.subr.bf16.mxu0 0
      %1557 = vmatpush1.bf16.msra.mxu0 %v1197
      %1558 = vmatprep.subr.bf16.mxu0 0
      %1559 = vmatpush1.bf16.msra.mxu0 %v1198
      %1560 = vmatprep.subr.bf16.mxu0 0
      %1561 = vmatpush1.bf16.msra.mxu0 %v1199
      %1562 = vmatprep.subr.bf16.mxu0 0
      %1563 = vmatpush1.bf16.msra.mxu0 %v1200
      %1564 = vmatprep.subr.bf16.mxu0 0
      %1565 = vmatpush1.bf16.msra.mxu0 %v1201
      %1566 = vmatprep.subr.bf16.mxu0 0
      %1567 = vmatpush1.bf16.msra.mxu0 %v1202
      %1568 = vmatprep.subr.bf16.mxu0 0
      %1569 = vmatpush1.bf16.msra.mxu0 %v1203
      %1570 = vmatprep.subr.bf16.mxu0 0
      %1571 = vmatpush1.bf16.msra.mxu0 %v1204
      %1572 = vmatprep.subr.bf16.mxu0 0
      %1573 = vmatpush1.bf16.msra.mxu0 %v1205
      %1574 = vmatprep.mubr.bf16.mxu0 %v579
      %1575 = vmatmul.mubr.bf16.gmra.mrb[0].mxu0 %v571
      %v1576 = vpop.f32.mrb[0].mxu0
      %v1577 = vadd.f32 %v1537, %v1576
      %v1578 = vpop.f32.mrb[0].mxu0
      %v1579 = vpop.f32.mrb[0].mxu0
      %v1580 = vpop.f32.mrb[0].mxu0
      %1581 = vdwg.mxu0
      %1582 = vmatprep.subr.bf16.mxu0 0
      %1583 = vmatpush1.bf16.msra.mxu0 %v1206
      %1584 = vmatprep.subr.bf16.mxu0 0
      %1585 = vmatpush1.bf16.msra.mxu0 %v1207
      %1586 = vmatprep.subr.bf16.mxu0 0
      %1587 = vmatpush1.bf16.msra.mxu0 %v1208
      %1588 = vmatprep.subr.bf16.mxu0 0
      %1589 = vmatpush1.bf16.msra.mxu0 %v1209
      %1590 = vmatprep.subr.bf16.mxu0 0
      %1591 = vmatpush1.bf16.msra.mxu0 %v1210
      %1592 = vmatprep.subr.bf16.mxu0 0
      %1593 = vmatpush1.bf16.msra.mxu0 %v1211
      %1594 = vmatprep.subr.bf16.mxu0 0
      %1595 = vmatpush1.bf16.msra.mxu0 %v1212
      %1596 = vmatprep.subr.bf16.mxu0 0
      %1597 = vmatpush1.bf16.msra.mxu0 %v1213
      %1598 = vmatprep.subr.bf16.mxu0 0
      %1599 = vmatpush1.bf16.msra.mxu0 %v1214
      %1600 = vmatprep.subr.bf16.mxu0 0
      %1601 = vmatpush1.bf16.msra.mxu0 %v1215
      %1602 = vmatprep.subr.bf16.mxu0 0
      %1603 = vmatpush1.bf16.msra.mxu0 %v1216
      %1604 = vmatprep.subr.bf16.mxu0 0
      %1605 = vmatpush1.bf16.msra.mxu0 %v1217
      %1606 = vmatprep.subr.bf16.mxu0 0
      %1607 = vmatpush1.bf16.msra.mxu0 %v1218
      %1608 = vmatprep.subr.bf16.mxu0 0
      %1609 = vmatpush1.bf16.msra.mxu0 %v1219
      %1610 = vmatprep.subr.bf16.mxu0 0
      %1611 = vmatpush1.bf16.msra.mxu0 %v1220
      %1612 = vmatprep.subr.bf16.mxu0 0
      %1613 = vmatpush1.bf16.msra.mxu0 %v1221
      %1614 = vmatprep.mubr.bf16.mxu0 %v580
      %1615 = vmatmul.mubr.bf16.gmra.mrb[0].mxu0 %v578
      %v1616 = vpop.f32.mrb[0].mxu0
      %v1617 = vadd.f32 %v1577, %v1616
      %v1618 = vpop.f32.mrb[0].mxu0
      %v1619 = vpop.f32.mrb[0].mxu0
      %v1620 = vpop.f32.mrb[0].mxu0
      %1621 = vdwg.mxu0
      %1622 = vmatprep.subr.bf16.mxu0 0
      %1623 = vmatpush1.bf16.msra.mxu0 %v1222
      %1624 = vmatprep.subr.bf16.mxu0 0
      %1625 = vmatpush1.bf16.msra.mxu0 %v1223
      %1626 = vmatprep.subr.bf16.mxu0 0
      %1627 = vmatpush1.bf16.msra.mxu0 %v1224
      %1628 = vmatprep.subr.bf16.mxu0 0
      %1629 = vmatpush1.bf16.msra.mxu0 %v1225
      %1630 = vmatprep.subr.bf16.mxu0 0
      %1631 = vmatpush1.bf16.msra.mxu0 %v1226
      %1632 = vmatprep.subr.bf16.mxu0 0
      %1633 = vmatpush1.bf16.msra.mxu0 %v1227
      %1634 = vmatprep.subr.bf16.mxu0 0
      %1635 = vmatpush1.bf16.msra.mxu0 %v1228
      %1636 = vmatprep.subr.bf16.mxu0 0
      %1637 = vmatpush1.bf16.msra.mxu0 %v1229
      %1638 = vmatprep.subr.bf16.mxu0 0
      %1639 = vmatpush1.bf16.msra.mxu0 %v1230
      %1640 = vmatprep.subr.bf16.mxu0 0
      %1641 = vmatpush1.bf16.msra.mxu0 %v1231
      %1642 = vmatprep.subr.bf16.mxu0 0
      %1643 = vmatpush1.bf16.msra.mxu0 %v1232
      %1644 = vmatprep.subr.bf16.mxu0 0
      %1645 = vmatpush1.bf16.msra.mxu0 %v1233
      %1646 = vmatprep.subr.bf16.mxu0 0
      %1647 = vmatpush1.bf16.msra.mxu0 %v1234
      %1648 = vmatprep.subr.bf16.mxu0 0
      %1649 = vmatpush1.bf16.msra.mxu0 %v1235
      %1650 = vmatprep.subr.bf16.mxu0 0
      %1651 = vmatpush1.bf16.msra.mxu0 %v1236
      %1652 = vmatprep.subr.bf16.mxu0 0
      %1653 = vmatpush1.bf16.msra.mxu0 %v1237
      %1654 = vmatprep.mubr.bf16.mxu0 %v596
      %1655 = vmatmul.mubr.bf16.gmra.mrb[0].mxu0 %v588
      %v1656 = vpop.f32.mrb[0].mxu0
      %v1657 = vadd.f32 %v1617, %v1656
      %v1658 = vpop.f32.mrb[0].mxu0
      %v1659 = vpop.f32.mrb[0].mxu0
      %v1660 = vpop.f32.mrb[0].mxu0
      %1661 = vdwg.mxu0
      %1662 = vmatprep.subr.bf16.mxu0 0
      %1663 = vmatpush1.bf16.msra.mxu0 %v1238
      %1664 = vmatprep.subr.bf16.mxu0 0
      %1665 = vmatpush1.bf16.msra.mxu0 %v1239
      %1666 = vmatprep.subr.bf16.mxu0 0
      %1667 = vmatpush1.bf16.msra.mxu0 %v1240
      %1668 = vmatprep.subr.bf16.mxu0 0
      %1669 = vmatpush1.bf16.msra.mxu0 %v1241
      %1670 = vmatprep.subr.bf16.mxu0 0
      %1671 = vmatpush1.bf16.msra.mxu0 %v1242
      %1672 = vmatprep.subr.bf16.mxu0 0
      %1673 = vmatpush1.bf16.msra.mxu0 %v1243
      %1674 = vmatprep.subr.bf16.mxu0 0
      %1675 = vmatpush1.bf16.msra.mxu0 %v1244
      %1676 = vmatprep.subr.bf16.mxu0 0
      %1677 = vmatpush1.bf16.msra.mxu0 %v1245
      %1678 = vmatprep.subr.bf16.mxu0 0
      %1679 = vmatpush1.bf16.msra.mxu0 %v1246
      %1680 = vmatprep.subr.bf16.mxu0 0
      %1681 = vmatpush1.bf16.msra.mxu0 %v1247
      %1682 = vmatprep.subr.bf16.mxu0 0
      %1683 = vmatpush1.bf16.msra.mxu0 %v1248
      %1684 = vmatprep.subr.bf16.mxu0 0
      %1685 = vmatpush1.bf16.msra.mxu0 %v1249
      %1686 = vmatprep.subr.bf16.mxu0 0
      %1687 = vmatpush1.bf16.msra.mxu0 %v1250
      %1688 = vmatprep.subr.bf16.mxu0 0
      %1689 = vmatpush1.bf16.msra.mxu0 %v1251
      %1690 = vmatprep.subr.bf16.mxu0 0
      %1691 = vmatpush1.bf16.msra.mxu0 %v1252
      %1692 = vmatprep.subr.bf16.mxu0 0
      %1693 = vmatpush1.bf16.msra.mxu0 %v1253
      %1694 = vmatprep.mubr.bf16.mxu0 %v597
      %1695 = vmatmul.mubr.bf16.gmra.mrb[0].mxu0 %v595
      %v1696 = vpop.f32.mrb[0].mxu0
      %v1697 = vadd.f32 %v1657, %v1696
      %v1698 = vpop.f32.mrb[0].mxu0
      %v1699 = vpop.f32.mrb[0].mxu0
      %v1700 = vpop.f32.mrb[0].mxu0
      %1701 = vdwg.mxu0
      %v1702 = vadd.f32 %v265, %v1697
      %1703 = vst [vmem:[#allocation2] sm:$0xf] %v1702
      // Predicated region
      $region37: #{_lambda_.9} parent=31 // pred_check
        %p1704 = pneg %p260
      $region38: #{_lambda_.9} parent=31 // pred_check_branch
        %1706 = sbr.rel (%p1704) target = $region40
      $region39: #{_lambda_.9} parent=31 // pred_region
        %v1707 = vld [vmem:[#allocation2] sm:$0xf]
        %v1708 = vld [vmem:[%s251] sm:$0x1]
        %v1710 = vlaneseq
        %v1711 = vshrl.u32 %v1710, 7
        %v1712 = vsub.s32 0, %v1711
        %v1713 = vrot.slane %v1708, %v1712
        %v1715 = vadd.f32 %v1707, %v1713
        %1716 = vst [vmem:[%s258] sm:$0xf] %v1715
      $region40: #{_lambda_.9} parent=31 // pred_fallthru
        _
      %p1717 = scmp.lt.s32.totalorder %s19, 1
      %s1718 = scalar_select %p1717, %s19, 1
      %p1719 = scmp.lt.s32.totalorder %s20, 0
      %s1720 = scalar_select %p1719, %s20, 0
      %s1721 = sadd.s32 %s1720, %s1718
      %s1722 = smul.addr %s1721, 4
      %s1723 = scalar_lea.vmem %s3, %s1722
      // Predicated region
      $region41: #{_lambda_.9} parent=31 // pred_check
        %p1724 = pneg %p135
      $region42: #{_lambda_.9} parent=31 // pred_check_branch
        %1726 = sbr.rel (%p1724) target = $region44
      $region43: #{_lambda_.9} parent=31 // pred_region
        _
      $region44: #{_lambda_.9} parent=31 // pred_fallthru
        _
    $region32: #{_lambda_.9} parent=5 // pred_fallthru
      _
    %p1727 = scmp.le.s32.totalorder 2, %s9
    // Predicated region
    $region45: #{_lambda_.9} parent=5 // pred_check
      %p1728 = pneg %p1727
    $region46: #{_lambda_.9} parent=5 // pred_check_branch
      %1730 = sbr.rel (%p1728) target = $region48
    $region47: #{_lambda_.9} parent=5 // pred_region
      %s1731 = ssub.s32 %s9, 2
      // Predicated region
      $region49: #{_lambda_.9} parent=47 // pred_check
        %p1732 = pneg %p141
      $region50: #{_lambda_.9} parent=47 // pred_check_branch
        %1734 = sbr.rel (%p1732) target = $region52
      $region51: #{_lambda_.9} parent=47 // pred_region
        %p1735 = scmp.lt.s32.totalorder %s22, 1
        %s1736 = scalar_select %p1735, %s22, 1
        %p1737 = scmp.lt.s32.totalorder %s23, 0
        %s1738 = scalar_select %p1737, %s23, 0
        %s1739 = sadd.s32 %s1738, %s1736
        %s1740 = smul.addr %s1739, 4
        %s1741 = scalar_lea.vmem %s3, %s1740
      $region52: #{_lambda_.9} parent=47 // pred_fallthru
        _
    $region48: #{_lambda_.9} parent=5 // pred_fallthru
      _
  $region6: #{_lambda_.9} parent=0 // loop_footer
    %s13 = sadd.s32 1, %s9
  $region7: #{_lambda_.9} parent=0 // loop_footer_branch
    %8 = sbr.rel target = $region3
  $region8: #{_lambda_.9} parent=0 // loop_exit
    _

</llo_original>
